<compile_context>
chip_gen: v7x
topology: tpu7x:2x2x1
jax: 0.10.0
libtpu: 0.0.40
codegen_flags: <defaults>
</compile_context>

<pallas_src>
import functools

import jax
import jax.numpy as jnp
from jax.experimental import pallas as pl
from jax.experimental.pallas import tpu as pltpu

KSIZE = 7
PAD = 3            # cc.get_padding(7, mode='centered')[-1] == 3
HALO = 8           # >= PAD and a multiple of 8 -> all halo-slab *stores* are sublane-aligned
LEAKY_SLOPE = 0.2
BN_EPS = 1e-5


# ------------------------------- fused kernel -------------------------------

def _fused_forward_kernel(*refs, layers, t, c_in0):
    """Whole LatentDiscriminator forward for ONE batch element, VMEM-resident.

    refs layout (all static, layer list is unrolled at trace time):
      refs[0]                       x block          (T, C0)
      per layer                     w (K, Cin, Cout) [+ scale (1,Cout), shift (1,Cout) if affine]
      out_ref                       (T, num_attr * num_classes)
      buf_a, buf_b                  (2*HALO + T, C_buf) ping-pong activation slabs
    """
    x_ref = refs[0]
    pos = 1
    layer_refs = []
    for (_, _, has_affine, _) in layers:
        if has_affine:
            layer_refs.append((refs[pos], refs[pos + 1], refs[pos + 2]))
            pos += 3
        else:
            layer_refs.append((refs[pos], None, None))
            pos += 1
    out_ref = refs[pos]
    buf_a, buf_b = refs[pos + 1], refs[pos + 2]

    # Zero both slabs once per grid step; the halo rows stay zero for every
    # layer, which implements the conv's zero padding with no HBM traffic.
    buf_a[...] = jnp.zeros_like(buf_a)
    buf_b[...] = jnp.zeros_like(buf_b)
    buf_a[HALO:HALO + t, 0:c_in0] = x_ref[...]

    cur, nxt = buf_a, buf_b
    n_layers = len(layers)
    base = HALO - PAD
    for li, ((w_ref, s_ref, sh_ref), (c_in, c_out, has_affine, has_act)) in enumerate(
            zip(layer_refs, layers)):
        # Conv1d(k=7, stride=1, pad=3, no bias) as 7 accumulated MXU matmuls.
        acc = jnp.dot(cur[base:base + t, 0:c_in], w_ref[0],
                      preferred_element_type=jnp.float32)
        for dk in range(1, KSIZE):
            acc = acc + jnp.dot(cur[base + dk:base + dk + t, 0:c_in], w_ref[dk],
                                preferred_element_type=jnp.float32)
        y = acc
        if has_affine:                       # folded inference-mode BatchNorm
            y = y * s_ref[...] + sh_ref[...]
        if has_act:                          # LeakyReLU(0.2)
            y = jnp.where(y > 0, y, LEAKY_SLOPE * y)
        if li == n_layers - 1:
            out_ref[...] = y.astype(out_ref.dtype)
        else:
            nxt[HALO:HALO + t, 0:c_out] = y  # sublane-aligned interior write
            cur, nxt = nxt, cur


# ----------------------------- parameter setup ------------------------------

def _init_conv(key, c_in, c_out):
    # torch Conv1d weight is (C_out, C_in, K); we store it as (K, C_in, C_out).
    return 0.05 * jax.random.normal(key, (KSIZE, c_in, c_out), jnp.float32)


def _init_bn(key, c):
    kg, kb = jax.random.split(key)
    gamma = 1.0 + 0.1 * jax.random.normal(kg, (c,), jnp.float32)
    beta = 0.1 * jax.random.normal(kb, (c,), jnp.float32)
    running_mean = jnp.zeros((c,), jnp.float32)
    running_var = jnp.ones((c,), jnp.float32)
    scale = gamma / jnp.sqrt(running_var + BN_EPS)
    shift = beta - running_mean * scale
    return scale.reshape(1, c), shift.reshape(1, c)


def build_params(latent_size, num_attributes, num_classes, num_layers, seed=0):
    key = jax.random.PRNGKey(seed)
    params = {"net": [], "attr_nets": []}

    # trunk: num_layers x [Conv(C,C) BN LReLU], then [Conv(C, C/2) BN LReLU]
    for _ in range(num_layers):
        key, kw, kb = jax.random.split(key, 3)
        params["net"].append(
            (_init_conv(kw, latent_size, latent_size), *_init_bn(kb, latent_size)))
    key, kw, kb = jax.random.split(key, 3)
    params["net"].append(
        (_init_conv(kw, latent_size, latent_size // 2), *_init_bn(kb, latent_size // 2)))

    # attribute heads: [Conv(C/2, C/4) BN LReLU, Conv(C/4, num_classes)]
    for _ in range(num_attributes):
        key, kw1, kb1, kw2 = jax.random.split(key, 4)
        w1 = _init_conv(kw1, latent_size // 2, latent_size // 4)
        s1, sh1 = _init_bn(kb1, latent_size // 4)
        w2 = _init_conv(kw2, latent_size // 4, num_classes)
        params["attr_nets"].append(((w1, s1, sh1), w2))
    return params


# --------------------------------- forward ----------------------------------

def latent_discriminator_forward(z, params, num_attributes, num_classes):
    """z: (B, latent_size, T) as in PyTorch NCT.

    Returns (B, num_classes, num_attributes, T), matching the torch module.
    """
    B, C0, T = z.shape
    x = jnp.transpose(z, (0, 2, 1))              # (B, T, C0), channels-last

    layer_cfgs = []
    inputs = [x]
    in_specs = [pl.BlockSpec((pl.Squeezed(), T, C0), lambda b: (b, 0, 0))]

    def add_layer(w, scale, shift, act):
        c_in, c_out = w.shape[1], w.shape[2]
        has_aff = scale is not None
        layer_cfgs.append((c_in, c_out, has_aff, act))
        inputs.append(w)
        in_specs.append(pl.BlockSpec((KSIZE, c_in, c_out), lambda b: (0, 0, 0)))
        if has_aff:
            inputs.append(scale)
            inputs.append(shift)
            in_specs.append(pl.BlockSpec((1, c_out), lambda b: (0, 0)))
            in_specs.append(pl.BlockSpec((1, c_out), lambda b: (0, 0)))

    # --- trunk ---
    for (w, s, sh) in params["net"]:
        add_layer(w, s, sh, act=True)

    # --- attribute heads, layer 1: concat all heads along C_out (lane-dense,
    #     one layer regardless of num_attributes) ---
    w1 = jnp.concatenate([h[0][0] for h in params["attr_nets"]], axis=-1)
    s1 = jnp.concatenate([h[0][1] for h in params["attr_nets"]], axis=-1)
    sh1 = jnp.concatenate([h[0][2] for h in params["attr_nets"]], axis=-1)
    add_layer(w1, s1, sh1, act=True)

    # --- attribute heads, layer 2: block-diagonal weight (each head only sees
    #     its own layer-1 channels); no BN, no activation ---
    c4 = params["attr_nets"][0][0][0].shape[-1]
    A, NC = num_attributes, num_classes
    w2 = jnp.zeros((KSIZE, A * c4, A * NC), jnp.float32)
    for a, h in enumerate(params["attr_nets"]):
        w2 = w2.at[:, a * c4:(a + 1) * c4, a * NC:(a + 1) * NC].set(h[1])
    add_layer(w2, None, None, act=False)

    c_buf = max([C0] + [c for (ci, co, _, _) in layer_cfgs for c in (ci, co)])
    tp = T + 2 * HALO

    kernel = functools.partial(
        _fused_forward_kernel, layers=tuple(layer_cfgs), t=T, c_in0=C0)

    out = pl.pallas_call(
        kernel,
        out_shape=jax.ShapeDtypeStruct((B, T, A * NC), jnp.float32),
        grid=(B,),
        in_specs=in_specs,
        out_specs=pl.BlockSpec((pl.Squeezed(), T, A * NC), lambda b: (b, 0, 0)),
        scratch_shapes=[
            pltpu.VMEM((tp, c_buf), jnp.float32),   # ping
            pltpu.VMEM((tp, c_buf), jnp.float32),   # pong
        ],
        compiler_params=pltpu.CompilerParams(dimension_semantics=("parallel",)),
    )(*inputs)

    out = out.reshape(B, T, A, NC)
    return jnp.transpose(out, (0, 3, 2, 1))   # (B, num_classes, num_attr, T)


# ---------------------------- pure-JAX reference ----------------------------

def _ref_conv(x_tc, w):
    return jax.lax.conv_general_dilated(
        x_tc, w, window_strides=(1,), padding=[(PAD, PAD)],
        dimension_numbers=("NWC", "WIO", "NWC"))


def _ref_conv_bn_act(x_tc, w, scale, shift):
    y = _ref_conv(x_tc, w)
    y = y * scale[None] + shift[None]
    return jnp.where(y > 0, y, LEAKY_SLOPE * y)


def reference_forward(z, params):
    x = jnp.transpose(z, (0, 2, 1))
    for (w, s, sh) in params["net"]:
        x = _ref_conv_bn_act(x, w, s, sh)
    outs = []
    for ((w1, s1, sh1), w2) in params["attr_nets"]:
        y = _ref_conv_bn_act(x, w1, s1, sh1)
        y = _ref_conv(y, w2)                                  # (B, T, NC)
        outs.append(jnp.transpose(y, (0, 2, 1))[:, :, None, :])
    return jnp.concatenate(outs, axis=-2)


if __name__ == "__main__":
    # Small shapes consistent with the module: latent_size=32, T=16, B=2.
    B, LATENT, T = 2, 32, 16
    NUM_ATTR, NUM_CLASSES, NUM_LAYERS = 2, 16, 2

    params = build_params(LATENT, NUM_ATTR, NUM_CLASSES, NUM_LAYERS, seed=0)
    z = jax.random.normal(jax.random.PRNGKey(0), (B, LATENT, T), jnp.float32)

    out = latent_discriminator_forward(z, params, NUM_ATTR, NUM_CLASSES)
    out = jax.block_until_ready(out)

    assert out.shape == (B, NUM_CLASSES, NUM_ATTR, T), out.shape

    ref = jax.block_until_ready(reference_forward(z, params))
    assert jnp.allclose(out, ref, atol=1e-4, rtol=1e-4), float(jnp.max(jnp.abs(out - ref)))

    print("KERNEL_OK")
</pallas_src>

<mosaic_0001>
module attributes {stable_mosaic.version = 11 : i64} {
  func.func @_fused_forward_kernel(%arg0: i32, %arg1: memref<1x16x32xf32, #tpu.memory_space<vmem>>, %arg2: memref<7x32x32xf32, #tpu.memory_space<vmem>>, %arg3: memref<1x32xf32, #tpu.memory_space<vmem>>, %arg4: memref<1x32xf32, #tpu.memory_space<vmem>>, %arg5: memref<7x32x32xf32, #tpu.memory_space<vmem>>, %arg6: memref<1x32xf32, #tpu.memory_space<vmem>>, %arg7: memref<1x32xf32, #tpu.memory_space<vmem>>, %arg8: memref<7x32x16xf32, #tpu.memory_space<vmem>>, %arg9: memref<1x16xf32, #tpu.memory_space<vmem>>, %arg10: memref<1x16xf32, #tpu.memory_space<vmem>>, %arg11: memref<7x16x16xf32, #tpu.memory_space<vmem>>, %arg12: memref<1x16xf32, #tpu.memory_space<vmem>>, %arg13: memref<1x16xf32, #tpu.memory_space<vmem>>, %arg14: memref<7x16x32xf32, #tpu.memory_space<vmem>>, %arg15: memref<1x16x32xf32, #tpu.memory_space<vmem>>, %arg16: memref<32x32xf32, #tpu.memory_space<vmem>>, %arg17: memref<32x32xf32, #tpu.memory_space<vmem>>) attributes {dimension_semantics = [#tpu.dimension_semantics<parallel>], iteration_bounds = array<i64: 2>, scalar_prefetch = 0 : i64, scratch_operands = 2 : i64, tpu.core_type = #tpu.core_type<tc>, window_params = [{transform_indices = @transform_0, window_bounds = array<i64: 1, 16, 32>}, {pipeline_mode = #tpu.pipeline_mode<synchronous>, transform_indices = @transform_1, window_bounds = array<i64: 7, 32, 32>}, {pipeline_mode = #tpu.pipeline_mode<synchronous>, transform_indices = @transform_2, window_bounds = array<i64: 1, 32>}, {pipeline_mode = #tpu.pipeline_mode<synchronous>, transform_indices = @transform_3, window_bounds = array<i64: 1, 32>}, {pipeline_mode = #tpu.pipeline_mode<synchronous>, transform_indices = @transform_4, window_bounds = array<i64: 7, 32, 32>}, {pipeline_mode = #tpu.pipeline_mode<synchronous>, transform_indices = @transform_5, window_bounds = array<i64: 1, 32>}, {pipeline_mode = #tpu.pipeline_mode<synchronous>, transform_indices = @transform_6, window_bounds = array<i64: 1, 32>}, {pipeline_mode = #tpu.pipeline_mode<synchronous>, transform_indices = @transform_7, window_bounds = array<i64: 7, 32, 16>}, {pipeline_mode = #tpu.pipeline_mode<synchronous>, transform_indices = @transform_8, window_bounds = array<i64: 1, 16>}, {pipeline_mode = #tpu.pipeline_mode<synchronous>, transform_indices = @transform_9, window_bounds = array<i64: 1, 16>}, {pipeline_mode = #tpu.pipeline_mode<synchronous>, transform_indices = @transform_10, window_bounds = array<i64: 7, 16, 16>}, {pipeline_mode = #tpu.pipeline_mode<synchronous>, transform_indices = @transform_11, window_bounds = array<i64: 1, 16>}, {pipeline_mode = #tpu.pipeline_mode<synchronous>, transform_indices = @transform_12, window_bounds = array<i64: 1, 16>}, {pipeline_mode = #tpu.pipeline_mode<synchronous>, transform_indices = @transform_13, window_bounds = array<i64: 7, 16, 32>}, {transform_indices = @transform_14, window_bounds = array<i64: 1, 16, 32>}]} {
    %cst = arith.constant 0.000000e+00 : f32
    %0 = vector.broadcast %cst : f32 to vector<32x32xf32>
    %c0 = arith.constant 0 : index
    %c0_0 = arith.constant 0 : index
    %1 = vector.load %arg16[%c0, %c0_0] : memref<32x32xf32, #tpu.memory_space<vmem>>, vector<32x32xf32>
    tpu.vector_store %arg16[%c0, %c0_0], %0 {strides = array<i32>} : memref<32x32xf32, #tpu.memory_space<vmem>>, vector<32x32xf32>,
    %cst_1 = arith.constant 0.000000e+00 : f32
    %2 = vector.broadcast %cst_1 : f32 to vector<32x32xf32>
    %c0_2 = arith.constant 0 : index
    %c0_3 = arith.constant 0 : index
    %3 = vector.load %arg17[%c0_2, %c0_3] : memref<32x32xf32, #tpu.memory_space<vmem>>, vector<32x32xf32>
    tpu.vector_store %arg17[%c0_2, %c0_3], %2 {strides = array<i32>} : memref<32x32xf32, #tpu.memory_space<vmem>>, vector<32x32xf32>,
    %c0_4 = arith.constant 0 : index
    %c0_5 = arith.constant 0 : index
    %c0_6 = arith.constant 0 : index
    %4 = vector.load %arg1[%c0_4, %c0_5, %c0_6] : memref<1x16x32xf32, #tpu.memory_space<vmem>>, vector<1x16x32xf32>
    %5 = vector.shape_cast %4 : vector<1x16x32xf32> to vector<16x32xf32>
    %c8 = arith.constant 8 : index
    %c0_7 = arith.constant 0 : index
    %6 = vector.load %arg16[%c8, %c0_7] : memref<32x32xf32, #tpu.memory_space<vmem>>, vector<16x32xf32>
    tpu.vector_store %arg16[%c8, %c0_7], %5 {strides = array<i32>} : memref<32x32xf32, #tpu.memory_space<vmem>>, vector<16x32xf32>,
    %c5 = arith.constant 5 : index
    %c0_8 = arith.constant 0 : index
    %7 = vector.load %arg16[%c5, %c0_8] : memref<32x32xf32, #tpu.memory_space<vmem>>, vector<16x32xf32>
    %c0_9 = arith.constant 0 : index
    %c0_10 = arith.constant 0 : index
    %c0_11 = arith.constant 0 : index
    %8 = vector.load %arg2[%c0_9, %c0_10, %c0_11] : memref<7x32x32xf32, #tpu.memory_space<vmem>>, vector<1x32x32xf32>
    %9 = vector.shape_cast %8 : vector<1x32x32xf32> to vector<32x32xf32>
    %cst_12 = arith.constant dense<0.000000e+00> : vector<16x32xf32>
    %10 = tpu.matmul %7, %9, %cst_12 {dimension_numbers = #tpu.dot_dimension_numbers<[1], [0], [0], [1], [0, 0, 1, 1], [], []>} : vector<16x32xf32>, vector<32x32xf32>, vector<16x32xf32> -> vector<16x32xf32>
    %c6 = arith.constant 6 : index
    %c0_13 = arith.constant 0 : index
    %11 = vector.load %arg16[%c6, %c0_13] : memref<32x32xf32, #tpu.memory_space<vmem>>, vector<16x32xf32>
    %c1 = arith.constant 1 : index
    %c0_14 = arith.constant 0 : index
    %c0_15 = arith.constant 0 : index
    %12 = vector.load %arg2[%c1, %c0_14, %c0_15] : memref<7x32x32xf32, #tpu.memory_space<vmem>>, vector<1x32x32xf32>
    %13 = vector.shape_cast %12 : vector<1x32x32xf32> to vector<32x32xf32>
    %cst_16 = arith.constant dense<0.000000e+00> : vector<16x32xf32>
    %14 = tpu.matmul %11, %13, %cst_16 {dimension_numbers = #tpu.dot_dimension_numbers<[1], [0], [0], [1], [0, 0, 1, 1], [], []>} : vector<16x32xf32>, vector<32x32xf32>, vector<16x32xf32> -> vector<16x32xf32>
    %15 = arith.addf %10, %14 : vector<16x32xf32>
    %c7 = arith.constant 7 : index
    %c0_17 = arith.constant 0 : index
    %16 = vector.load %arg16[%c7, %c0_17] : memref<32x32xf32, #tpu.memory_space<vmem>>, vector<16x32xf32>
    %c2 = arith.constant 2 : index
    %c0_18 = arith.constant 0 : index
    %c0_19 = arith.constant 0 : index
    %17 = vector.load %arg2[%c2, %c0_18, %c0_19] : memref<7x32x32xf32, #tpu.memory_space<vmem>>, vector<1x32x32xf32>
    %18 = vector.shape_cast %17 : vector<1x32x32xf32> to vector<32x32xf32>
    %cst_20 = arith.constant dense<0.000000e+00> : vector<16x32xf32>
    %19 = tpu.matmul %16, %18, %cst_20 {dimension_numbers = #tpu.dot_dimension_numbers<[1], [0], [0], [1], [0, 0, 1, 1], [], []>} : vector<16x32xf32>, vector<32x32xf32>, vector<16x32xf32> -> vector<16x32xf32>
    %20 = arith.addf %15, %19 : vector<16x32xf32>
    %c8_21 = arith.constant 8 : index
    %c0_22 = arith.constant 0 : index
    %21 = vector.load %arg16[%c8_21, %c0_22] : memref<32x32xf32, #tpu.memory_space<vmem>>, vector<16x32xf32>
    %c3 = arith.constant 3 : index
    %c0_23 = arith.constant 0 : index
    %c0_24 = arith.constant 0 : index
    %22 = vector.load %arg2[%c3, %c0_23, %c0_24] : memref<7x32x32xf32, #tpu.memory_space<vmem>>, vector<1x32x32xf32>
    %23 = vector.shape_cast %22 : vector<1x32x32xf32> to vector<32x32xf32>
    %cst_25 = arith.constant dense<0.000000e+00> : vector<16x32xf32>
    %24 = tpu.matmul %21, %23, %cst_25 {dimension_numbers = #tpu.dot_dimension_numbers<[1], [0], [0], [1], [0, 0, 1, 1], [], []>} : vector<16x32xf32>, vector<32x32xf32>, vector<16x32xf32> -> vector<16x32xf32>
    %25 = arith.addf %20, %24 : vector<16x32xf32>
    %c9 = arith.constant 9 : index
    %c0_26 = arith.constant 0 : index
    %26 = vector.load %arg16[%c9, %c0_26] : memref<32x32xf32, #tpu.memory_space<vmem>>, vector<16x32xf32>
    %c4 = arith.constant 4 : index
    %c0_27 = arith.constant 0 : index
    %c0_28 = arith.constant 0 : index
    %27 = vector.load %arg2[%c4, %c0_27, %c0_28] : memref<7x32x32xf32, #tpu.memory_space<vmem>>, vector<1x32x32xf32>
    %28 = vector.shape_cast %27 : vector<1x32x32xf32> to vector<32x32xf32>
    %cst_29 = arith.constant dense<0.000000e+00> : vector<16x32xf32>
    %29 = tpu.matmul %26, %28, %cst_29 {dimension_numbers = #tpu.dot_dimension_numbers<[1], [0], [0], [1], [0, 0, 1, 1], [], []>} : vector<16x32xf32>, vector<32x32xf32>, vector<16x32xf32> -> vector<16x32xf32>
    %30 = arith.addf %25, %29 : vector<16x32xf32>
    %c10 = arith.constant 10 : index
    %c0_30 = arith.constant 0 : index
    %31 = vector.load %arg16[%c10, %c0_30] : memref<32x32xf32, #tpu.memory_space<vmem>>, vector<16x32xf32>
    %c5_31 = arith.constant 5 : index
    %c0_32 = arith.constant 0 : index
    %c0_33 = arith.constant 0 : index
    %32 = vector.load %arg2[%c5_31, %c0_32, %c0_33] : memref<7x32x32xf32, #tpu.memory_space<vmem>>, vector<1x32x32xf32>
    %33 = vector.shape_cast %32 : vector<1x32x32xf32> to vector<32x32xf32>
    %cst_34 = arith.constant dense<0.000000e+00> : vector<16x32xf32>
    %34 = tpu.matmul %31, %33, %cst_34 {dimension_numbers = #tpu.dot_dimension_numbers<[1], [0], [0], [1], [0, 0, 1, 1], [], []>} : vector<16x32xf32>, vector<32x32xf32>, vector<16x32xf32> -> vector<16x32xf32>
    %35 = arith.addf %30, %34 : vector<16x32xf32>
    %c11 = arith.constant 11 : index
    %c0_35 = arith.constant 0 : index
    %36 = vector.load %arg16[%c11, %c0_35] : memref<32x32xf32, #tpu.memory_space<vmem>>, vector<16x32xf32>
    %c6_36 = arith.constant 6 : index
    %c0_37 = arith.constant 0 : index
    %c0_38 = arith.constant 0 : index
    %37 = vector.load %arg2[%c6_36, %c0_37, %c0_38] : memref<7x32x32xf32, #tpu.memory_space<vmem>>, vector<1x32x32xf32>
    %38 = vector.shape_cast %37 : vector<1x32x32xf32> to vector<32x32xf32>
    %cst_39 = arith.constant dense<0.000000e+00> : vector<16x32xf32>
    %39 = tpu.matmul %36, %38, %cst_39 {dimension_numbers = #tpu.dot_dimension_numbers<[1], [0], [0], [1], [0, 0, 1, 1], [], []>} : vector<16x32xf32>, vector<32x32xf32>, vector<16x32xf32> -> vector<16x32xf32>
    %40 = arith.addf %35, %39 : vector<16x32xf32>
    %c0_40 = arith.constant 0 : index
    %c0_41 = arith.constant 0 : index
    %41 = vector.load %arg3[%c0_40, %c0_41] : memref<1x32xf32, #tpu.memory_space<vmem>>, vector<1x32xf32>
    %42 = vector.broadcast %41 : vector<1x32xf32> to vector<16x32xf32>
    %43 = arith.mulf %40, %42 : vector<16x32xf32>
    %c0_42 = arith.constant 0 : index
    %c0_43 = arith.constant 0 : index
    %44 = vector.load %arg4[%c0_42, %c0_43] : memref<1x32xf32, #tpu.memory_space<vmem>>, vector<1x32xf32>
    %45 = vector.broadcast %44 : vector<1x32xf32> to vector<16x32xf32>
    %46 = arith.addf %43, %45 : vector<16x32xf32>
    %cst_44 = arith.constant 0.000000e+00 : f32
    %47 = vector.broadcast %cst_44 : f32 to vector<16x32xf32>
    %48 = arith.cmpf ogt, %46, %47 : vector<16x32xf32>
    %cst_45 = arith.constant 2.000000e-01 : f32
    %49 = vector.broadcast %cst_45 : f32 to vector<16x32xf32>
    %50 = arith.mulf %49, %46 : vector<16x32xf32>
    %51 = arith.select %48, %46, %50 : vector<16x32xi1>, vector<16x32xf32>
    %c8_46 = arith.constant 8 : index
    %c0_47 = arith.constant 0 : index
    %52 = vector.load %arg17[%c8_46, %c0_47] : memref<32x32xf32, #tpu.memory_space<vmem>>, vector<16x32xf32>
    tpu.vector_store %arg17[%c8_46, %c0_47], %51 {strides = array<i32>} : memref<32x32xf32, #tpu.memory_space<vmem>>, vector<16x32xf32>,
    %c5_48 = arith.constant 5 : index
    %c0_49 = arith.constant 0 : index
    %53 = vector.load %arg17[%c5_48, %c0_49] : memref<32x32xf32, #tpu.memory_space<vmem>>, vector<16x32xf32>
    %c0_50 = arith.constant 0 : index
    %c0_51 = arith.constant 0 : index
    %c0_52 = arith.constant 0 : index
    %54 = vector.load %arg5[%c0_50, %c0_51, %c0_52] : memref<7x32x32xf32, #tpu.memory_space<vmem>>, vector<1x32x32xf32>
    %55 = vector.shape_cast %54 : vector<1x32x32xf32> to vector<32x32xf32>
    %cst_53 = arith.constant dense<0.000000e+00> : vector<16x32xf32>
    %56 = tpu.matmul %53, %55, %cst_53 {dimension_numbers = #tpu.dot_dimension_numbers<[1], [0], [0], [1], [0, 0, 1, 1], [], []>} : vector<16x32xf32>, vector<32x32xf32>, vector<16x32xf32> -> vector<16x32xf32>
    %c6_54 = arith.constant 6 : index
    %c0_55 = arith.constant 0 : index
    %57 = vector.load %arg17[%c6_54, %c0_55] : memref<32x32xf32, #tpu.memory_space<vmem>>, vector<16x32xf32>
    %c1_56 = arith.constant 1 : index
    %c0_57 = arith.constant 0 : index
    %c0_58 = arith.constant 0 : index
    %58 = vector.load %arg5[%c1_56, %c0_57, %c0_58] : memref<7x32x32xf32, #tpu.memory_space<vmem>>, vector<1x32x32xf32>
    %59 = vector.shape_cast %58 : vector<1x32x32xf32> to vector<32x32xf32>
    %cst_59 = arith.constant dense<0.000000e+00> : vector<16x32xf32>
    %60 = tpu.matmul %57, %59, %cst_59 {dimension_numbers = #tpu.dot_dimension_numbers<[1], [0], [0], [1], [0, 0, 1, 1], [], []>} : vector<16x32xf32>, vector<32x32xf32>, vector<16x32xf32> -> vector<16x32xf32>
    %61 = arith.addf %56, %60 : vector<16x32xf32>
    %c7_60 = arith.constant 7 : index
    %c0_61 = arith.constant 0 : index
    %62 = vector.load %arg17[%c7_60, %c0_61] : memref<32x32xf32, #tpu.memory_space<vmem>>, vector<16x32xf32>
    %c2_62 = arith.constant 2 : index
    %c0_63 = arith.constant 0 : index
    %c0_64 = arith.constant 0 : index
    %63 = vector.load %arg5[%c2_62, %c0_63, %c0_64] : memref<7x32x32xf32, #tpu.memory_space<vmem>>, vector<1x32x32xf32>
    %64 = vector.shape_cast %63 : vector<1x32x32xf32> to vector<32x32xf32>
    %cst_65 = arith.constant dense<0.000000e+00> : vector<16x32xf32>
    %65 = tpu.matmul %62, %64, %cst_65 {dimension_numbers = #tpu.dot_dimension_numbers<[1], [0], [0], [1], [0, 0, 1, 1], [], []>} : vector<16x32xf32>, vector<32x32xf32>, vector<16x32xf32> -> vector<16x32xf32>
    %66 = arith.addf %61, %65 : vector<16x32xf32>
    %c8_66 = arith.constant 8 : index
    %c0_67 = arith.constant 0 : index
    %67 = vector.load %arg17[%c8_66, %c0_67] : memref<32x32xf32, #tpu.memory_space<vmem>>, vector<16x32xf32>
    %c3_68 = arith.constant 3 : index
    %c0_69 = arith.constant 0 : index
    %c0_70 = arith.constant 0 : index
    %68 = vector.load %arg5[%c3_68, %c0_69, %c0_70] : memref<7x32x32xf32, #tpu.memory_space<vmem>>, vector<1x32x32xf32>
    %69 = vector.shape_cast %68 : vector<1x32x32xf32> to vector<32x32xf32>
    %cst_71 = arith.constant dense<0.000000e+00> : vector<16x32xf32>
    %70 = tpu.matmul %67, %69, %cst_71 {dimension_numbers = #tpu.dot_dimension_numbers<[1], [0], [0], [1], [0, 0, 1, 1], [], []>} : vector<16x32xf32>, vector<32x32xf32>, vector<16x32xf32> -> vector<16x32xf32>
    %71 = arith.addf %66, %70 : vector<16x32xf32>
    %c9_72 = arith.constant 9 : index
    %c0_73 = arith.constant 0 : index
    %72 = vector.load %arg17[%c9_72, %c0_73] : memref<32x32xf32, #tpu.memory_space<vmem>>, vector<16x32xf32>
    %c4_74 = arith.constant 4 : index
    %c0_75 = arith.constant 0 : index
    %c0_76 = arith.constant 0 : index
    %73 = vector.load %arg5[%c4_74, %c0_75, %c0_76] : memref<7x32x32xf32, #tpu.memory_space<vmem>>, vector<1x32x32xf32>
    %74 = vector.shape_cast %73 : vector<1x32x32xf32> to vector<32x32xf32>
    %cst_77 = arith.constant dense<0.000000e+00> : vector<16x32xf32>
    %75 = tpu.matmul %72, %74, %cst_77 {dimension_numbers = #tpu.dot_dimension_numbers<[1], [0], [0], [1], [0, 0, 1, 1], [], []>} : vector<16x32xf32>, vector<32x32xf32>, vector<16x32xf32> -> vector<16x32xf32>
    %76 = arith.addf %71, %75 : vector<16x32xf32>
    %c10_78 = arith.constant 10 : index
    %c0_79 = arith.constant 0 : index
    %77 = vector.load %arg17[%c10_78, %c0_79] : memref<32x32xf32, #tpu.memory_space<vmem>>, vector<16x32xf32>
    %c5_80 = arith.constant 5 : index
    %c0_81 = arith.constant 0 : index
    %c0_82 = arith.constant 0 : index
    %78 = vector.load %arg5[%c5_80, %c0_81, %c0_82] : memref<7x32x32xf32, #tpu.memory_space<vmem>>, vector<1x32x32xf32>
    %79 = vector.shape_cast %78 : vector<1x32x32xf32> to vector<32x32xf32>
    %cst_83 = arith.constant dense<0.000000e+00> : vector<16x32xf32>
    %80 = tpu.matmul %77, %79, %cst_83 {dimension_numbers = #tpu.dot_dimension_numbers<[1], [0], [0], [1], [0, 0, 1, 1], [], []>} : vector<16x32xf32>, vector<32x32xf32>, vector<16x32xf32> -> vector<16x32xf32>
    %81 = arith.addf %76, %80 : vector<16x32xf32>
    %c11_84 = arith.constant 11 : index
    %c0_85 = arith.constant 0 : index
    %82 = vector.load %arg17[%c11_84, %c0_85] : memref<32x32xf32, #tpu.memory_space<vmem>>, vector<16x32xf32>
    %c6_86 = arith.constant 6 : index
    %c0_87 = arith.constant 0 : index
    %c0_88 = arith.constant 0 : index
    %83 = vector.load %arg5[%c6_86, %c0_87, %c0_88] : memref<7x32x32xf32, #tpu.memory_space<vmem>>, vector<1x32x32xf32>
    %84 = vector.shape_cast %83 : vector<1x32x32xf32> to vector<32x32xf32>
    %cst_89 = arith.constant dense<0.000000e+00> : vector<16x32xf32>
    %85 = tpu.matmul %82, %84, %cst_89 {dimension_numbers = #tpu.dot_dimension_numbers<[1], [0], [0], [1], [0, 0, 1, 1], [], []>} : vector<16x32xf32>, vector<32x32xf32>, vector<16x32xf32> -> vector<16x32xf32>
    %86 = arith.addf %81, %85 : vector<16x32xf32>
    %c0_90 = arith.constant 0 : index
    %c0_91 = arith.constant 0 : index
    %87 = vector.load %arg6[%c0_90, %c0_91] : memref<1x32xf32, #tpu.memory_space<vmem>>, vector<1x32xf32>
    %88 = vector.broadcast %87 : vector<1x32xf32> to vector<16x32xf32>
    %89 = arith.mulf %86, %88 : vector<16x32xf32>
    %c0_92 = arith.constant 0 : index
    %c0_93 = arith.constant 0 : index
    %90 = vector.load %arg7[%c0_92, %c0_93] : memref<1x32xf32, #tpu.memory_space<vmem>>, vector<1x32xf32>
    %91 = vector.broadcast %90 : vector<1x32xf32> to vector<16x32xf32>
    %92 = arith.addf %89, %91 : vector<16x32xf32>
    %cst_94 = arith.constant 0.000000e+00 : f32
    %93 = vector.broadcast %cst_94 : f32 to vector<16x32xf32>
    %94 = arith.cmpf ogt, %92, %93 : vector<16x32xf32>
    %cst_95 = arith.constant 2.000000e-01 : f32
    %95 = vector.broadcast %cst_95 : f32 to vector<16x32xf32>
    %96 = arith.mulf %95, %92 : vector<16x32xf32>
    %97 = arith.select %94, %92, %96 : vector<16x32xi1>, vector<16x32xf32>
    %c8_96 = arith.constant 8 : index
    %c0_97 = arith.constant 0 : index
    %98 = vector.load %arg16[%c8_96, %c0_97] : memref<32x32xf32, #tpu.memory_space<vmem>>, vector<16x32xf32>
    tpu.vector_store %arg16[%c8_96, %c0_97], %97 {strides = array<i32>} : memref<32x32xf32, #tpu.memory_space<vmem>>, vector<16x32xf32>,
    %c5_98 = arith.constant 5 : index
    %c0_99 = arith.constant 0 : index
    %99 = vector.load %arg16[%c5_98, %c0_99] : memref<32x32xf32, #tpu.memory_space<vmem>>, vector<16x32xf32>
    %c0_100 = arith.constant 0 : index
    %c0_101 = arith.constant 0 : index
    %c0_102 = arith.constant 0 : index
    %100 = vector.load %arg8[%c0_100, %c0_101, %c0_102] : memref<7x32x16xf32, #tpu.memory_space<vmem>>, vector<1x32x16xf32>
    %101 = vector.shape_cast %100 : vector<1x32x16xf32> to vector<32x16xf32>
    %cst_103 = arith.constant dense<0.000000e+00> : vector<16x16xf32>
    %102 = tpu.matmul %99, %101, %cst_103 {dimension_numbers = #tpu.dot_dimension_numbers<[1], [0], [0], [1], [0, 0, 1, 1], [], []>} : vector<16x32xf32>, vector<32x16xf32>, vector<16x16xf32> -> vector<16x16xf32>
    %c6_104 = arith.constant 6 : index
    %c0_105 = arith.constant 0 : index
    %103 = vector.load %arg16[%c6_104, %c0_105] : memref<32x32xf32, #tpu.memory_space<vmem>>, vector<16x32xf32>
    %c1_106 = arith.constant 1 : index
    %c0_107 = arith.constant 0 : index
    %c0_108 = arith.constant 0 : index
    %104 = vector.load %arg8[%c1_106, %c0_107, %c0_108] : memref<7x32x16xf32, #tpu.memory_space<vmem>>, vector<1x32x16xf32>
    %105 = vector.shape_cast %104 : vector<1x32x16xf32> to vector<32x16xf32>
    %cst_109 = arith.constant dense<0.000000e+00> : vector<16x16xf32>
    %106 = tpu.matmul %103, %105, %cst_109 {dimension_numbers = #tpu.dot_dimension_numbers<[1], [0], [0], [1], [0, 0, 1, 1], [], []>} : vector<16x32xf32>, vector<32x16xf32>, vector<16x16xf32> -> vector<16x16xf32>
    %107 = arith.addf %102, %106 : vector<16x16xf32>
    %c7_110 = arith.constant 7 : index
    %c0_111 = arith.constant 0 : index
    %108 = vector.load %arg16[%c7_110, %c0_111] : memref<32x32xf32, #tpu.memory_space<vmem>>, vector<16x32xf32>
    %c2_112 = arith.constant 2 : index
    %c0_113 = arith.constant 0 : index
    %c0_114 = arith.constant 0 : index
    %109 = vector.load %arg8[%c2_112, %c0_113, %c0_114] : memref<7x32x16xf32, #tpu.memory_space<vmem>>, vector<1x32x16xf32>
    %110 = vector.shape_cast %109 : vector<1x32x16xf32> to vector<32x16xf32>
    %cst_115 = arith.constant dense<0.000000e+00> : vector<16x16xf32>
    %111 = tpu.matmul %108, %110, %cst_115 {dimension_numbers = #tpu.dot_dimension_numbers<[1], [0], [0], [1], [0, 0, 1, 1], [], []>} : vector<16x32xf32>, vector<32x16xf32>, vector<16x16xf32> -> vector<16x16xf32>
    %112 = arith.addf %107, %111 : vector<16x16xf32>
    %c8_116 = arith.constant 8 : index
    %c0_117 = arith.constant 0 : index
    %113 = vector.load %arg16[%c8_116, %c0_117] : memref<32x32xf32, #tpu.memory_space<vmem>>, vector<16x32xf32>
    %c3_118 = arith.constant 3 : index
    %c0_119 = arith.constant 0 : index
    %c0_120 = arith.constant 0 : index
    %114 = vector.load %arg8[%c3_118, %c0_119, %c0_120] : memref<7x32x16xf32, #tpu.memory_space<vmem>>, vector<1x32x16xf32>
    %115 = vector.shape_cast %114 : vector<1x32x16xf32> to vector<32x16xf32>
    %cst_121 = arith.constant dense<0.000000e+00> : vector<16x16xf32>
    %116 = tpu.matmul %113, %115, %cst_121 {dimension_numbers = #tpu.dot_dimension_numbers<[1], [0], [0], [1], [0, 0, 1, 1], [], []>} : vector<16x32xf32>, vector<32x16xf32>, vector<16x16xf32> -> vector<16x16xf32>
    %117 = arith.addf %112, %116 : vector<16x16xf32>
    %c9_122 = arith.constant 9 : index
    %c0_123 = arith.constant 0 : index
    %118 = vector.load %arg16[%c9_122, %c0_123] : memref<32x32xf32, #tpu.memory_space<vmem>>, vector<16x32xf32>
    %c4_124 = arith.constant 4 : index
    %c0_125 = arith.constant 0 : index
    %c0_126 = arith.constant 0 : index
    %119 = vector.load %arg8[%c4_124, %c0_125, %c0_126] : memref<7x32x16xf32, #tpu.memory_space<vmem>>, vector<1x32x16xf32>
    %120 = vector.shape_cast %119 : vector<1x32x16xf32> to vector<32x16xf32>
    %cst_127 = arith.constant dense<0.000000e+00> : vector<16x16xf32>
    %121 = tpu.matmul %118, %120, %cst_127 {dimension_numbers = #tpu.dot_dimension_numbers<[1], [0], [0], [1], [0, 0, 1, 1], [], []>} : vector<16x32xf32>, vector<32x16xf32>, vector<16x16xf32> -> vector<16x16xf32>
    %122 = arith.addf %117, %121 : vector<16x16xf32>
    %c10_128 = arith.constant 10 : index
    %c0_129 = arith.constant 0 : index
    %123 = vector.load %arg16[%c10_128, %c0_129] : memref<32x32xf32, #tpu.memory_space<vmem>>, vector<16x32xf32>
    %c5_130 = arith.constant 5 : index
    %c0_131 = arith.constant 0 : index
    %c0_132 = arith.constant 0 : index
    %124 = vector.load %arg8[%c5_130, %c0_131, %c0_132] : memref<7x32x16xf32, #tpu.memory_space<vmem>>, vector<1x32x16xf32>
    %125 = vector.shape_cast %124 : vector<1x32x16xf32> to vector<32x16xf32>
    %cst_133 = arith.constant dense<0.000000e+00> : vector<16x16xf32>
    %126 = tpu.matmul %123, %125, %cst_133 {dimension_numbers = #tpu.dot_dimension_numbers<[1], [0], [0], [1], [0, 0, 1, 1], [], []>} : vector<16x32xf32>, vector<32x16xf32>, vector<16x16xf32> -> vector<16x16xf32>
    %127 = arith.addf %122, %126 : vector<16x16xf32>
    %c11_134 = arith.constant 11 : index
    %c0_135 = arith.constant 0 : index
    %128 = vector.load %arg16[%c11_134, %c0_135] : memref<32x32xf32, #tpu.memory_space<vmem>>, vector<16x32xf32>
    %c6_136 = arith.constant 6 : index
    %c0_137 = arith.constant 0 : index
    %c0_138 = arith.constant 0 : index
    %129 = vector.load %arg8[%c6_136, %c0_137, %c0_138] : memref<7x32x16xf32, #tpu.memory_space<vmem>>, vector<1x32x16xf32>
    %130 = vector.shape_cast %129 : vector<1x32x16xf32> to vector<32x16xf32>
    %cst_139 = arith.constant dense<0.000000e+00> : vector<16x16xf32>
    %131 = tpu.matmul %128, %130, %cst_139 {dimension_numbers = #tpu.dot_dimension_numbers<[1], [0], [0], [1], [0, 0, 1, 1], [], []>} : vector<16x32xf32>, vector<32x16xf32>, vector<16x16xf32> -> vector<16x16xf32>
    %132 = arith.addf %127, %131 : vector<16x16xf32>
    %c0_140 = arith.constant 0 : index
    %c0_141 = arith.constant 0 : index
    %133 = vector.load %arg9[%c0_140, %c0_141] : memref<1x16xf32, #tpu.memory_space<vmem>>, vector<1x16xf32>
    %134 = vector.broadcast %133 : vector<1x16xf32> to vector<16x16xf32>
    %135 = arith.mulf %132, %134 : vector<16x16xf32>
    %c0_142 = arith.constant 0 : index
    %c0_143 = arith.constant 0 : index
    %136 = vector.load %arg10[%c0_142, %c0_143] : memref<1x16xf32, #tpu.memory_space<vmem>>, vector<1x16xf32>
    %137 = vector.broadcast %136 : vector<1x16xf32> to vector<16x16xf32>
    %138 = arith.addf %135, %137 : vector<16x16xf32>
    %cst_144 = arith.constant 0.000000e+00 : f32
    %139 = vector.broadcast %cst_144 : f32 to vector<16x16xf32>
    %140 = arith.cmpf ogt, %138, %139 : vector<16x16xf32>
    %cst_145 = arith.constant 2.000000e-01 : f32
    %141 = vector.broadcast %cst_145 : f32 to vector<16x16xf32>
    %142 = arith.mulf %141, %138 : vector<16x16xf32>
    %143 = arith.select %140, %138, %142 : vector<16x16xi1>, vector<16x16xf32>
    %c8_146 = arith.constant 8 : index
    %c0_147 = arith.constant 0 : index
    %144 = vector.load %arg17[%c8_146, %c0_147] : memref<32x32xf32, #tpu.memory_space<vmem>>, vector<16x16xf32>
    tpu.vector_store %arg17[%c8_146, %c0_147], %143 {strides = array<i32>} : memref<32x32xf32, #tpu.memory_space<vmem>>, vector<16x16xf32>,
    %c5_148 = arith.constant 5 : index
    %c0_149 = arith.constant 0 : index
    %145 = vector.load %arg17[%c5_148, %c0_149] : memref<32x32xf32, #tpu.memory_space<vmem>>, vector<16x16xf32>
    %c0_150 = arith.constant 0 : index
    %c0_151 = arith.constant 0 : index
    %c0_152 = arith.constant 0 : index
    %146 = vector.load %arg11[%c0_150, %c0_151, %c0_152] : memref<7x16x16xf32, #tpu.memory_space<vmem>>, vector<1x16x16xf32>
    %147 = vector.shape_cast %146 : vector<1x16x16xf32> to vector<16x16xf32>
    %cst_153 = arith.constant dense<0.000000e+00> : vector<16x16xf32>
    %148 = tpu.matmul %145, %147, %cst_153 {dimension_numbers = #tpu.dot_dimension_numbers<[1], [0], [0], [1], [0, 0, 1, 1], [], []>} : vector<16x16xf32>, vector<16x16xf32>, vector<16x16xf32> -> vector<16x16xf32>
    %c6_154 = arith.constant 6 : index
    %c0_155 = arith.constant 0 : index
    %149 = vector.load %arg17[%c6_154, %c0_155] : memref<32x32xf32, #tpu.memory_space<vmem>>, vector<16x16xf32>
    %c1_156 = arith.constant 1 : index
    %c0_157 = arith.constant 0 : index
    %c0_158 = arith.constant 0 : index
    %150 = vector.load %arg11[%c1_156, %c0_157, %c0_158] : memref<7x16x16xf32, #tpu.memory_space<vmem>>, vector<1x16x16xf32>
    %151 = vector.shape_cast %150 : vector<1x16x16xf32> to vector<16x16xf32>
    %cst_159 = arith.constant dense<0.000000e+00> : vector<16x16xf32>
    %152 = tpu.matmul %149, %151, %cst_159 {dimension_numbers = #tpu.dot_dimension_numbers<[1], [0], [0], [1], [0, 0, 1, 1], [], []>} : vector<16x16xf32>, vector<16x16xf32>, vector<16x16xf32> -> vector<16x16xf32>
    %153 = arith.addf %148, %152 : vector<16x16xf32>
    %c7_160 = arith.constant 7 : index
    %c0_161 = arith.constant 0 : index
    %154 = vector.load %arg17[%c7_160, %c0_161] : memref<32x32xf32, #tpu.memory_space<vmem>>, vector<16x16xf32>
    %c2_162 = arith.constant 2 : index
    %c0_163 = arith.constant 0 : index
    %c0_164 = arith.constant 0 : index
    %155 = vector.load %arg11[%c2_162, %c0_163, %c0_164] : memref<7x16x16xf32, #tpu.memory_space<vmem>>, vector<1x16x16xf32>
    %156 = vector.shape_cast %155 : vector<1x16x16xf32> to vector<16x16xf32>
    %cst_165 = arith.constant dense<0.000000e+00> : vector<16x16xf32>
    %157 = tpu.matmul %154, %156, %cst_165 {dimension_numbers = #tpu.dot_dimension_numbers<[1], [0], [0], [1], [0, 0, 1, 1], [], []>} : vector<16x16xf32>, vector<16x16xf32>, vector<16x16xf32> -> vector<16x16xf32>
    %158 = arith.addf %153, %157 : vector<16x16xf32>
    %c8_166 = arith.constant 8 : index
    %c0_167 = arith.constant 0 : index
    %159 = vector.load %arg17[%c8_166, %c0_167] : memref<32x32xf32, #tpu.memory_space<vmem>>, vector<16x16xf32>
    %c3_168 = arith.constant 3 : index
    %c0_169 = arith.constant 0 : index
    %c0_170 = arith.constant 0 : index
    %160 = vector.load %arg11[%c3_168, %c0_169, %c0_170] : memref<7x16x16xf32, #tpu.memory_space<vmem>>, vector<1x16x16xf32>
    %161 = vector.shape_cast %160 : vector<1x16x16xf32> to vector<16x16xf32>
    %cst_171 = arith.constant dense<0.000000e+00> : vector<16x16xf32>
    %162 = tpu.matmul %159, %161, %cst_171 {dimension_numbers = #tpu.dot_dimension_numbers<[1], [0], [0], [1], [0, 0, 1, 1], [], []>} : vector<16x16xf32>, vector<16x16xf32>, vector<16x16xf32> -> vector<16x16xf32>
    %163 = arith.addf %158, %162 : vector<16x16xf32>
    %c9_172 = arith.constant 9 : index
    %c0_173 = arith.constant 0 : index
    %164 = vector.load %arg17[%c9_172, %c0_173] : memref<32x32xf32, #tpu.memory_space<vmem>>, vector<16x16xf32>
    %c4_174 = arith.constant 4 : index
    %c0_175 = arith.constant 0 : index
    %c0_176 = arith.constant 0 : index
    %165 = vector.load %arg11[%c4_174, %c0_175, %c0_176] : memref<7x16x16xf32, #tpu.memory_space<vmem>>, vector<1x16x16xf32>
    %166 = vector.shape_cast %165 : vector<1x16x16xf32> to vector<16x16xf32>
    %cst_177 = arith.constant dense<0.000000e+00> : vector<16x16xf32>
    %167 = tpu.matmul %164, %166, %cst_177 {dimension_numbers = #tpu.dot_dimension_numbers<[1], [0], [0], [1], [0, 0, 1, 1], [], []>} : vector<16x16xf32>, vector<16x16xf32>, vector<16x16xf32> -> vector<16x16xf32>
    %168 = arith.addf %163, %167 : vector<16x16xf32>
    %c10_178 = arith.constant 10 : index
    %c0_179 = arith.constant 0 : index
    %169 = vector.load %arg17[%c10_178, %c0_179] : memref<32x32xf32, #tpu.memory_space<vmem>>, vector<16x16xf32>
    %c5_180 = arith.constant 5 : index
    %c0_181 = arith.constant 0 : index
    %c0_182 = arith.constant 0 : index
    %170 = vector.load %arg11[%c5_180, %c0_181, %c0_182] : memref<7x16x16xf32, #tpu.memory_space<vmem>>, vector<1x16x16xf32>
    %171 = vector.shape_cast %170 : vector<1x16x16xf32> to vector<16x16xf32>
    %cst_183 = arith.constant dense<0.000000e+00> : vector<16x16xf32>
    %172 = tpu.matmul %169, %171, %cst_183 {dimension_numbers = #tpu.dot_dimension_numbers<[1], [0], [0], [1], [0, 0, 1, 1], [], []>} : vector<16x16xf32>, vector<16x16xf32>, vector<16x16xf32> -> vector<16x16xf32>
    %173 = arith.addf %168, %172 : vector<16x16xf32>
    %c11_184 = arith.constant 11 : index
    %c0_185 = arith.constant 0 : index
    %174 = vector.load %arg17[%c11_184, %c0_185] : memref<32x32xf32, #tpu.memory_space<vmem>>, vector<16x16xf32>
    %c6_186 = arith.constant 6 : index
    %c0_187 = arith.constant 0 : index
    %c0_188 = arith.constant 0 : index
    %175 = vector.load %arg11[%c6_186, %c0_187, %c0_188] : memref<7x16x16xf32, #tpu.memory_space<vmem>>, vector<1x16x16xf32>
    %176 = vector.shape_cast %175 : vector<1x16x16xf32> to vector<16x16xf32>
    %cst_189 = arith.constant dense<0.000000e+00> : vector<16x16xf32>
    %177 = tpu.matmul %174, %176, %cst_189 {dimension_numbers = #tpu.dot_dimension_numbers<[1], [0], [0], [1], [0, 0, 1, 1], [], []>} : vector<16x16xf32>, vector<16x16xf32>, vector<16x16xf32> -> vector<16x16xf32>
    %178 = arith.addf %173, %177 : vector<16x16xf32>
    %c0_190 = arith.constant 0 : index
    %c0_191 = arith.constant 0 : index
    %179 = vector.load %arg12[%c0_190, %c0_191] : memref<1x16xf32, #tpu.memory_space<vmem>>, vector<1x16xf32>
    %180 = vector.broadcast %179 : vector<1x16xf32> to vector<16x16xf32>
    %181 = arith.mulf %178, %180 : vector<16x16xf32>
    %c0_192 = arith.constant 0 : index
    %c0_193 = arith.constant 0 : index
    %182 = vector.load %arg13[%c0_192, %c0_193] : memref<1x16xf32, #tpu.memory_space<vmem>>, vector<1x16xf32>
    %183 = vector.broadcast %182 : vector<1x16xf32> to vector<16x16xf32>
    %184 = arith.addf %181, %183 : vector<16x16xf32>
    %cst_194 = arith.constant 0.000000e+00 : f32
    %185 = vector.broadcast %cst_194 : f32 to vector<16x16xf32>
    %186 = arith.cmpf ogt, %184, %185 : vector<16x16xf32>
    %cst_195 = arith.constant 2.000000e-01 : f32
    %187 = vector.broadcast %cst_195 : f32 to vector<16x16xf32>
    %188 = arith.mulf %187, %184 : vector<16x16xf32>
    %189 = arith.select %186, %184, %188 : vector<16x16xi1>, vector<16x16xf32>
    %c8_196 = arith.constant 8 : index
    %c0_197 = arith.constant 0 : index
    %190 = vector.load %arg16[%c8_196, %c0_197] : memref<32x32xf32, #tpu.memory_space<vmem>>, vector<16x16xf32>
    tpu.vector_store %arg16[%c8_196, %c0_197], %189 {strides = array<i32>} : memref<32x32xf32, #tpu.memory_space<vmem>>, vector<16x16xf32>,
    %c5_198 = arith.constant 5 : index
    %c0_199 = arith.constant 0 : index
    %191 = vector.load %arg16[%c5_198, %c0_199] : memref<32x32xf32, #tpu.memory_space<vmem>>, vector<16x16xf32>
    %c0_200 = arith.constant 0 : index
    %c0_201 = arith.constant 0 : index
    %c0_202 = arith.constant 0 : index
    %192 = vector.load %arg14[%c0_200, %c0_201, %c0_202] : memref<7x16x32xf32, #tpu.memory_space<vmem>>, vector<1x16x32xf32>
    %193 = vector.shape_cast %192 : vector<1x16x32xf32> to vector<16x32xf32>
    %cst_203 = arith.constant dense<0.000000e+00> : vector<16x32xf32>
    %194 = tpu.matmul %191, %193, %cst_203 {dimension_numbers = #tpu.dot_dimension_numbers<[1], [0], [0], [1], [0, 0, 1, 1], [], []>} : vector<16x16xf32>, vector<16x32xf32>, vector<16x32xf32> -> vector<16x32xf32>
    %c6_204 = arith.constant 6 : index
    %c0_205 = arith.constant 0 : index
    %195 = vector.load %arg16[%c6_204, %c0_205] : memref<32x32xf32, #tpu.memory_space<vmem>>, vector<16x16xf32>
    %c1_206 = arith.constant 1 : index
    %c0_207 = arith.constant 0 : index
    %c0_208 = arith.constant 0 : index
    %196 = vector.load %arg14[%c1_206, %c0_207, %c0_208] : memref<7x16x32xf32, #tpu.memory_space<vmem>>, vector<1x16x32xf32>
    %197 = vector.shape_cast %196 : vector<1x16x32xf32> to vector<16x32xf32>
    %cst_209 = arith.constant dense<0.000000e+00> : vector<16x32xf32>
    %198 = tpu.matmul %195, %197, %cst_209 {dimension_numbers = #tpu.dot_dimension_numbers<[1], [0], [0], [1], [0, 0, 1, 1], [], []>} : vector<16x16xf32>, vector<16x32xf32>, vector<16x32xf32> -> vector<16x32xf32>
    %199 = arith.addf %194, %198 : vector<16x32xf32>
    %c7_210 = arith.constant 7 : index
    %c0_211 = arith.constant 0 : index
    %200 = vector.load %arg16[%c7_210, %c0_211] : memref<32x32xf32, #tpu.memory_space<vmem>>, vector<16x16xf32>
    %c2_212 = arith.constant 2 : index
    %c0_213 = arith.constant 0 : index
    %c0_214 = arith.constant 0 : index
    %201 = vector.load %arg14[%c2_212, %c0_213, %c0_214] : memref<7x16x32xf32, #tpu.memory_space<vmem>>, vector<1x16x32xf32>
    %202 = vector.shape_cast %201 : vector<1x16x32xf32> to vector<16x32xf32>
    %cst_215 = arith.constant dense<0.000000e+00> : vector<16x32xf32>
    %203 = tpu.matmul %200, %202, %cst_215 {dimension_numbers = #tpu.dot_dimension_numbers<[1], [0], [0], [1], [0, 0, 1, 1], [], []>} : vector<16x16xf32>, vector<16x32xf32>, vector<16x32xf32> -> vector<16x32xf32>
    %204 = arith.addf %199, %203 : vector<16x32xf32>
    %c8_216 = arith.constant 8 : index
    %c0_217 = arith.constant 0 : index
    %205 = vector.load %arg16[%c8_216, %c0_217] : memref<32x32xf32, #tpu.memory_space<vmem>>, vector<16x16xf32>
    %c3_218 = arith.constant 3 : index
    %c0_219 = arith.constant 0 : index
    %c0_220 = arith.constant 0 : index
    %206 = vector.load %arg14[%c3_218, %c0_219, %c0_220] : memref<7x16x32xf32, #tpu.memory_space<vmem>>, vector<1x16x32xf32>
    %207 = vector.shape_cast %206 : vector<1x16x32xf32> to vector<16x32xf32>
    %cst_221 = arith.constant dense<0.000000e+00> : vector<16x32xf32>
    %208 = tpu.matmul %205, %207, %cst_221 {dimension_numbers = #tpu.dot_dimension_numbers<[1], [0], [0], [1], [0, 0, 1, 1], [], []>} : vector<16x16xf32>, vector<16x32xf32>, vector<16x32xf32> -> vector<16x32xf32>
    %209 = arith.addf %204, %208 : vector<16x32xf32>
    %c9_222 = arith.constant 9 : index
    %c0_223 = arith.constant 0 : index
    %210 = vector.load %arg16[%c9_222, %c0_223] : memref<32x32xf32, #tpu.memory_space<vmem>>, vector<16x16xf32>
    %c4_224 = arith.constant 4 : index
    %c0_225 = arith.constant 0 : index
    %c0_226 = arith.constant 0 : index
    %211 = vector.load %arg14[%c4_224, %c0_225, %c0_226] : memref<7x16x32xf32, #tpu.memory_space<vmem>>, vector<1x16x32xf32>
    %212 = vector.shape_cast %211 : vector<1x16x32xf32> to vector<16x32xf32>
    %cst_227 = arith.constant dense<0.000000e+00> : vector<16x32xf32>
    %213 = tpu.matmul %210, %212, %cst_227 {dimension_numbers = #tpu.dot_dimension_numbers<[1], [0], [0], [1], [0, 0, 1, 1], [], []>} : vector<16x16xf32>, vector<16x32xf32>, vector<16x32xf32> -> vector<16x32xf32>
    %214 = arith.addf %209, %213 : vector<16x32xf32>
    %c10_228 = arith.constant 10 : index
    %c0_229 = arith.constant 0 : index
    %215 = vector.load %arg16[%c10_228, %c0_229] : memref<32x32xf32, #tpu.memory_space<vmem>>, vector<16x16xf32>
    %c5_230 = arith.constant 5 : index
    %c0_231 = arith.constant 0 : index
    %c0_232 = arith.constant 0 : index
    %216 = vector.load %arg14[%c5_230, %c0_231, %c0_232] : memref<7x16x32xf32, #tpu.memory_space<vmem>>, vector<1x16x32xf32>
    %217 = vector.shape_cast %216 : vector<1x16x32xf32> to vector<16x32xf32>
    %cst_233 = arith.constant dense<0.000000e+00> : vector<16x32xf32>
    %218 = tpu.matmul %215, %217, %cst_233 {dimension_numbers = #tpu.dot_dimension_numbers<[1], [0], [0], [1], [0, 0, 1, 1], [], []>} : vector<16x16xf32>, vector<16x32xf32>, vector<16x32xf32> -> vector<16x32xf32>
    %219 = arith.addf %214, %218 : vector<16x32xf32>
    %c11_234 = arith.constant 11 : index
    %c0_235 = arith.constant 0 : index
    %220 = vector.load %arg16[%c11_234, %c0_235] : memref<32x32xf32, #tpu.memory_space<vmem>>, vector<16x16xf32>
    %c6_236 = arith.constant 6 : index
    %c0_237 = arith.constant 0 : index
    %c0_238 = arith.constant 0 : index
    %221 = vector.load %arg14[%c6_236, %c0_237, %c0_238] : memref<7x16x32xf32, #tpu.memory_space<vmem>>, vector<1x16x32xf32>
    %222 = vector.shape_cast %221 : vector<1x16x32xf32> to vector<16x32xf32>
    %cst_239 = arith.constant dense<0.000000e+00> : vector<16x32xf32>
    %223 = tpu.matmul %220, %222, %cst_239 {dimension_numbers = #tpu.dot_dimension_numbers<[1], [0], [0], [1], [0, 0, 1, 1], [], []>} : vector<16x16xf32>, vector<16x32xf32>, vector<16x32xf32> -> vector<16x32xf32>
    %224 = arith.addf %219, %223 : vector<16x32xf32>
    %c0_240 = arith.constant 0 : index
    %c0_241 = arith.constant 0 : index
    %c0_242 = arith.constant 0 : index
    %225 = vector.load %arg15[%c0_240, %c0_241, %c0_242] : memref<1x16x32xf32, #tpu.memory_space<vmem>>, vector<1x16x32xf32>
    %226 = vector.shape_cast %225 : vector<1x16x32xf32> to vector<16x32xf32>
    %227 = vector.shape_cast %224 : vector<16x32xf32> to vector<1x16x32xf32>
    tpu.vector_store %arg15[%c0_240, %c0_241, %c0_242], %227 {strides = array<i32>} : memref<1x16x32xf32, #tpu.memory_space<vmem>>, vector<1x16x32xf32>,
    return
  }
  func.func @transform_0(%arg0: i32) -> (i32, i32, i32) {
    %c0_i32 = arith.constant 0 : i32
    %c0_i32_0 = arith.constant 0 : i32
    %c0_i32_1 = arith.constant 0 : i32
    return %arg0, %c0_i32, %c0_i32_0 : i32, i32, i32
  }
  func.func @transform_1(%arg0: i32) -> (i32, i32, i32) {
    %c0_i32 = arith.constant 0 : i32
    %c0_i32_0 = arith.constant 0 : i32
    %c0_i32_1 = arith.constant 0 : i32
    %c0_i32_2 = arith.constant 0 : i32
    return %c0_i32, %c0_i32_0, %c0_i32_1 : i32, i32, i32
  }
  func.func @transform_2(%arg0: i32) -> (i32, i32) {
    %c0_i32 = arith.constant 0 : i32
    %c0_i32_0 = arith.constant 0 : i32
    %c0_i32_1 = arith.constant 0 : i32
    return %c0_i32, %c0_i32_0 : i32, i32
  }
  func.func @transform_3(%arg0: i32) -> (i32, i32) {
    %c0_i32 = arith.constant 0 : i32
    %c0_i32_0 = arith.constant 0 : i32
    %c0_i32_1 = arith.constant 0 : i32
    return %c0_i32, %c0_i32_0 : i32, i32
  }
  func.func @transform_4(%arg0: i32) -> (i32, i32, i32) {
    %c0_i32 = arith.constant 0 : i32
    %c0_i32_0 = arith.constant 0 : i32
    %c0_i32_1 = arith.constant 0 : i32
    %c0_i32_2 = arith.constant 0 : i32
    return %c0_i32, %c0_i32_0, %c0_i32_1 : i32, i32, i32
  }
  func.func @transform_5(%arg0: i32) -> (i32, i32) {
    %c0_i32 = arith.constant 0 : i32
    %c0_i32_0 = arith.constant 0 : i32
    %c0_i32_1 = arith.constant 0 : i32
    return %c0_i32, %c0_i32_0 : i32, i32
  }
  func.func @transform_6(%arg0: i32) -> (i32, i32) {
    %c0_i32 = arith.constant 0 : i32
    %c0_i32_0 = arith.constant 0 : i32
    %c0_i32_1 = arith.constant 0 : i32
    return %c0_i32, %c0_i32_0 : i32, i32
  }
  func.func @transform_7(%arg0: i32) -> (i32, i32, i32) {
    %c0_i32 = arith.constant 0 : i32
    %c0_i32_0 = arith.constant 0 : i32
    %c0_i32_1 = arith.constant 0 : i32
    %c0_i32_2 = arith.constant 0 : i32
    return %c0_i32, %c0_i32_0, %c0_i32_1 : i32, i32, i32
  }
  func.func @transform_8(%arg0: i32) -> (i32, i32) {
    %c0_i32 = arith.constant 0 : i32
    %c0_i32_0 = arith.constant 0 : i32
    %c0_i32_1 = arith.constant 0 : i32
    return %c0_i32, %c0_i32_0 : i32, i32
  }
  func.func @transform_9(%arg0: i32) -> (i32, i32) {
    %c0_i32 = arith.constant 0 : i32
    %c0_i32_0 = arith.constant 0 : i32
    %c0_i32_1 = arith.constant 0 : i32
    return %c0_i32, %c0_i32_0 : i32, i32
  }
  func.func @transform_10(%arg0: i32) -> (i32, i32, i32) {
    %c0_i32 = arith.constant 0 : i32
    %c0_i32_0 = arith.constant 0 : i32
    %c0_i32_1 = arith.constant 0 : i32
    %c0_i32_2 = arith.constant 0 : i32
    return %c0_i32, %c0_i32_0, %c0_i32_1 : i32, i32, i32
  }
  func.func @transform_11(%arg0: i32) -> (i32, i32) {
    %c0_i32 = arith.constant 0 : i32
    %c0_i32_0 = arith.constant 0 : i32
    %c0_i32_1 = arith.constant 0 : i32
    return %c0_i32, %c0_i32_0 : i32, i32
  }
  func.func @transform_12(%arg0: i32) -> (i32, i32) {
    %c0_i32 = arith.constant 0 : i32
    %c0_i32_0 = arith.constant 0 : i32
    %c0_i32_1 = arith.constant 0 : i32
    return %c0_i32, %c0_i32_0 : i32, i32
  }
  func.func @transform_13(%arg0: i32) -> (i32, i32, i32) {
    %c0_i32 = arith.constant 0 : i32
    %c0_i32_0 = arith.constant 0 : i32
    %c0_i32_1 = arith.constant 0 : i32
    %c0_i32_2 = arith.constant 0 : i32
    return %c0_i32, %c0_i32_0, %c0_i32_1 : i32, i32, i32
  }
  func.func @transform_14(%arg0: i32) -> (i32, i32, i32) {
    %c0_i32 = arith.constant 0 : i32
    %c0_i32_0 = arith.constant 0 : i32
    %c0_i32_1 = arith.constant 0 : i32
    return %arg0, %c0_i32, %c0_i32_0 : i32, i32, i32
  }
}

</mosaic_0001>

<llo_original>
// kernel: tpu_custom_call.1
$region0: #{tpu_custom_call.1}
  #allocation0 [shape = 'u32[]', space=smem, size = 0x4, offset = 0x4, fixed_abs, tag = 'smem constant byte address 0x4 - core index']
  #allocation1 [shape = 'u32[144,128]{1,0:T(1,128)}', space=vmem, size = 0x12000, scoped, tag = 'internal scratch']
  #allocation2 [shape = 'f32[32,32]{1,0:T(8,128)}', space=vmem, size = 0x4000, scoped, tag = 'scratch operand']
  #allocation3 [shape = 'f32[32,32]{1,0:T(8,128)}', space=vmem, size = 0x4000, scoped, tag = 'scratch operand']
  %s0 = inlined_call_operand.hbm [shape: f32[2,16,32], index: 0, kind: input, shape index: {}]
  %s1 = inlined_call_operand.vmem [shape: f32[7,32,32], index: 1, kind: input, shape index: {}]
  %s2 = inlined_call_operand.vmem [shape: f32[1,32], index: 2, kind: input, shape index: {}]
  %s3 = inlined_call_operand.vmem [shape: f32[1,32], index: 3, kind: input, shape index: {}]
  %s4 = inlined_call_operand.hbm [shape: f32[7,32,32], index: 4, kind: input, shape index: {}]
  %s5 = inlined_call_operand.vmem [shape: f32[1,32], index: 5, kind: input, shape index: {}]
  %s6 = inlined_call_operand.vmem [shape: f32[1,32], index: 6, kind: input, shape index: {}]
  %s7 = inlined_call_operand.vmem [shape: f32[7,32,16], index: 7, kind: input, shape index: {}]
  %s8 = inlined_call_operand.vmem [shape: f32[1,16], index: 8, kind: input, shape index: {}]
  %s9 = inlined_call_operand.vmem [shape: f32[1,16], index: 9, kind: input, shape index: {}]
  %s10 = inlined_call_operand.vmem [shape: f32[7,16,16], index: 10, kind: input, shape index: {}]
  %s11 = inlined_call_operand.vmem [shape: f32[1,16], index: 11, kind: input, shape index: {}]
  %s12 = inlined_call_operand.vmem [shape: f32[1,16], index: 12, kind: input, shape index: {}]
  %s13 = inlined_call_operand.hbm [shape: f32[7,16,32], index: 13, kind: input, shape index: {}]
  %s14 = inlined_call_operand.hbm [shape: f32[2,16,32], index: 14, kind: output, shape index: {}]
  %s15 = sld [smem:[#allocation0]]
  $region101: #{tpu_custom_call.1} parent=0
    _
  %s17 = ssub.s32 1, %s15
  %s18 = scalar_select 0, %s17, %s15
  $region1: #{tpu_custom_call.1} parent=0
    #allocation4 [shape = 'u8[16384]{0}', space=vmem, size = 0x4000, scoped, tag = 'input window, operand 0']
    #allocation5 [shape = 's32[2]{0}', space=sflag, size = 0x8, scoped, tag = 'scoped memory for tpu_custom_call.1']
    #allocation6 [shape = 's32[2]{0}', space=sflag, size = 0x8, scoped, tag = 'scoped memory for tpu_custom_call.1']
    #allocation7 [shape = 'u8[114688]{0}', space=vmem, size = 0x1c000, scoped, tag = 'input window, operand 4, single buffered']
    #allocation8 [shape = 's32[1]{0}', space=sflag, size = 0x4, scoped, tag = 'scoped memory for tpu_custom_call.1']
    #allocation9 [shape = 'u8[57344]{0}', space=vmem, size = 0xe000, scoped, tag = 'input window, operand 13, single buffered']
    #allocation10 [shape = 'u8[16384]{0}', space=vmem, size = 0x4000, scoped, tag = 'output window, operand 0']
    %19 = vsyncpa [#allocation5], 0
    %s20 = scalar_lea.sflag [#allocation5], 1
    %21 = vsyncpa %s20, 0
    %22 = vsyncpa [#allocation8], 0
    %23 = vsyncpa [#allocation6], 0
    %s24 = scalar_lea.sflag [#allocation6], 1
    %25 = vsyncpa %s24, 0
    loop: start=0, step=1, limit=4
    $region2: #{tpu_custom_call.1} parent=1 // loop_pre_header
      _
    $region3: #{tpu_custom_call.1} parent=1 // loop_header
      %s27 = sphi 0, %s31
      %p28 = scmp.ge.s32.totalorder %s27, 4
      %s37 = sphi 0, %s39
      %s40 = sphi 0, %s37
      %s41 = sphi 0, %s40
      %s57 = sphi 0, %s41
      %s61 = sphi 0, %s61
      %s63 = sphi 0, %s61
      %s64 = sphi 0, %s63
      %s78 = sphi 0, %s64
      %s82 = sphi 0, %s82
      %s84 = sphi 0, %s82
      %s85 = sphi 0, %s84
      %s99 = sphi 0, %s85
      %s103 = sphi 0, %s103
      %s105 = sphi 0, %s103
      %s106 = sphi 0, %s105
      %s120 = sphi 0, %s106
      %s124 = sphi 0, %s124
      %s126 = sphi 0, %s124
      %s127 = sphi 0, %s126
      %s141 = sphi 0, %s127
      %s145 = sphi 0, %s145
      %s147 = sphi 0, %s145
      %s148 = sphi 0, %s147
      %s162 = sphi 0, %s148
      %s166 = sphi 0, %s166
      %s168 = sphi 0, %s166
      %s169 = sphi 0, %s168
      %s183 = sphi 0, %s169
      %s187 = sphi 0, %s187
      %s189 = sphi 0, %s187
      %s190 = sphi 0, %s189
      %s204 = sphi 0, %s190
      %s208 = sphi 0, %s208
      %s210 = sphi 0, %s208
      %s211 = sphi 0, %s210
      %s225 = sphi 0, %s211
      %s229 = sphi 0, %s229
      %s231 = sphi 0, %s229
      %s232 = sphi 0, %s231
      %s246 = sphi 0, %s232
      %s250 = sphi 0, %s250
      %s252 = sphi 0, %s250
      %s253 = sphi 0, %s252
      %s267 = sphi 0, %s253
      %s271 = sphi 0, %s271
      %s273 = sphi 0, %s271
      %s274 = sphi 0, %s273
      %s288 = sphi 0, %s274
      %s292 = sphi 0, %s292
      %s294 = sphi 0, %s292
      %s295 = sphi 0, %s294
      %s309 = sphi 0, %s295
      %s313 = sphi 0, %s313
      %s315 = sphi 0, %s313
      %s316 = sphi 0, %s315
      %s330 = sphi 0, %s316
      %s336 = sphi 0, %s338
      %s339 = sphi 0, %s336
      %s340 = sphi 0, %s339
      %s356 = sphi 0, %s340
    $region4: #{tpu_custom_call.1} parent=1 // loop_header_branch
      %30 = sbr.rel (%p28) target = $region8
    $region5: #{tpu_custom_call.1} parent=1 // loop_body
      %s32 = ssub.s32 %s27, 1
      %s33 = ssub.s32 %s27, 2
      %s34 = sadd.s32 %s27, 1
      %s35 = ssub.s32 %s27, %s34
      %p36 = scmp.eq.s32.totalorder %s35, 0
      %s38 = sadd.s32 %s37, 1
      %s39 = scalar_select %p36, %s37, %s38
      %p42 = pneg %p36
      %p43 = scmp.eq.s32.totalorder %s27, 1
      %p44 = por %p42, %p43
      %p45 = scmp.ne.s32.totalorder %s37, %s40
      %p46 = scmp.eq.s32.totalorder %s27, 0
      %p47 = por %p45, %p46
      %p48 = scmp.ne.s32.totalorder %s37, %s40
      %p49 = scmp.eq.s32.totalorder %s32, 1
      %p50 = por %p48, %p49
      %p51 = scmp.ne.s32.totalorder %s40, %s41
      %p52 = scmp.eq.s32.totalorder %s32, 0
      %p53 = por %p51, %p52
      %p54 = scmp.ne.s32.totalorder %s40, %s41
      %p55 = scmp.eq.s32.totalorder %s33, 1
      %p56 = por %p54, %p55
      %p58 = scmp.ne.s32.totalorder %s41, %s57
      %p59 = scmp.eq.s32.totalorder %s33, 0
      %p60 = por %p58, %p59
      %s62 = sadd.s32 %s61, 1
      %p65 = scmp.eq.s32.totalorder %s27, 1
      %p66 = scmp.ne.s32.totalorder %s61, %s63
      %p67 = scmp.eq.s32.totalorder %s27, 0
      %p68 = por %p66, %p67
      %p69 = scmp.ne.s32.totalorder %s61, %s63
      %p70 = scmp.eq.s32.totalorder %s32, 1
      %p71 = por %p69, %p70
      %p72 = scmp.ne.s32.totalorder %s63, %s64
      %p73 = scmp.eq.s32.totalorder %s32, 0
      %p74 = por %p72, %p73
      %p75 = scmp.ne.s32.totalorder %s63, %s64
      %p76 = scmp.eq.s32.totalorder %s33, 1
      %p77 = por %p75, %p76
      %p79 = scmp.ne.s32.totalorder %s64, %s78
      %p80 = scmp.eq.s32.totalorder %s33, 0
      %p81 = por %p79, %p80
      %s83 = sadd.s32 %s82, 1
      %p86 = scmp.eq.s32.totalorder %s27, 1
      %p87 = scmp.ne.s32.totalorder %s82, %s84
      %p88 = scmp.eq.s32.totalorder %s27, 0
      %p89 = por %p87, %p88
      %p90 = scmp.ne.s32.totalorder %s82, %s84
      %p91 = scmp.eq.s32.totalorder %s32, 1
      %p92 = por %p90, %p91
      %p93 = scmp.ne.s32.totalorder %s84, %s85
      %p94 = scmp.eq.s32.totalorder %s32, 0
      %p95 = por %p93, %p94
      %p96 = scmp.ne.s32.totalorder %s84, %s85
      %p97 = scmp.eq.s32.totalorder %s33, 1
      %p98 = por %p96, %p97
      %p100 = scmp.ne.s32.totalorder %s85, %s99
      %p101 = scmp.eq.s32.totalorder %s33, 0
      %p102 = por %p100, %p101
      %s104 = sadd.s32 %s103, 1
      %p107 = scmp.eq.s32.totalorder %s27, 1
      %p108 = scmp.ne.s32.totalorder %s103, %s105
      %p109 = scmp.eq.s32.totalorder %s27, 0
      %p110 = por %p108, %p109
      %p111 = scmp.ne.s32.totalorder %s103, %s105
      %p112 = scmp.eq.s32.totalorder %s32, 1
      %p113 = por %p111, %p112
      %p114 = scmp.ne.s32.totalorder %s105, %s106
      %p115 = scmp.eq.s32.totalorder %s32, 0
      %p116 = por %p114, %p115
      %p117 = scmp.ne.s32.totalorder %s105, %s106
      %p118 = scmp.eq.s32.totalorder %s33, 1
      %p119 = por %p117, %p118
      %p121 = scmp.ne.s32.totalorder %s106, %s120
      %p122 = scmp.eq.s32.totalorder %s33, 0
      %p123 = por %p121, %p122
      %s125 = sadd.s32 %s124, 1
      %p128 = scmp.eq.s32.totalorder %s27, 1
      %p129 = scmp.ne.s32.totalorder %s124, %s126
      %p130 = scmp.eq.s32.totalorder %s27, 0
      %p131 = por %p129, %p130
      %p132 = scmp.ne.s32.totalorder %s124, %s126
      %p133 = scmp.eq.s32.totalorder %s32, 1
      %p134 = por %p132, %p133
      %p135 = scmp.ne.s32.totalorder %s126, %s127
      %p136 = scmp.eq.s32.totalorder %s32, 0
      %p137 = por %p135, %p136
      %p138 = scmp.ne.s32.totalorder %s126, %s127
      %p139 = scmp.eq.s32.totalorder %s33, 1
      %p140 = por %p138, %p139
      %p142 = scmp.ne.s32.totalorder %s127, %s141
      %p143 = scmp.eq.s32.totalorder %s33, 0
      %p144 = por %p142, %p143
      %s146 = sadd.s32 %s145, 1
      %p149 = scmp.eq.s32.totalorder %s27, 1
      %p150 = scmp.ne.s32.totalorder %s145, %s147
      %p151 = scmp.eq.s32.totalorder %s27, 0
      %p152 = por %p150, %p151
      %p153 = scmp.ne.s32.totalorder %s145, %s147
      %p154 = scmp.eq.s32.totalorder %s32, 1
      %p155 = por %p153, %p154
      %p156 = scmp.ne.s32.totalorder %s147, %s148
      %p157 = scmp.eq.s32.totalorder %s32, 0
      %p158 = por %p156, %p157
      %p159 = scmp.ne.s32.totalorder %s147, %s148
      %p160 = scmp.eq.s32.totalorder %s33, 1
      %p161 = por %p159, %p160
      %p163 = scmp.ne.s32.totalorder %s148, %s162
      %p164 = scmp.eq.s32.totalorder %s33, 0
      %p165 = por %p163, %p164
      %s167 = sadd.s32 %s166, 1
      %p170 = scmp.eq.s32.totalorder %s27, 1
      %p171 = scmp.ne.s32.totalorder %s166, %s168
      %p172 = scmp.eq.s32.totalorder %s27, 0
      %p173 = por %p171, %p172
      %p174 = scmp.ne.s32.totalorder %s166, %s168
      %p175 = scmp.eq.s32.totalorder %s32, 1
      %p176 = por %p174, %p175
      %p177 = scmp.ne.s32.totalorder %s168, %s169
      %p178 = scmp.eq.s32.totalorder %s32, 0
      %p179 = por %p177, %p178
      %p180 = scmp.ne.s32.totalorder %s168, %s169
      %p181 = scmp.eq.s32.totalorder %s33, 1
      %p182 = por %p180, %p181
      %p184 = scmp.ne.s32.totalorder %s169, %s183
      %p185 = scmp.eq.s32.totalorder %s33, 0
      %p186 = por %p184, %p185
      %s188 = sadd.s32 %s187, 1
      %p191 = scmp.eq.s32.totalorder %s27, 1
      %p192 = scmp.ne.s32.totalorder %s187, %s189
      %p193 = scmp.eq.s32.totalorder %s27, 0
      %p194 = por %p192, %p193
      %p195 = scmp.ne.s32.totalorder %s187, %s189
      %p196 = scmp.eq.s32.totalorder %s32, 1
      %p197 = por %p195, %p196
      %p198 = scmp.ne.s32.totalorder %s189, %s190
      %p199 = scmp.eq.s32.totalorder %s32, 0
      %p200 = por %p198, %p199
      %p201 = scmp.ne.s32.totalorder %s189, %s190
      %p202 = scmp.eq.s32.totalorder %s33, 1
      %p203 = por %p201, %p202
      %p205 = scmp.ne.s32.totalorder %s190, %s204
      %p206 = scmp.eq.s32.totalorder %s33, 0
      %p207 = por %p205, %p206
      %s209 = sadd.s32 %s208, 1
      %p212 = scmp.eq.s32.totalorder %s27, 1
      %p213 = scmp.ne.s32.totalorder %s208, %s210
      %p214 = scmp.eq.s32.totalorder %s27, 0
      %p215 = por %p213, %p214
      %p216 = scmp.ne.s32.totalorder %s208, %s210
      %p217 = scmp.eq.s32.totalorder %s32, 1
      %p218 = por %p216, %p217
      %p219 = scmp.ne.s32.totalorder %s210, %s211
      %p220 = scmp.eq.s32.totalorder %s32, 0
      %p221 = por %p219, %p220
      %p222 = scmp.ne.s32.totalorder %s210, %s211
      %p223 = scmp.eq.s32.totalorder %s33, 1
      %p224 = por %p222, %p223
      %p226 = scmp.ne.s32.totalorder %s211, %s225
      %p227 = scmp.eq.s32.totalorder %s33, 0
      %p228 = por %p226, %p227
      %s230 = sadd.s32 %s229, 1
      %p233 = scmp.eq.s32.totalorder %s27, 1
      %p234 = scmp.ne.s32.totalorder %s229, %s231
      %p235 = scmp.eq.s32.totalorder %s27, 0
      %p236 = por %p234, %p235
      %p237 = scmp.ne.s32.totalorder %s229, %s231
      %p238 = scmp.eq.s32.totalorder %s32, 1
      %p239 = por %p237, %p238
      %p240 = scmp.ne.s32.totalorder %s231, %s232
      %p241 = scmp.eq.s32.totalorder %s32, 0
      %p242 = por %p240, %p241
      %p243 = scmp.ne.s32.totalorder %s231, %s232
      %p244 = scmp.eq.s32.totalorder %s33, 1
      %p245 = por %p243, %p244
      %p247 = scmp.ne.s32.totalorder %s232, %s246
      %p248 = scmp.eq.s32.totalorder %s33, 0
      %p249 = por %p247, %p248
      %s251 = sadd.s32 %s250, 1
      %p254 = scmp.eq.s32.totalorder %s27, 1
      %p255 = scmp.ne.s32.totalorder %s250, %s252
      %p256 = scmp.eq.s32.totalorder %s27, 0
      %p257 = por %p255, %p256
      %p258 = scmp.ne.s32.totalorder %s250, %s252
      %p259 = scmp.eq.s32.totalorder %s32, 1
      %p260 = por %p258, %p259
      %p261 = scmp.ne.s32.totalorder %s252, %s253
      %p262 = scmp.eq.s32.totalorder %s32, 0
      %p263 = por %p261, %p262
      %p264 = scmp.ne.s32.totalorder %s252, %s253
      %p265 = scmp.eq.s32.totalorder %s33, 1
      %p266 = por %p264, %p265
      %p268 = scmp.ne.s32.totalorder %s253, %s267
      %p269 = scmp.eq.s32.totalorder %s33, 0
      %p270 = por %p268, %p269
      %s272 = sadd.s32 %s271, 1
      %p275 = scmp.eq.s32.totalorder %s27, 1
      %p276 = scmp.ne.s32.totalorder %s271, %s273
      %p277 = scmp.eq.s32.totalorder %s27, 0
      %p278 = por %p276, %p277
      %p279 = scmp.ne.s32.totalorder %s271, %s273
      %p280 = scmp.eq.s32.totalorder %s32, 1
      %p281 = por %p279, %p280
      %p282 = scmp.ne.s32.totalorder %s273, %s274
      %p283 = scmp.eq.s32.totalorder %s32, 0
      %p284 = por %p282, %p283
      %p285 = scmp.ne.s32.totalorder %s273, %s274
      %p286 = scmp.eq.s32.totalorder %s33, 1
      %p287 = por %p285, %p286
      %p289 = scmp.ne.s32.totalorder %s274, %s288
      %p290 = scmp.eq.s32.totalorder %s33, 0
      %p291 = por %p289, %p290
      %s293 = sadd.s32 %s292, 1
      %p296 = scmp.eq.s32.totalorder %s27, 1
      %p297 = scmp.ne.s32.totalorder %s292, %s294
      %p298 = scmp.eq.s32.totalorder %s27, 0
      %p299 = por %p297, %p298
      %p300 = scmp.ne.s32.totalorder %s292, %s294
      %p301 = scmp.eq.s32.totalorder %s32, 1
      %p302 = por %p300, %p301
      %p303 = scmp.ne.s32.totalorder %s294, %s295
      %p304 = scmp.eq.s32.totalorder %s32, 0
      %p305 = por %p303, %p304
      %p306 = scmp.ne.s32.totalorder %s294, %s295
      %p307 = scmp.eq.s32.totalorder %s33, 1
      %p308 = por %p306, %p307
      %p310 = scmp.ne.s32.totalorder %s295, %s309
      %p311 = scmp.eq.s32.totalorder %s33, 0
      %p312 = por %p310, %p311
      %s314 = sadd.s32 %s313, 1
      %p317 = scmp.eq.s32.totalorder %s27, 1
      %p318 = scmp.ne.s32.totalorder %s313, %s315
      %p319 = scmp.eq.s32.totalorder %s27, 0
      %p320 = por %p318, %p319
      %p321 = scmp.ne.s32.totalorder %s313, %s315
      %p322 = scmp.eq.s32.totalorder %s32, 1
      %p323 = por %p321, %p322
      %p324 = scmp.ne.s32.totalorder %s315, %s316
      %p325 = scmp.eq.s32.totalorder %s32, 0
      %p326 = por %p324, %p325
      %p327 = scmp.ne.s32.totalorder %s315, %s316
      %p328 = scmp.eq.s32.totalorder %s33, 1
      %p329 = por %p327, %p328
      %p331 = scmp.ne.s32.totalorder %s316, %s330
      %p332 = scmp.eq.s32.totalorder %s33, 0
      %p333 = por %p331, %p332
      %s334 = ssub.s32 %s27, %s34
      %p335 = scmp.eq.s32.totalorder %s334, 0
      %s337 = sadd.s32 %s336, 1
      %s338 = scalar_select %p335, %s336, %s337
      %p341 = pneg %p335
      %p342 = scmp.eq.s32.totalorder %s27, 1
      %p343 = por %p341, %p342
      %p344 = scmp.ne.s32.totalorder %s336, %s339
      %p345 = scmp.eq.s32.totalorder %s27, 0
      %p346 = por %p344, %p345
      %p347 = scmp.ne.s32.totalorder %s336, %s339
      %p348 = scmp.eq.s32.totalorder %s32, 1
      %p349 = por %p347, %p348
      %p350 = scmp.ne.s32.totalorder %s339, %s340
      %p351 = scmp.eq.s32.totalorder %s32, 0
      %p352 = por %p350, %p351
      %p353 = scmp.ne.s32.totalorder %s339, %s340
      %p354 = scmp.eq.s32.totalorder %s33, 1
      %p355 = por %p353, %p354
      %p357 = scmp.ne.s32.totalorder %s340, %s356
      %p358 = scmp.eq.s32.totalorder %s33, 0
      %p359 = por %p357, %p358
      %p360 = scmp.le.s32.totalorder 1, %s27
      %p361 = scmp.lt.s32.totalorder %s27, 3
      %p362 = pnand %p360, %p361
      %p363 = pneg %p362
      // Predicated region
      $region9: #{tpu_custom_call.1} parent=5 // pred_check
        _
      $region10: #{tpu_custom_call.1} parent=5 // pred_check_branch
        %365 = sbr.rel (%p362) target = $region12
      $region11: #{tpu_custom_call.1} parent=5 // pred_region
        %s366 = ssub.s32 %s27, 1
        // Predicated region
        $region13: #{tpu_custom_call.1} parent=11 // pred_check
          %p367 = pneg %p74
        $region14: #{tpu_custom_call.1} parent=11 // pred_check_branch
          %369 = sbr.rel (%p367) target = $region16
        $region15: #{tpu_custom_call.1} parent=11 // pred_region
          _
        $region16: #{tpu_custom_call.1} parent=11 // pred_fallthru
          _
        // Predicated region
        $region17: #{tpu_custom_call.1} parent=11 // pred_check
          %p370 = pneg %p95
        $region18: #{tpu_custom_call.1} parent=11 // pred_check_branch
          %372 = sbr.rel (%p370) target = $region20
        $region19: #{tpu_custom_call.1} parent=11 // pred_region
          _
        $region20: #{tpu_custom_call.1} parent=11 // pred_fallthru
          _
        // Predicated region
        $region21: #{tpu_custom_call.1} parent=11 // pred_check
          %p373 = pneg %p116
        $region22: #{tpu_custom_call.1} parent=11 // pred_check_branch
          %375 = sbr.rel (%p373) target = $region24
        $region23: #{tpu_custom_call.1} parent=11 // pred_region
          _
        $region24: #{tpu_custom_call.1} parent=11 // pred_fallthru
          _
        // Predicated region
        $region25: #{tpu_custom_call.1} parent=11 // pred_check
          %p376 = pneg %p137
        $region26: #{tpu_custom_call.1} parent=11 // pred_check_branch
          %378 = sbr.rel (%p376) target = $region28
        $region27: #{tpu_custom_call.1} parent=11 // pred_region
          %s380 = ssub.s32 3584, 3584
          %381 = vsyncadd [#allocation8], %s380
          %s382 = sshll.u32 [#allocation7], 4
          %s383 = int_to_ptr.vmem [resolvable:$true] %s382
          %388 = dma.hbm_to_vmem [thread:$0]  %s4, 3584, %s383, [#allocation8], 128, 128, 8
        $region28: #{tpu_custom_call.1} parent=11 // pred_fallthru
          _
        // Predicated region
        $region29: #{tpu_custom_call.1} parent=11 // pred_check
          %p389 = pneg %p158
        $region30: #{tpu_custom_call.1} parent=11 // pred_check_branch
          %391 = sbr.rel (%p389) target = $region32
        $region31: #{tpu_custom_call.1} parent=11 // pred_region
          _
        $region32: #{tpu_custom_call.1} parent=11 // pred_fallthru
          _
        // Predicated region
        $region33: #{tpu_custom_call.1} parent=11 // pred_check
          %p392 = pneg %p179
        $region34: #{tpu_custom_call.1} parent=11 // pred_check_branch
          %394 = sbr.rel (%p392) target = $region36
        $region35: #{tpu_custom_call.1} parent=11 // pred_region
          _
        $region36: #{tpu_custom_call.1} parent=11 // pred_fallthru
          _
        // Predicated region
        $region37: #{tpu_custom_call.1} parent=11 // pred_check
          %p395 = pneg %p200
        $region38: #{tpu_custom_call.1} parent=11 // pred_check_branch
          %397 = sbr.rel (%p395) target = $region40
        $region39: #{tpu_custom_call.1} parent=11 // pred_region
          _
        $region40: #{tpu_custom_call.1} parent=11 // pred_fallthru
          _
        // Predicated region
        $region41: #{tpu_custom_call.1} parent=11 // pred_check
          %p398 = pneg %p221
        $region42: #{tpu_custom_call.1} parent=11 // pred_check_branch
          %400 = sbr.rel (%p398) target = $region44
        $region43: #{tpu_custom_call.1} parent=11 // pred_region
          _
        $region44: #{tpu_custom_call.1} parent=11 // pred_fallthru
          _
        // Predicated region
        $region45: #{tpu_custom_call.1} parent=11 // pred_check
          %p401 = pneg %p242
        $region46: #{tpu_custom_call.1} parent=11 // pred_check_branch
          %403 = sbr.rel (%p401) target = $region48
        $region47: #{tpu_custom_call.1} parent=11 // pred_region
          _
        $region48: #{tpu_custom_call.1} parent=11 // pred_fallthru
          _
        // Predicated region
        $region49: #{tpu_custom_call.1} parent=11 // pred_check
          %p404 = pneg %p263
        $region50: #{tpu_custom_call.1} parent=11 // pred_check_branch
          %406 = sbr.rel (%p404) target = $region52
        $region51: #{tpu_custom_call.1} parent=11 // pred_region
          _
        $region52: #{tpu_custom_call.1} parent=11 // pred_fallthru
          _
        // Predicated region
        $region53: #{tpu_custom_call.1} parent=11 // pred_check
          %p407 = pneg %p284
        $region54: #{tpu_custom_call.1} parent=11 // pred_check_branch
          %409 = sbr.rel (%p407) target = $region56
        $region55: #{tpu_custom_call.1} parent=11 // pred_region
          _
        $region56: #{tpu_custom_call.1} parent=11 // pred_fallthru
          _
        // Predicated region
        $region57: #{tpu_custom_call.1} parent=11 // pred_check
          %p410 = pneg %p305
        $region58: #{tpu_custom_call.1} parent=11 // pred_check_branch
          %412 = sbr.rel (%p410) target = $region60
        $region59: #{tpu_custom_call.1} parent=11 // pred_region
          _
        $region60: #{tpu_custom_call.1} parent=11 // pred_fallthru
          _
        // Predicated region
        $region61: #{tpu_custom_call.1} parent=11 // pred_check
          %p413 = pneg %p326
        $region62: #{tpu_custom_call.1} parent=11 // pred_check_branch
          %415 = sbr.rel (%p413) target = $region64
        $region63: #{tpu_custom_call.1} parent=11 // pred_region
          %s417 = ssub.s32 1792, 1792
          %418 = vsyncadd [#allocation8], %s417
          %s419 = sshll.u32 [#allocation9], 4
          %s420 = int_to_ptr.vmem [resolvable:$true] %s419
          %425 = dma.hbm_to_vmem [thread:$0]  %s13, 1792, %s420, [#allocation8], 128, 128, 8
        $region64: #{tpu_custom_call.1} parent=11 // pred_fallthru
          _
      $region12: #{tpu_custom_call.1} parent=5 // pred_fallthru
        _
      %p426 = scmp.lt.s32.totalorder %s27, 2
      // Predicated region
      $region65: #{tpu_custom_call.1} parent=5 // pred_check
        %p427 = pneg %p426
      $region66: #{tpu_custom_call.1} parent=5 // pred_check_branch
        %429 = sbr.rel (%p427) target = $region68
      $region67: #{tpu_custom_call.1} parent=5 // pred_region
        // Predicated region
        $region69: #{tpu_custom_call.1} parent=67 // pred_check
          %p430 = pneg %p47
        $region70: #{tpu_custom_call.1} parent=67 // pred_check_branch
          %432 = sbr.rel (%p430) target = $region72
        $region71: #{tpu_custom_call.1} parent=67 // pred_region
          %s433 = sand.u32 %s37, 1
          %s434 = scalar_lea.sflag [#allocation5], %s433
          %s435 = sand.u32 %s37, 1
          %s436 = smul.addr %s435, 16
          %s437 = scalar_lea.vmem [#allocation4], %s436
          %s439 = ssub.s32 256, 256
          %440 = vsyncadd %s434, %s439
          %s441 = smul.addr %s27, 2
          %s442 = smul.addr %s441, 128
          %s443 = scalar_lea.hbm %s0, %s442
          %s444 = sshll.u32 %s437, 4
          %s445 = int_to_ptr.vmem [resolvable:$true] %s444
          %450 = dma.hbm_to_vmem [thread:$0]  %s443, 256, %s445, %s434, 128, 128, 8
        $region72: #{tpu_custom_call.1} parent=67 // pred_fallthru
          _
      $region68: #{tpu_custom_call.1} parent=5 // pred_fallthru
        _
      %p451 = scmp.le.s32.totalorder 1, %s27
      %p452 = scmp.lt.s32.totalorder %s27, 3
      %p453 = pnand %p451, %p452
      %p454 = pneg %p453
      // Predicated region
      $region73: #{tpu_custom_call.1} parent=5 // pred_check
        _
      $region74: #{tpu_custom_call.1} parent=5 // pred_check_branch
        %456 = sbr.rel (%p453) target = $region76
      $region75: #{tpu_custom_call.1} parent=5 // pred_region
        %s457 = ssub.s32 %s27, 1
        %s458 = sand.u32 %s40, 1
        %s459 = scalar_lea.sflag [#allocation5], %s458
        %s460 = sand.u32 %s40, 1
        %s461 = smul.addr %s460, 16
        %s462 = scalar_lea.vmem [#allocation4], %s461
        // Predicated region
        $region77: #{tpu_custom_call.1} parent=75 // pred_check
          %p463 = pneg %p53
        $region78: #{tpu_custom_call.1} parent=75 // pred_check_branch
          %465 = sbr.rel (%p463) target = $region80
        $region79: #{tpu_custom_call.1} parent=75 // pred_region
          %466 = dma.done %s459, 256
        $region80: #{tpu_custom_call.1} parent=75 // pred_fallthru
          _
        // Predicated region
        $region81: #{tpu_custom_call.1} parent=75 // pred_check
          %p467 = pneg %p137
        $region82: #{tpu_custom_call.1} parent=75 // pred_check_branch
          %469 = sbr.rel (%p467) target = $region84
        $region83: #{tpu_custom_call.1} parent=75 // pred_region
          %470 = dma.done [#allocation8], 3584
        $region84: #{tpu_custom_call.1} parent=75 // pred_fallthru
          _
        // Predicated region
        $region85: #{tpu_custom_call.1} parent=75 // pred_check
          %p471 = pneg %p326
        $region86: #{tpu_custom_call.1} parent=75 // pred_check_branch
          %473 = sbr.rel (%p471) target = $region88
        $region87: #{tpu_custom_call.1} parent=75 // pred_region
          %474 = dma.done [#allocation8], 1792
        $region88: #{tpu_custom_call.1} parent=75 // pred_fallthru
          _
        %s475 = sand.u32 %s40, 1
        %s476 = scalar_lea.sflag [#allocation5], %s475
        %s477 = sand.u32 %s40, 1
        %s478 = smul.addr %s477, 16
        %s479 = scalar_lea.vmem [#allocation4], %s478
        %p480 = pneg %p53
        %p481 = pneg %p50
        %p482 = pneg %p74
        %p483 = pneg %p71
        %p484 = pneg %p95
        %p485 = pneg %p92
        %p486 = pneg %p116
        %p487 = pneg %p113
        %p488 = pneg %p137
        %p489 = pneg %p134
        %p490 = pneg %p158
        %p491 = pneg %p155
        %p492 = pneg %p179
        %p493 = pneg %p176
        %p494 = pneg %p200
        %p495 = pneg %p197
        %p496 = pneg %p221
        %p497 = pneg %p218
        %p498 = pneg %p242
        %p499 = pneg %p239
        %p500 = pneg %p263
        %p501 = pneg %p260
        %p502 = pneg %p284
        %p503 = pneg %p281
        %p504 = pneg %p305
        %p505 = pneg %p302
        %p506 = pneg %p326
        %p507 = pneg %p323
        %p508 = pneg %p352
        %p509 = pneg %p349
        %s510 = sand.u32 %s339, 1
        %s511 = scalar_lea.sflag [#allocation6], %s510
        %s512 = sand.u32 %s339, 1
        %s513 = smul.addr %s512, 16
        %s514 = scalar_lea.vmem [#allocation10], %s513
        %vm515 = vcmask 261120
        %516 = vst.msk [vmem:[#allocation2] sm:$0xff] %vm515, 0.0
        %517 = vst.msk [vmem:[#allocation2 + $0x8] sm:$0xff] %vm515, 0.0
        %518 = vst.msk [vmem:[#allocation2 + $0x10] sm:$0xff] %vm515, 0.0
        %519 = vst.msk [vmem:[#allocation2 + $0x18] sm:$0xff] %vm515, 0.0
        %520 = vst.msk [vmem:[#allocation3] sm:$0xff] %vm515, 0.0
        %521 = vst.msk [vmem:[#allocation3 + $0x8] sm:$0xff] %vm515, 0.0
        %522 = vst.msk [vmem:[#allocation3 + $0x10] sm:$0xff] %vm515, 0.0
        %523 = vst.msk [vmem:[#allocation3 + $0x18] sm:$0xff] %vm515, 0.0
        %v524 = vld [vmem:[%s462] sm:$0xff]
        %v525 = vld [vmem:[%s462 + $0x8] sm:$0xff]
        %526 = vst.msk [vmem:[#allocation2 + $0x8] sm:$0xff] %vm515, %v524
        %527 = vst.msk [vmem:[#allocation2 + $0x10] sm:$0xff] %vm515, %v525
        %v528 = vld [vmem:[#allocation2 + $0x5] sm:$0xff]
        %v529 = vld [vmem:[#allocation2 + $0xd] sm:$0xff]
        %v530 = vld [vmem:[%s1] sm:$0xff]
        %v531 = vld [vmem:[%s1 + $0x8] sm:$0xff]
        %v532 = vld [vmem:[%s1 + $0x10] sm:$0xff]
        %v533 = vld [vmem:[%s1 + $0x18] sm:$0xff]
        %v534 = vld [vmem:[#allocation2 + $0x6] sm:$0xff]
        %v535 = vld [vmem:[#allocation2 + $0xe] sm:$0xff]
        %s536 = scalar_lea.vmem %s1, 32
        %v537 = vld [vmem:[%s536] sm:$0xff]
        %v538 = vld [vmem:[%s536 + $0x8] sm:$0xff]
        %v539 = vld [vmem:[%s536 + $0x10] sm:$0xff]
        %v540 = vld [vmem:[%s536 + $0x18] sm:$0xff]
        %v542 = vsel %vm515, %v534, 0
        %v545 = vsel %vm515, %v535, 0
        %547 = vmatprep.subr.mxu0 0.0
        %548 = vmatpush1.msra.mxu0 %v537
        %549 = vmatprep.subr.mxu0 0.0
        %550 = vmatpush1.msra.mxu0 %v538
        %551 = vmatprep.subr.mxu0 0.0
        %552 = vmatpush1.msra.mxu0 %v539
        %553 = vmatprep.subr.mxu0 0.0
        %554 = vmatpush1.msra.mxu0 %v540
        %555 = vmatprep.subr.mxu0 0.0
        %556 = vmatpush1.msra.mxu0 0.0
        %557 = vmatprep.subr.mxu0 0.0
        %558 = vmatpush1.msra.mxu0 0.0
        %559 = vmatprep.subr.mxu0 0.0
        %560 = vmatpush1.msra.mxu0 0.0
        %561 = vmatprep.subr.mxu0 0.0
        %562 = vmatpush1.msra.mxu0 0.0
        %563 = vmatprep.subr.mxu0 0.0
        %564 = vmatpush1.msra.mxu0 0.0
        %565 = vmatprep.subr.mxu0 0.0
        %566 = vmatpush1.msra.mxu0 0.0
        %567 = vmatprep.subr.mxu0 0.0
        %568 = vmatpush1.msra.mxu0 0.0
        %569 = vmatprep.subr.mxu0 0.0
        %570 = vmatpush1.msra.mxu0 0.0
        %571 = vmatprep.subr.mxu0 0.0
        %572 = vmatpush1.msra.mxu0 0.0
        %573 = vmatprep.subr.mxu0 0.0
        %574 = vmatpush1.msra.mxu0 0.0
        %575 = vmatprep.subr.mxu0 0.0
        %576 = vmatpush1.msra.mxu0 0.0
        %577 = vmatprep.subr.mxu0 0.0
        %578 = vmatpush1.msra.mxu0 0.0
        %579 = vmatprep.subr.mxu0 0.0
        %580 = vmatpush1.msra.mxu0 0.0
        %581 = vmatprep.subr.mxu0 0.0
        %582 = vmatpush1.msra.mxu0 0.0
        %583 = vmatprep.subr.mxu0 0.0
        %584 = vmatpush1.msra.mxu0 0.0
        %585 = vmatprep.subr.mxu0 0.0
        %586 = vmatpush1.msra.mxu0 0.0
        %587 = vmatprep.subr.mxu0 0.0
        %588 = vmatpush1.msra.mxu0 0.0
        %589 = vmatprep.subr.mxu0 0.0
        %590 = vmatpush1.msra.mxu0 0.0
        %591 = vmatprep.subr.mxu0 0.0
        %592 = vmatpush1.msra.mxu0 0.0
        %593 = vmatprep.subr.mxu0 0.0
        %594 = vmatpush1.msra.mxu0 0.0
        %595 = vmatprep.subr.mxu0 0.0
        %596 = vmatpush1.msra.mxu0 0.0
        %597 = vmatprep.subr.mxu0 0.0
        %598 = vmatpush1.msra.mxu0 0.0
        %599 = vmatprep.subr.mxu0 0.0
        %600 = vmatpush1.msra.mxu0 0.0
        %601 = vmatprep.subr.mxu0 0.0
        %602 = vmatpush1.msra.mxu0 0.0
        %603 = vmatprep.subr.mxu0 0.0
        %604 = vmatpush1.msra.mxu0 0.0
        %605 = vmatprep.subr.mxu0 0.0
        %606 = vmatpush1.msra.mxu0 0.0
        %607 = vmatprep.subr.mxu0 0.0
        %608 = vmatpush1.msra.mxu0 0.0
        %609 = vmatprep.subr.mxu0 0.0
        %610 = vmatpush1.msra.mxu0 0.0
        %611 = vmatprep.mubr.f32.mxu0 0.0
        %612 = vmatmul.mubr.f32.gmra.mrb[0].mxu0 %v542
        %v613 = vpop.f32.mrb[0].mxu0
        %v614 = vadd.f32 0.0, %v613
        %v615 = vpop.f32.mrb[0].mxu0
        %616 = vmatprep.mubr.f32.mxu0 0.0
        %617 = vmatmul.mubr.f32.gmra.mrb[0].mxu0 %v545
        %v618 = vpop.f32.mrb[0].mxu0
        %v619 = vadd.f32 0.0, %v618
        %v620 = vpop.f32.mrb[0].mxu0
        %621 = vdwg.mxu0
        %v623 = vsel %vm515, %v528, 0
        %v626 = vsel %vm515, %v529, 0
        %628 = vmatprep.subr.mxu0 0.0
        %629 = vmatpush1.msra.mxu0 %v530
        %630 = vmatprep.subr.mxu0 0.0
        %631 = vmatpush1.msra.mxu0 %v531
        %632 = vmatprep.subr.mxu0 0.0
        %633 = vmatpush1.msra.mxu0 %v532
        %634 = vmatprep.subr.mxu0 0.0
        %635 = vmatpush1.msra.mxu0 %v533
        %636 = vmatprep.subr.mxu0 0.0
        %637 = vmatpush1.msra.mxu0 0.0
        %638 = vmatprep.subr.mxu0 0.0
        %639 = vmatpush1.msra.mxu0 0.0
        %640 = vmatprep.subr.mxu0 0.0
        %641 = vmatpush1.msra.mxu0 0.0
        %642 = vmatprep.subr.mxu0 0.0
        %643 = vmatpush1.msra.mxu0 0.0
        %644 = vmatprep.subr.mxu0 0.0
        %645 = vmatpush1.msra.mxu0 0.0
        %646 = vmatprep.subr.mxu0 0.0
        %647 = vmatpush1.msra.mxu0 0.0
        %648 = vmatprep.subr.mxu0 0.0
        %649 = vmatpush1.msra.mxu0 0.0
        %650 = vmatprep.subr.mxu0 0.0
        %651 = vmatpush1.msra.mxu0 0.0
        %652 = vmatprep.subr.mxu0 0.0
        %653 = vmatpush1.msra.mxu0 0.0
        %654 = vmatprep.subr.mxu0 0.0
        %655 = vmatpush1.msra.mxu0 0.0
        %656 = vmatprep.subr.mxu0 0.0
        %657 = vmatpush1.msra.mxu0 0.0
        %658 = vmatprep.subr.mxu0 0.0
        %659 = vmatpush1.msra.mxu0 0.0
        %660 = vmatprep.subr.mxu0 0.0
        %661 = vmatpush1.msra.mxu0 0.0
        %662 = vmatprep.subr.mxu0 0.0
        %663 = vmatpush1.msra.mxu0 0.0
        %664 = vmatprep.subr.mxu0 0.0
        %665 = vmatpush1.msra.mxu0 0.0
        %666 = vmatprep.subr.mxu0 0.0
        %667 = vmatpush1.msra.mxu0 0.0
        %668 = vmatprep.subr.mxu0 0.0
        %669 = vmatpush1.msra.mxu0 0.0
        %670 = vmatprep.subr.mxu0 0.0
        %671 = vmatpush1.msra.mxu0 0.0
        %672 = vmatprep.subr.mxu0 0.0
        %673 = vmatpush1.msra.mxu0 0.0
        %674 = vmatprep.subr.mxu0 0.0
        %675 = vmatpush1.msra.mxu0 0.0
        %676 = vmatprep.subr.mxu0 0.0
        %677 = vmatpush1.msra.mxu0 0.0
        %678 = vmatprep.subr.mxu0 0.0
        %679 = vmatpush1.msra.mxu0 0.0
        %680 = vmatprep.subr.mxu0 0.0
        %681 = vmatpush1.msra.mxu0 0.0
        %682 = vmatprep.subr.mxu0 0.0
        %683 = vmatpush1.msra.mxu0 0.0
        %684 = vmatprep.subr.mxu0 0.0
        %685 = vmatpush1.msra.mxu0 0.0
        %686 = vmatprep.subr.mxu0 0.0
        %687 = vmatpush1.msra.mxu0 0.0
        %688 = vmatprep.subr.mxu0 0.0
        %689 = vmatpush1.msra.mxu0 0.0
        %690 = vmatprep.subr.mxu0 0.0
        %691 = vmatpush1.msra.mxu0 0.0
        %692 = vmatprep.mubr.f32.mxu0 0.0
        %693 = vmatmul.mubr.f32.gmra.mrb[0].mxu0 %v623
        %v694 = vpop.f32.mrb[0].mxu0
        %v695 = vadd.f32 %v614, %v694
        %v696 = vpop.f32.mrb[0].mxu0
        %697 = vmatprep.mubr.f32.mxu0 0.0
        %698 = vmatmul.mubr.f32.gmra.mrb[0].mxu0 %v626
        %v699 = vpop.f32.mrb[0].mxu0
        %v700 = vadd.f32 %v619, %v699
        %v701 = vpop.f32.mrb[0].mxu0
        %702 = vdwg.mxu0
        %v703 = vld [vmem:[#allocation2 + $0x7] sm:$0xff]
        %v704 = vld [vmem:[#allocation2 + $0xf] sm:$0xff]
        %s705 = scalar_lea.vmem %s1, 64
        %v706 = vld [vmem:[%s705] sm:$0xff]
        %v707 = vld [vmem:[%s705 + $0x8] sm:$0xff]
        %v708 = vld [vmem:[%s705 + $0x10] sm:$0xff]
        %v709 = vld [vmem:[%s705 + $0x18] sm:$0xff]
        %v711 = vsel %vm515, %v703, 0
        %v714 = vsel %vm515, %v704, 0
        %716 = vmatprep.subr.mxu0 0.0
        %717 = vmatpush1.msra.mxu0 %v706
        %718 = vmatprep.subr.mxu0 0.0
        %719 = vmatpush1.msra.mxu0 %v707
        %720 = vmatprep.subr.mxu0 0.0
        %721 = vmatpush1.msra.mxu0 %v708
        %722 = vmatprep.subr.mxu0 0.0
        %723 = vmatpush1.msra.mxu0 %v709
        %724 = vmatprep.subr.mxu0 0.0
        %725 = vmatpush1.msra.mxu0 0.0
        %726 = vmatprep.subr.mxu0 0.0
        %727 = vmatpush1.msra.mxu0 0.0
        %728 = vmatprep.subr.mxu0 0.0
        %729 = vmatpush1.msra.mxu0 0.0
        %730 = vmatprep.subr.mxu0 0.0
        %731 = vmatpush1.msra.mxu0 0.0
        %732 = vmatprep.subr.mxu0 0.0
        %733 = vmatpush1.msra.mxu0 0.0
        %734 = vmatprep.subr.mxu0 0.0
        %735 = vmatpush1.msra.mxu0 0.0
        %736 = vmatprep.subr.mxu0 0.0
        %737 = vmatpush1.msra.mxu0 0.0
        %738 = vmatprep.subr.mxu0 0.0
        %739 = vmatpush1.msra.mxu0 0.0
        %740 = vmatprep.subr.mxu0 0.0
        %741 = vmatpush1.msra.mxu0 0.0
        %742 = vmatprep.subr.mxu0 0.0
        %743 = vmatpush1.msra.mxu0 0.0
        %744 = vmatprep.subr.mxu0 0.0
        %745 = vmatpush1.msra.mxu0 0.0
        %746 = vmatprep.subr.mxu0 0.0
        %747 = vmatpush1.msra.mxu0 0.0
        %748 = vmatprep.subr.mxu0 0.0
        %749 = vmatpush1.msra.mxu0 0.0
        %750 = vmatprep.subr.mxu0 0.0
        %751 = vmatpush1.msra.mxu0 0.0
        %752 = vmatprep.subr.mxu0 0.0
        %753 = vmatpush1.msra.mxu0 0.0
        %754 = vmatprep.subr.mxu0 0.0
        %755 = vmatpush1.msra.mxu0 0.0
        %756 = vmatprep.subr.mxu0 0.0
        %757 = vmatpush1.msra.mxu0 0.0
        %758 = vmatprep.subr.mxu0 0.0
        %759 = vmatpush1.msra.mxu0 0.0
        %760 = vmatprep.subr.mxu0 0.0
        %761 = vmatpush1.msra.mxu0 0.0
        %762 = vmatprep.subr.mxu0 0.0
        %763 = vmatpush1.msra.mxu0 0.0
        %764 = vmatprep.subr.mxu0 0.0
        %765 = vmatpush1.msra.mxu0 0.0
        %766 = vmatprep.subr.mxu0 0.0
        %767 = vmatpush1.msra.mxu0 0.0
        %768 = vmatprep.subr.mxu0 0.0
        %769 = vmatpush1.msra.mxu0 0.0
        %770 = vmatprep.subr.mxu0 0.0
        %771 = vmatpush1.msra.mxu0 0.0
        %772 = vmatprep.subr.mxu0 0.0
        %773 = vmatpush1.msra.mxu0 0.0
        %774 = vmatprep.subr.mxu0 0.0
        %775 = vmatpush1.msra.mxu0 0.0
        %776 = vmatprep.subr.mxu0 0.0
        %777 = vmatpush1.msra.mxu0 0.0
        %778 = vmatprep.subr.mxu0 0.0
        %779 = vmatpush1.msra.mxu0 0.0
        %780 = vmatprep.mubr.f32.mxu0 0.0
        %781 = vmatmul.mubr.f32.gmra.mrb[0].mxu0 %v711
        %v782 = vpop.f32.mrb[0].mxu0
        %v783 = vadd.f32 0.0, %v782
        %v784 = vpop.f32.mrb[0].mxu0
        %785 = vmatprep.mubr.f32.mxu0 0.0
        %786 = vmatmul.mubr.f32.gmra.mrb[0].mxu0 %v714
        %v787 = vpop.f32.mrb[0].mxu0
        %v788 = vadd.f32 0.0, %v787
        %v789 = vpop.f32.mrb[0].mxu0
        %790 = vdwg.mxu0
        %v791 = vadd.f32 %v695, %v783
        %v792 = vadd.f32 %v700, %v788
        %v793 = vld [vmem:[#allocation2 + $0x8] sm:$0xff]
        %v794 = vld [vmem:[#allocation2 + $0x10] sm:$0xff]
        %s795 = scalar_lea.vmem %s1, 96
        %v796 = vld [vmem:[%s795] sm:$0xff]
        %v797 = vld [vmem:[%s795 + $0x8] sm:$0xff]
        %v798 = vld [vmem:[%s795 + $0x10] sm:$0xff]
        %v799 = vld [vmem:[%s795 + $0x18] sm:$0xff]
        %v801 = vsel %vm515, %v793, 0
        %v804 = vsel %vm515, %v794, 0
        %806 = vmatprep.subr.mxu0 0.0
        %807 = vmatpush1.msra.mxu0 %v796
        %808 = vmatprep.subr.mxu0 0.0
        %809 = vmatpush1.msra.mxu0 %v797
        %810 = vmatprep.subr.mxu0 0.0
        %811 = vmatpush1.msra.mxu0 %v798
        %812 = vmatprep.subr.mxu0 0.0
        %813 = vmatpush1.msra.mxu0 %v799
        %814 = vmatprep.subr.mxu0 0.0
        %815 = vmatpush1.msra.mxu0 0.0
        %816 = vmatprep.subr.mxu0 0.0
        %817 = vmatpush1.msra.mxu0 0.0
        %818 = vmatprep.subr.mxu0 0.0
        %819 = vmatpush1.msra.mxu0 0.0
        %820 = vmatprep.subr.mxu0 0.0
        %821 = vmatpush1.msra.mxu0 0.0
        %822 = vmatprep.subr.mxu0 0.0
        %823 = vmatpush1.msra.mxu0 0.0
        %824 = vmatprep.subr.mxu0 0.0
        %825 = vmatpush1.msra.mxu0 0.0
        %826 = vmatprep.subr.mxu0 0.0
        %827 = vmatpush1.msra.mxu0 0.0
        %828 = vmatprep.subr.mxu0 0.0
        %829 = vmatpush1.msra.mxu0 0.0
        %830 = vmatprep.subr.mxu0 0.0
        %831 = vmatpush1.msra.mxu0 0.0
        %832 = vmatprep.subr.mxu0 0.0
        %833 = vmatpush1.msra.mxu0 0.0
        %834 = vmatprep.subr.mxu0 0.0
        %835 = vmatpush1.msra.mxu0 0.0
        %836 = vmatprep.subr.mxu0 0.0
        %837 = vmatpush1.msra.mxu0 0.0
        %838 = vmatprep.subr.mxu0 0.0
        %839 = vmatpush1.msra.mxu0 0.0
        %840 = vmatprep.subr.mxu0 0.0
        %841 = vmatpush1.msra.mxu0 0.0
        %842 = vmatprep.subr.mxu0 0.0
        %843 = vmatpush1.msra.mxu0 0.0
        %844 = vmatprep.subr.mxu0 0.0
        %845 = vmatpush1.msra.mxu0 0.0
        %846 = vmatprep.subr.mxu0 0.0
        %847 = vmatpush1.msra.mxu0 0.0
        %848 = vmatprep.subr.mxu0 0.0
        %849 = vmatpush1.msra.mxu0 0.0
        %850 = vmatprep.subr.mxu0 0.0
        %851 = vmatpush1.msra.mxu0 0.0
        %852 = vmatprep.subr.mxu0 0.0
        %853 = vmatpush1.msra.mxu0 0.0
        %854 = vmatprep.subr.mxu0 0.0
        %855 = vmatpush1.msra.mxu0 0.0
        %856 = vmatprep.subr.mxu0 0.0
        %857 = vmatpush1.msra.mxu0 0.0
        %858 = vmatprep.subr.mxu0 0.0
        %859 = vmatpush1.msra.mxu0 0.0
        %860 = vmatprep.subr.mxu0 0.0
        %861 = vmatpush1.msra.mxu0 0.0
        %862 = vmatprep.subr.mxu0 0.0
        %863 = vmatpush1.msra.mxu0 0.0
        %864 = vmatprep.subr.mxu0 0.0
        %865 = vmatpush1.msra.mxu0 0.0
        %866 = vmatprep.subr.mxu0 0.0
        %867 = vmatpush1.msra.mxu0 0.0
        %868 = vmatprep.subr.mxu0 0.0
        %869 = vmatpush1.msra.mxu0 0.0
        %870 = vmatprep.mubr.f32.mxu0 0.0
        %871 = vmatmul.mubr.f32.gmra.mrb[0].mxu0 %v801
        %v872 = vpop.f32.mrb[0].mxu0
        %v873 = vadd.f32 0.0, %v872
        %v874 = vpop.f32.mrb[0].mxu0
        %875 = vmatprep.mubr.f32.mxu0 0.0
        %876 = vmatmul.mubr.f32.gmra.mrb[0].mxu0 %v804
        %v877 = vpop.f32.mrb[0].mxu0
        %v878 = vadd.f32 0.0, %v877
        %v879 = vpop.f32.mrb[0].mxu0
        %880 = vdwg.mxu0
        %v881 = vadd.f32 %v791, %v873
        %v882 = vadd.f32 %v792, %v878
        %v883 = vld [vmem:[#allocation2 + $0x9] sm:$0xff]
        %v884 = vld [vmem:[#allocation2 + $0x11] sm:$0xff]
        %s885 = scalar_lea.vmem %s1, 128
        %v886 = vld [vmem:[%s885] sm:$0xff]
        %v887 = vld [vmem:[%s885 + $0x8] sm:$0xff]
        %v888 = vld [vmem:[%s885 + $0x10] sm:$0xff]
        %v889 = vld [vmem:[%s885 + $0x18] sm:$0xff]
        %v891 = vsel %vm515, %v883, 0
        %v894 = vsel %vm515, %v884, 0
        %896 = vmatprep.subr.mxu0 0.0
        %897 = vmatpush1.msra.mxu0 %v886
        %898 = vmatprep.subr.mxu0 0.0
        %899 = vmatpush1.msra.mxu0 %v887
        %900 = vmatprep.subr.mxu0 0.0
        %901 = vmatpush1.msra.mxu0 %v888
        %902 = vmatprep.subr.mxu0 0.0
        %903 = vmatpush1.msra.mxu0 %v889
        %904 = vmatprep.subr.mxu0 0.0
        %905 = vmatpush1.msra.mxu0 0.0
        %906 = vmatprep.subr.mxu0 0.0
        %907 = vmatpush1.msra.mxu0 0.0
        %908 = vmatprep.subr.mxu0 0.0
        %909 = vmatpush1.msra.mxu0 0.0
        %910 = vmatprep.subr.mxu0 0.0
        %911 = vmatpush1.msra.mxu0 0.0
        %912 = vmatprep.subr.mxu0 0.0
        %913 = vmatpush1.msra.mxu0 0.0
        %914 = vmatprep.subr.mxu0 0.0
        %915 = vmatpush1.msra.mxu0 0.0
        %916 = vmatprep.subr.mxu0 0.0
        %917 = vmatpush1.msra.mxu0 0.0
        %918 = vmatprep.subr.mxu0 0.0
        %919 = vmatpush1.msra.mxu0 0.0
        %920 = vmatprep.subr.mxu0 0.0
        %921 = vmatpush1.msra.mxu0 0.0
        %922 = vmatprep.subr.mxu0 0.0
        %923 = vmatpush1.msra.mxu0 0.0
        %924 = vmatprep.subr.mxu0 0.0
        %925 = vmatpush1.msra.mxu0 0.0
        %926 = vmatprep.subr.mxu0 0.0
        %927 = vmatpush1.msra.mxu0 0.0
        %928 = vmatprep.subr.mxu0 0.0
        %929 = vmatpush1.msra.mxu0 0.0
        %930 = vmatprep.subr.mxu0 0.0
        %931 = vmatpush1.msra.mxu0 0.0
        %932 = vmatprep.subr.mxu0 0.0
        %933 = vmatpush1.msra.mxu0 0.0
        %934 = vmatprep.subr.mxu0 0.0
        %935 = vmatpush1.msra.mxu0 0.0
        %936 = vmatprep.subr.mxu0 0.0
        %937 = vmatpush1.msra.mxu0 0.0
        %938 = vmatprep.subr.mxu0 0.0
        %939 = vmatpush1.msra.mxu0 0.0
        %940 = vmatprep.subr.mxu0 0.0
        %941 = vmatpush1.msra.mxu0 0.0
        %942 = vmatprep.subr.mxu0 0.0
        %943 = vmatpush1.msra.mxu0 0.0
        %944 = vmatprep.subr.mxu0 0.0
        %945 = vmatpush1.msra.mxu0 0.0
        %946 = vmatprep.subr.mxu0 0.0
        %947 = vmatpush1.msra.mxu0 0.0
        %948 = vmatprep.subr.mxu0 0.0
        %949 = vmatpush1.msra.mxu0 0.0
        %950 = vmatprep.subr.mxu0 0.0
        %951 = vmatpush1.msra.mxu0 0.0
        %952 = vmatprep.subr.mxu0 0.0
        %953 = vmatpush1.msra.mxu0 0.0
        %954 = vmatprep.subr.mxu0 0.0
        %955 = vmatpush1.msra.mxu0 0.0
        %956 = vmatprep.subr.mxu0 0.0
        %957 = vmatpush1.msra.mxu0 0.0
        %958 = vmatprep.subr.mxu0 0.0
        %959 = vmatpush1.msra.mxu0 0.0
        %960 = vmatprep.mubr.f32.mxu0 0.0
        %961 = vmatmul.mubr.f32.gmra.mrb[0].mxu0 %v891
        %v962 = vpop.f32.mrb[0].mxu0
        %v963 = vadd.f32 0.0, %v962
        %v964 = vpop.f32.mrb[0].mxu0
        %965 = vmatprep.mubr.f32.mxu0 0.0
        %966 = vmatmul.mubr.f32.gmra.mrb[0].mxu0 %v894
        %v967 = vpop.f32.mrb[0].mxu0
        %v968 = vadd.f32 0.0, %v967
        %v969 = vpop.f32.mrb[0].mxu0
        %970 = vdwg.mxu0
        %v971 = vadd.f32 %v881, %v963
        %v972 = vadd.f32 %v882, %v968
        %v973 = vld [vmem:[#allocation2 + $0xa] sm:$0xff]
        %v974 = vld [vmem:[#allocation2 + $0x12] sm:$0xff]
        %s975 = scalar_lea.vmem %s1, 160
        %v976 = vld [vmem:[%s975] sm:$0xff]
        %v977 = vld [vmem:[%s975 + $0x8] sm:$0xff]
        %v978 = vld [vmem:[%s975 + $0x10] sm:$0xff]
        %v979 = vld [vmem:[%s975 + $0x18] sm:$0xff]
        %v981 = vsel %vm515, %v973, 0
        %v984 = vsel %vm515, %v974, 0
        %986 = vmatprep.subr.mxu0 0.0
        %987 = vmatpush1.msra.mxu0 %v976
        %988 = vmatprep.subr.mxu0 0.0
        %989 = vmatpush1.msra.mxu0 %v977
        %990 = vmatprep.subr.mxu0 0.0
        %991 = vmatpush1.msra.mxu0 %v978
        %992 = vmatprep.subr.mxu0 0.0
        %993 = vmatpush1.msra.mxu0 %v979
        %994 = vmatprep.subr.mxu0 0.0
        %995 = vmatpush1.msra.mxu0 0.0
        %996 = vmatprep.subr.mxu0 0.0
        %997 = vmatpush1.msra.mxu0 0.0
        %998 = vmatprep.subr.mxu0 0.0
        %999 = vmatpush1.msra.mxu0 0.0
        %1000 = vmatprep.subr.mxu0 0.0
        %1001 = vmatpush1.msra.mxu0 0.0
        %1002 = vmatprep.subr.mxu0 0.0
        %1003 = vmatpush1.msra.mxu0 0.0
        %1004 = vmatprep.subr.mxu0 0.0
        %1005 = vmatpush1.msra.mxu0 0.0
        %1006 = vmatprep.subr.mxu0 0.0
        %1007 = vmatpush1.msra.mxu0 0.0
        %1008 = vmatprep.subr.mxu0 0.0
        %1009 = vmatpush1.msra.mxu0 0.0
        %1010 = vmatprep.subr.mxu0 0.0
        %1011 = vmatpush1.msra.mxu0 0.0
        %1012 = vmatprep.subr.mxu0 0.0
        %1013 = vmatpush1.msra.mxu0 0.0
        %1014 = vmatprep.subr.mxu0 0.0
        %1015 = vmatpush1.msra.mxu0 0.0
        %1016 = vmatprep.subr.mxu0 0.0
        %1017 = vmatpush1.msra.mxu0 0.0
        %1018 = vmatprep.subr.mxu0 0.0
        %1019 = vmatpush1.msra.mxu0 0.0
        %1020 = vmatprep.subr.mxu0 0.0
        %1021 = vmatpush1.msra.mxu0 0.0
        %1022 = vmatprep.subr.mxu0 0.0
        %1023 = vmatpush1.msra.mxu0 0.0
        %1024 = vmatprep.subr.mxu0 0.0
        %1025 = vmatpush1.msra.mxu0 0.0
        %1026 = vmatprep.subr.mxu0 0.0
        %1027 = vmatpush1.msra.mxu0 0.0
        %1028 = vmatprep.subr.mxu0 0.0
        %1029 = vmatpush1.msra.mxu0 0.0
        %1030 = vmatprep.subr.mxu0 0.0
        %1031 = vmatpush1.msra.mxu0 0.0
        %1032 = vmatprep.subr.mxu0 0.0
        %1033 = vmatpush1.msra.mxu0 0.0
        %1034 = vmatprep.subr.mxu0 0.0
        %1035 = vmatpush1.msra.mxu0 0.0
        %1036 = vmatprep.subr.mxu0 0.0
        %1037 = vmatpush1.msra.mxu0 0.0
        %1038 = vmatprep.subr.mxu0 0.0
        %1039 = vmatpush1.msra.mxu0 0.0
        %1040 = vmatprep.subr.mxu0 0.0
        %1041 = vmatpush1.msra.mxu0 0.0
        %1042 = vmatprep.subr.mxu0 0.0
        %1043 = vmatpush1.msra.mxu0 0.0
        %1044 = vmatprep.subr.mxu0 0.0
        %1045 = vmatpush1.msra.mxu0 0.0
        %1046 = vmatprep.subr.mxu0 0.0
        %1047 = vmatpush1.msra.mxu0 0.0
        %1048 = vmatprep.subr.mxu0 0.0
        %1049 = vmatpush1.msra.mxu0 0.0
        %1050 = vmatprep.mubr.f32.mxu0 0.0
        %1051 = vmatmul.mubr.f32.gmra.mrb[0].mxu0 %v981
        %v1052 = vpop.f32.mrb[0].mxu0
        %v1053 = vadd.f32 0.0, %v1052
        %v1054 = vpop.f32.mrb[0].mxu0
        %1055 = vmatprep.mubr.f32.mxu0 0.0
        %1056 = vmatmul.mubr.f32.gmra.mrb[0].mxu0 %v984
        %v1057 = vpop.f32.mrb[0].mxu0
        %v1058 = vadd.f32 0.0, %v1057
        %v1059 = vpop.f32.mrb[0].mxu0
        %1060 = vdwg.mxu0
        %v1061 = vadd.f32 %v971, %v1053
        %v1062 = vadd.f32 %v972, %v1058
        %v1063 = vld [vmem:[#allocation2 + $0xb] sm:$0xff]
        %v1064 = vld [vmem:[#allocation2 + $0x13] sm:$0xff]
        %s1065 = scalar_lea.vmem %s1, 192
        %v1066 = vld [vmem:[%s1065] sm:$0xff]
        %v1067 = vld [vmem:[%s1065 + $0x8] sm:$0xff]
        %v1068 = vld [vmem:[%s1065 + $0x10] sm:$0xff]
        %v1069 = vld [vmem:[%s1065 + $0x18] sm:$0xff]
        %v1071 = vsel %vm515, %v1063, 0
        %v1074 = vsel %vm515, %v1064, 0
        %1076 = vmatprep.subr.mxu0 0.0
        %1077 = vmatpush1.msra.mxu0 %v1066
        %1078 = vmatprep.subr.mxu0 0.0
        %1079 = vmatpush1.msra.mxu0 %v1067
        %1080 = vmatprep.subr.mxu0 0.0
        %1081 = vmatpush1.msra.mxu0 %v1068
        %1082 = vmatprep.subr.mxu0 0.0
        %1083 = vmatpush1.msra.mxu0 %v1069
        %1084 = vmatprep.subr.mxu0 0.0
        %1085 = vmatpush1.msra.mxu0 0.0
        %1086 = vmatprep.subr.mxu0 0.0
        %1087 = vmatpush1.msra.mxu0 0.0
        %1088 = vmatprep.subr.mxu0 0.0
        %1089 = vmatpush1.msra.mxu0 0.0
        %1090 = vmatprep.subr.mxu0 0.0
        %1091 = vmatpush1.msra.mxu0 0.0
        %1092 = vmatprep.subr.mxu0 0.0
        %1093 = vmatpush1.msra.mxu0 0.0
        %1094 = vmatprep.subr.mxu0 0.0
        %1095 = vmatpush1.msra.mxu0 0.0
        %1096 = vmatprep.subr.mxu0 0.0
        %1097 = vmatpush1.msra.mxu0 0.0
        %1098 = vmatprep.subr.mxu0 0.0
        %1099 = vmatpush1.msra.mxu0 0.0
        %1100 = vmatprep.subr.mxu0 0.0
        %1101 = vmatpush1.msra.mxu0 0.0
        %1102 = vmatprep.subr.mxu0 0.0
        %1103 = vmatpush1.msra.mxu0 0.0
        %1104 = vmatprep.subr.mxu0 0.0
        %1105 = vmatpush1.msra.mxu0 0.0
        %1106 = vmatprep.subr.mxu0 0.0
        %1107 = vmatpush1.msra.mxu0 0.0
        %1108 = vmatprep.subr.mxu0 0.0
        %1109 = vmatpush1.msra.mxu0 0.0
        %1110 = vmatprep.subr.mxu0 0.0
        %1111 = vmatpush1.msra.mxu0 0.0
        %1112 = vmatprep.subr.mxu0 0.0
        %1113 = vmatpush1.msra.mxu0 0.0
        %1114 = vmatprep.subr.mxu0 0.0
        %1115 = vmatpush1.msra.mxu0 0.0
        %1116 = vmatprep.subr.mxu0 0.0
        %1117 = vmatpush1.msra.mxu0 0.0
        %1118 = vmatprep.subr.mxu0 0.0
        %1119 = vmatpush1.msra.mxu0 0.0
        %1120 = vmatprep.subr.mxu0 0.0
        %1121 = vmatpush1.msra.mxu0 0.0
        %1122 = vmatprep.subr.mxu0 0.0
        %1123 = vmatpush1.msra.mxu0 0.0
        %1124 = vmatprep.subr.mxu0 0.0
        %1125 = vmatpush1.msra.mxu0 0.0
        %1126 = vmatprep.subr.mxu0 0.0
        %1127 = vmatpush1.msra.mxu0 0.0
        %1128 = vmatprep.subr.mxu0 0.0
        %1129 = vmatpush1.msra.mxu0 0.0
        %1130 = vmatprep.subr.mxu0 0.0
        %1131 = vmatpush1.msra.mxu0 0.0
        %1132 = vmatprep.subr.mxu0 0.0
        %1133 = vmatpush1.msra.mxu0 0.0
        %1134 = vmatprep.subr.mxu0 0.0
        %1135 = vmatpush1.msra.mxu0 0.0
        %1136 = vmatprep.subr.mxu0 0.0
        %1137 = vmatpush1.msra.mxu0 0.0
        %1138 = vmatprep.subr.mxu0 0.0
        %1139 = vmatpush1.msra.mxu0 0.0
        %1140 = vmatprep.mubr.f32.mxu0 0.0
        %1141 = vmatmul.mubr.f32.gmra.mrb[0].mxu0 %v1071
        %v1142 = vpop.f32.mrb[0].mxu0
        %v1143 = vadd.f32 0.0, %v1142
        %v1144 = vpop.f32.mrb[0].mxu0
        %1145 = vmatprep.mubr.f32.mxu0 0.0
        %1146 = vmatmul.mubr.f32.gmra.mrb[0].mxu0 %v1074
        %v1147 = vpop.f32.mrb[0].mxu0
        %v1148 = vadd.f32 0.0, %v1147
        %v1149 = vpop.f32.mrb[0].mxu0
        %1150 = vdwg.mxu0
        %v1151 = vadd.f32 %v1061, %v1143
        %v1152 = vadd.f32 %v1062, %v1148
        %v1153 = vld [vmem:[%s2] sm:$0x1]
        %v1155 = vlaneseq
        %v1156 = vshrl.u32 %v1155, 7
        %v1157 = vsub.s32 0, %v1156
        %v1158 = vrot.slane %v1153, %v1157
        %v1160 = vmul.f32 %v1151, %v1158
        %v1161 = vmul.f32 %v1152, %v1158
        %v1162 = vld [vmem:[%s3] sm:$0x1]
        %v1164 = vlaneseq
        %v1165 = vshrl.u32 %v1164, 7
        %v1166 = vsub.s32 0, %v1165
        %v1167 = vrot.slane %v1162, %v1166
        %v1169 = vadd.f32 %v1160, %v1167
        %v1170 = vadd.f32 %v1161, %v1167
        %vm1171 = vcmp.gt.f32.partialorder %v1169, 0.0
        %vm1172 = vcmp.gt.f32.partialorder %v1170, 0.0
        %v1173 = vmul.f32 %v1169, 0.2
        %v1174 = vmul.f32 %v1170, 0.2
        %v1175 = vsel %vm1171, %v1169, %v1173
        %v1176 = vsel %vm1172, %v1170, %v1174
        %1177 = vst.msk [vmem:[#allocation3 + $0x8] sm:$0xff] %vm515, %v1175
        %1178 = vst.msk [vmem:[#allocation3 + $0x10] sm:$0xff] %vm515, %v1176
        %v1179 = vld [vmem:[#allocation3 + $0x5] sm:$0xff]
        %v1180 = vld [vmem:[#allocation3 + $0xd] sm:$0xff]
        %v1181 = vld [vmem:[#allocation7] sm:$0xff]
        %v1182 = vld [vmem:[#allocation7 + $0x8] sm:$0xff]
        %v1183 = vld [vmem:[#allocation7 + $0x10] sm:$0xff]
        %v1184 = vld [vmem:[#allocation7 + $0x18] sm:$0xff]
        %v1185 = vld [vmem:[#allocation3 + $0x6] sm:$0xff]
        %v1186 = vld [vmem:[#allocation3 + $0xe] sm:$0xff]
        %s1187 = scalar_lea.vmem [#allocation7], 32
        %v1188 = vld [vmem:[%s1187] sm:$0xff]
        %v1189 = vld [vmem:[%s1187 + $0x8] sm:$0xff]
        %v1190 = vld [vmem:[%s1187 + $0x10] sm:$0xff]
        %v1191 = vld [vmem:[%s1187 + $0x18] sm:$0xff]
        %v1193 = vsel %vm515, %v1185, 0
        %v1196 = vsel %vm515, %v1186, 0
        %1198 = vmatprep.subr.mxu0 0.0
        %1199 = vmatpush1.msra.mxu0 %v1188
        %1200 = vmatprep.subr.mxu0 0.0
        %1201 = vmatpush1.msra.mxu0 %v1189
        %1202 = vmatprep.subr.mxu0 0.0
        %1203 = vmatpush1.msra.mxu0 %v1190
        %1204 = vmatprep.subr.mxu0 0.0
        %1205 = vmatpush1.msra.mxu0 %v1191
        %1206 = vmatprep.subr.mxu0 0.0
        %1207 = vmatpush1.msra.mxu0 0.0
        %1208 = vmatprep.subr.mxu0 0.0
        %1209 = vmatpush1.msra.mxu0 0.0
        %1210 = vmatprep.subr.mxu0 0.0
        %1211 = vmatpush1.msra.mxu0 0.0
        %1212 = vmatprep.subr.mxu0 0.0
        %1213 = vmatpush1.msra.mxu0 0.0
        %1214 = vmatprep.subr.mxu0 0.0
        %1215 = vmatpush1.msra.mxu0 0.0
        %1216 = vmatprep.subr.mxu0 0.0
        %1217 = vmatpush1.msra.mxu0 0.0
        %1218 = vmatprep.subr.mxu0 0.0
        %1219 = vmatpush1.msra.mxu0 0.0
        %1220 = vmatprep.subr.mxu0 0.0
        %1221 = vmatpush1.msra.mxu0 0.0
        %1222 = vmatprep.subr.mxu0 0.0
        %1223 = vmatpush1.msra.mxu0 0.0
        %1224 = vmatprep.subr.mxu0 0.0
        %1225 = vmatpush1.msra.mxu0 0.0
        %1226 = vmatprep.subr.mxu0 0.0
        %1227 = vmatpush1.msra.mxu0 0.0
        %1228 = vmatprep.subr.mxu0 0.0
        %1229 = vmatpush1.msra.mxu0 0.0
        %1230 = vmatprep.subr.mxu0 0.0
        %1231 = vmatpush1.msra.mxu0 0.0
        %1232 = vmatprep.subr.mxu0 0.0
        %1233 = vmatpush1.msra.mxu0 0.0
        %1234 = vmatprep.subr.mxu0 0.0
        %1235 = vmatpush1.msra.mxu0 0.0
        %1236 = vmatprep.subr.mxu0 0.0
        %1237 = vmatpush1.msra.mxu0 0.0
        %1238 = vmatprep.subr.mxu0 0.0
        %1239 = vmatpush1.msra.mxu0 0.0
        %1240 = vmatprep.subr.mxu0 0.0
        %1241 = vmatpush1.msra.mxu0 0.0
        %1242 = vmatprep.subr.mxu0 0.0
        %1243 = vmatpush1.msra.mxu0 0.0
        %1244 = vmatprep.subr.mxu0 0.0
        %1245 = vmatpush1.msra.mxu0 0.0
        %1246 = vmatprep.subr.mxu0 0.0
        %1247 = vmatpush1.msra.mxu0 0.0
        %1248 = vmatprep.subr.mxu0 0.0
        %1249 = vmatpush1.msra.mxu0 0.0
        %1250 = vmatprep.subr.mxu0 0.0
        %1251 = vmatpush1.msra.mxu0 0.0
        %1252 = vmatprep.subr.mxu0 0.0
        %1253 = vmatpush1.msra.mxu0 0.0
        %1254 = vmatprep.subr.mxu0 0.0
        %1255 = vmatpush1.msra.mxu0 0.0
        %1256 = vmatprep.subr.mxu0 0.0
        %1257 = vmatpush1.msra.mxu0 0.0
        %1258 = vmatprep.subr.mxu0 0.0
        %1259 = vmatpush1.msra.mxu0 0.0
        %1260 = vmatprep.subr.mxu0 0.0
        %1261 = vmatpush1.msra.mxu0 0.0
        %1262 = vmatprep.mubr.f32.mxu0 0.0
        %1263 = vmatmul.mubr.f32.gmra.mrb[0].mxu0 %v1193
        %v1264 = vpop.f32.mrb[0].mxu0
        %v1265 = vadd.f32 0.0, %v1264
        %v1266 = vpop.f32.mrb[0].mxu0
        %1267 = vmatprep.mubr.f32.mxu0 0.0
        %1268 = vmatmul.mubr.f32.gmra.mrb[0].mxu0 %v1196
        %v1269 = vpop.f32.mrb[0].mxu0
        %v1270 = vadd.f32 0.0, %v1269
        %v1271 = vpop.f32.mrb[0].mxu0
        %1272 = vdwg.mxu0
        %v1274 = vsel %vm515, %v1179, 0
        %v1277 = vsel %vm515, %v1180, 0
        %1279 = vmatprep.subr.mxu0 0.0
        %1280 = vmatpush1.msra.mxu0 %v1181
        %1281 = vmatprep.subr.mxu0 0.0
        %1282 = vmatpush1.msra.mxu0 %v1182
        %1283 = vmatprep.subr.mxu0 0.0
        %1284 = vmatpush1.msra.mxu0 %v1183
        %1285 = vmatprep.subr.mxu0 0.0
        %1286 = vmatpush1.msra.mxu0 %v1184
        %1287 = vmatprep.subr.mxu0 0.0
        %1288 = vmatpush1.msra.mxu0 0.0
        %1289 = vmatprep.subr.mxu0 0.0
        %1290 = vmatpush1.msra.mxu0 0.0
        %1291 = vmatprep.subr.mxu0 0.0
        %1292 = vmatpush1.msra.mxu0 0.0
        %1293 = vmatprep.subr.mxu0 0.0
        %1294 = vmatpush1.msra.mxu0 0.0
        %1295 = vmatprep.subr.mxu0 0.0
        %1296 = vmatpush1.msra.mxu0 0.0
        %1297 = vmatprep.subr.mxu0 0.0
        %1298 = vmatpush1.msra.mxu0 0.0
        %1299 = vmatprep.subr.mxu0 0.0
        %1300 = vmatpush1.msra.mxu0 0.0
        %1301 = vmatprep.subr.mxu0 0.0
        %1302 = vmatpush1.msra.mxu0 0.0
        %1303 = vmatprep.subr.mxu0 0.0
        %1304 = vmatpush1.msra.mxu0 0.0
        %1305 = vmatprep.subr.mxu0 0.0
        %1306 = vmatpush1.msra.mxu0 0.0
        %1307 = vmatprep.subr.mxu0 0.0
        %1308 = vmatpush1.msra.mxu0 0.0
        %1309 = vmatprep.subr.mxu0 0.0
        %1310 = vmatpush1.msra.mxu0 0.0
        %1311 = vmatprep.subr.mxu0 0.0
        %1312 = vmatpush1.msra.mxu0 0.0
        %1313 = vmatprep.subr.mxu0 0.0
        %1314 = vmatpush1.msra.mxu0 0.0
        %1315 = vmatprep.subr.mxu0 0.0
        %1316 = vmatpush1.msra.mxu0 0.0
        %1317 = vmatprep.subr.mxu0 0.0
        %1318 = vmatpush1.msra.mxu0 0.0
        %1319 = vmatprep.subr.mxu0 0.0
        %1320 = vmatpush1.msra.mxu0 0.0
        %1321 = vmatprep.subr.mxu0 0.0
        %1322 = vmatpush1.msra.mxu0 0.0
        %1323 = vmatprep.subr.mxu0 0.0
        %1324 = vmatpush1.msra.mxu0 0.0
        %1325 = vmatprep.subr.mxu0 0.0
        %1326 = vmatpush1.msra.mxu0 0.0
        %1327 = vmatprep.subr.mxu0 0.0
        %1328 = vmatpush1.msra.mxu0 0.0
        %1329 = vmatprep.subr.mxu0 0.0
        %1330 = vmatpush1.msra.mxu0 0.0
        %1331 = vmatprep.subr.mxu0 0.0
        %1332 = vmatpush1.msra.mxu0 0.0
        %1333 = vmatprep.subr.mxu0 0.0
        %1334 = vmatpush1.msra.mxu0 0.0
        %1335 = vmatprep.subr.mxu0 0.0
        %1336 = vmatpush1.msra.mxu0 0.0
        %1337 = vmatprep.subr.mxu0 0.0
        %1338 = vmatpush1.msra.mxu0 0.0
        %1339 = vmatprep.subr.mxu0 0.0
        %1340 = vmatpush1.msra.mxu0 0.0
        %1341 = vmatprep.subr.mxu0 0.0
        %1342 = vmatpush1.msra.mxu0 0.0
        %1343 = vmatprep.mubr.f32.mxu0 0.0
        %1344 = vmatmul.mubr.f32.gmra.mrb[0].mxu0 %v1274
        %v1345 = vpop.f32.mrb[0].mxu0
        %v1346 = vadd.f32 %v1265, %v1345
        %v1347 = vpop.f32.mrb[0].mxu0
        %1348 = vmatprep.mubr.f32.mxu0 0.0
        %1349 = vmatmul.mubr.f32.gmra.mrb[0].mxu0 %v1277
        %v1350 = vpop.f32.mrb[0].mxu0
        %v1351 = vadd.f32 %v1270, %v1350
        %v1352 = vpop.f32.mrb[0].mxu0
        %1353 = vdwg.mxu0
        %v1354 = vld [vmem:[#allocation3 + $0x7] sm:$0xff]
        %v1355 = vld [vmem:[#allocation3 + $0xf] sm:$0xff]
        %s1356 = scalar_lea.vmem [#allocation7], 64
        %v1357 = vld [vmem:[%s1356] sm:$0xff]
        %v1358 = vld [vmem:[%s1356 + $0x8] sm:$0xff]
        %v1359 = vld [vmem:[%s1356 + $0x10] sm:$0xff]
        %v1360 = vld [vmem:[%s1356 + $0x18] sm:$0xff]
        %v1362 = vsel %vm515, %v1354, 0
        %v1365 = vsel %vm515, %v1355, 0
        %1367 = vmatprep.subr.mxu0 0.0
        %1368 = vmatpush1.msra.mxu0 %v1357
        %1369 = vmatprep.subr.mxu0 0.0
        %1370 = vmatpush1.msra.mxu0 %v1358
        %1371 = vmatprep.subr.mxu0 0.0
        %1372 = vmatpush1.msra.mxu0 %v1359
        %1373 = vmatprep.subr.mxu0 0.0
        %1374 = vmatpush1.msra.mxu0 %v1360
        %1375 = vmatprep.subr.mxu0 0.0
        %1376 = vmatpush1.msra.mxu0 0.0
        %1377 = vmatprep.subr.mxu0 0.0
        %1378 = vmatpush1.msra.mxu0 0.0
        %1379 = vmatprep.subr.mxu0 0.0
        %1380 = vmatpush1.msra.mxu0 0.0
        %1381 = vmatprep.subr.mxu0 0.0
        %1382 = vmatpush1.msra.mxu0 0.0
        %1383 = vmatprep.subr.mxu0 0.0
        %1384 = vmatpush1.msra.mxu0 0.0
        %1385 = vmatprep.subr.mxu0 0.0
        %1386 = vmatpush1.msra.mxu0 0.0
        %1387 = vmatprep.subr.mxu0 0.0
        %1388 = vmatpush1.msra.mxu0 0.0
        %1389 = vmatprep.subr.mxu0 0.0
        %1390 = vmatpush1.msra.mxu0 0.0
        %1391 = vmatprep.subr.mxu0 0.0
        %1392 = vmatpush1.msra.mxu0 0.0
        %1393 = vmatprep.subr.mxu0 0.0
        %1394 = vmatpush1.msra.mxu0 0.0
        %1395 = vmatprep.subr.mxu0 0.0
        %1396 = vmatpush1.msra.mxu0 0.0
        %1397 = vmatprep.subr.mxu0 0.0
        %1398 = vmatpush1.msra.mxu0 0.0
        %1399 = vmatprep.subr.mxu0 0.0
        %1400 = vmatpush1.msra.mxu0 0.0
        %1401 = vmatprep.subr.mxu0 0.0
        %1402 = vmatpush1.msra.mxu0 0.0
        %1403 = vmatprep.subr.mxu0 0.0
        %1404 = vmatpush1.msra.mxu0 0.0
        %1405 = vmatprep.subr.mxu0 0.0
        %1406 = vmatpush1.msra.mxu0 0.0
        %1407 = vmatprep.subr.mxu0 0.0
        %1408 = vmatpush1.msra.mxu0 0.0
        %1409 = vmatprep.subr.mxu0 0.0
        %1410 = vmatpush1.msra.mxu0 0.0
        %1411 = vmatprep.subr.mxu0 0.0
        %1412 = vmatpush1.msra.mxu0 0.0
        %1413 = vmatprep.subr.mxu0 0.0
        %1414 = vmatpush1.msra.mxu0 0.0
        %1415 = vmatprep.subr.mxu0 0.0
        %1416 = vmatpush1.msra.mxu0 0.0
        %1417 = vmatprep.subr.mxu0 0.0
        %1418 = vmatpush1.msra.mxu0 0.0
        %1419 = vmatprep.subr.mxu0 0.0
        %1420 = vmatpush1.msra.mxu0 0.0
        %1421 = vmatprep.subr.mxu0 0.0
        %1422 = vmatpush1.msra.mxu0 0.0
        %1423 = vmatprep.subr.mxu0 0.0
        %1424 = vmatpush1.msra.mxu0 0.0
        %1425 = vmatprep.subr.mxu0 0.0
        %1426 = vmatpush1.msra.mxu0 0.0
        %1427 = vmatprep.subr.mxu0 0.0
        %1428 = vmatpush1.msra.mxu0 0.0
        %1429 = vmatprep.subr.mxu0 0.0
        %1430 = vmatpush1.msra.mxu0 0.0
        %1431 = vmatprep.mubr.f32.mxu0 0.0
        %1432 = vmatmul.mubr.f32.gmra.mrb[0].mxu0 %v1362
        %v1433 = vpop.f32.mrb[0].mxu0
        %v1434 = vadd.f32 0.0, %v1433
        %v1435 = vpop.f32.mrb[0].mxu0
        %1436 = vmatprep.mubr.f32.mxu0 0.0
        %1437 = vmatmul.mubr.f32.gmra.mrb[0].mxu0 %v1365
        %v1438 = vpop.f32.mrb[0].mxu0
        %v1439 = vadd.f32 0.0, %v1438
        %v1440 = vpop.f32.mrb[0].mxu0
        %1441 = vdwg.mxu0
        %v1442 = vadd.f32 %v1346, %v1434
        %v1443 = vadd.f32 %v1351, %v1439
        %v1444 = vld [vmem:[#allocation3 + $0x8] sm:$0xff]
        %v1445 = vld [vmem:[#allocation3 + $0x10] sm:$0xff]
        %s1446 = scalar_lea.vmem [#allocation7], 96
        %v1447 = vld [vmem:[%s1446] sm:$0xff]
        %v1448 = vld [vmem:[%s1446 + $0x8] sm:$0xff]
        %v1449 = vld [vmem:[%s1446 + $0x10] sm:$0xff]
        %v1450 = vld [vmem:[%s1446 + $0x18] sm:$0xff]
        %v1452 = vsel %vm515, %v1444, 0
        %v1455 = vsel %vm515, %v1445, 0
        %1457 = vmatprep.subr.mxu0 0.0
        %1458 = vmatpush1.msra.mxu0 %v1447
        %1459 = vmatprep.subr.mxu0 0.0
        %1460 = vmatpush1.msra.mxu0 %v1448
        %1461 = vmatprep.subr.mxu0 0.0
        %1462 = vmatpush1.msra.mxu0 %v1449
        %1463 = vmatprep.subr.mxu0 0.0
        %1464 = vmatpush1.msra.mxu0 %v1450
        %1465 = vmatprep.subr.mxu0 0.0
        %1466 = vmatpush1.msra.mxu0 0.0
        %1467 = vmatprep.subr.mxu0 0.0
        %1468 = vmatpush1.msra.mxu0 0.0
        %1469 = vmatprep.subr.mxu0 0.0
        %1470 = vmatpush1.msra.mxu0 0.0
        %1471 = vmatprep.subr.mxu0 0.0
        %1472 = vmatpush1.msra.mxu0 0.0
        %1473 = vmatprep.subr.mxu0 0.0
        %1474 = vmatpush1.msra.mxu0 0.0
        %1475 = vmatprep.subr.mxu0 0.0
        %1476 = vmatpush1.msra.mxu0 0.0
        %1477 = vmatprep.subr.mxu0 0.0
        %1478 = vmatpush1.msra.mxu0 0.0
        %1479 = vmatprep.subr.mxu0 0.0
        %1480 = vmatpush1.msra.mxu0 0.0
        %1481 = vmatprep.subr.mxu0 0.0
        %1482 = vmatpush1.msra.mxu0 0.0
        %1483 = vmatprep.subr.mxu0 0.0
        %1484 = vmatpush1.msra.mxu0 0.0
        %1485 = vmatprep.subr.mxu0 0.0
        %1486 = vmatpush1.msra.mxu0 0.0
        %1487 = vmatprep.subr.mxu0 0.0
        %1488 = vmatpush1.msra.mxu0 0.0
        %1489 = vmatprep.subr.mxu0 0.0
        %1490 = vmatpush1.msra.mxu0 0.0
        %1491 = vmatprep.subr.mxu0 0.0
        %1492 = vmatpush1.msra.mxu0 0.0
        %1493 = vmatprep.subr.mxu0 0.0
        %1494 = vmatpush1.msra.mxu0 0.0
        %1495 = vmatprep.subr.mxu0 0.0
        %1496 = vmatpush1.msra.mxu0 0.0
        %1497 = vmatprep.subr.mxu0 0.0
        %1498 = vmatpush1.msra.mxu0 0.0
        %1499 = vmatprep.subr.mxu0 0.0
        %1500 = vmatpush1.msra.mxu0 0.0
        %1501 = vmatprep.subr.mxu0 0.0
        %1502 = vmatpush1.msra.mxu0 0.0
        %1503 = vmatprep.subr.mxu0 0.0
        %1504 = vmatpush1.msra.mxu0 0.0
        %1505 = vmatprep.subr.mxu0 0.0
        %1506 = vmatpush1.msra.mxu0 0.0
        %1507 = vmatprep.subr.mxu0 0.0
        %1508 = vmatpush1.msra.mxu0 0.0
        %1509 = vmatprep.subr.mxu0 0.0
        %1510 = vmatpush1.msra.mxu0 0.0
        %1511 = vmatprep.subr.mxu0 0.0
        %1512 = vmatpush1.msra.mxu0 0.0
        %1513 = vmatprep.subr.mxu0 0.0
        %1514 = vmatpush1.msra.mxu0 0.0
        %1515 = vmatprep.subr.mxu0 0.0
        %1516 = vmatpush1.msra.mxu0 0.0
        %1517 = vmatprep.subr.mxu0 0.0
        %1518 = vmatpush1.msra.mxu0 0.0
        %1519 = vmatprep.subr.mxu0 0.0
        %1520 = vmatpush1.msra.mxu0 0.0
        %1521 = vmatprep.mubr.f32.mxu0 0.0
        %1522 = vmatmul.mubr.f32.gmra.mrb[0].mxu0 %v1452
        %v1523 = vpop.f32.mrb[0].mxu0
        %v1524 = vadd.f32 0.0, %v1523
        %v1525 = vpop.f32.mrb[0].mxu0
        %1526 = vmatprep.mubr.f32.mxu0 0.0
        %1527 = vmatmul.mubr.f32.gmra.mrb[0].mxu0 %v1455
        %v1528 = vpop.f32.mrb[0].mxu0
        %v1529 = vadd.f32 0.0, %v1528
        %v1530 = vpop.f32.mrb[0].mxu0
        %1531 = vdwg.mxu0
        %v1532 = vadd.f32 %v1442, %v1524
        %v1533 = vadd.f32 %v1443, %v1529
        %v1534 = vld [vmem:[#allocation3 + $0x9] sm:$0xff]
        %v1535 = vld [vmem:[#allocation3 + $0x11] sm:$0xff]
        %s1536 = scalar_lea.vmem [#allocation7], 128
        %v1537 = vld [vmem:[%s1536] sm:$0xff]
        %v1538 = vld [vmem:[%s1536 + $0x8] sm:$0xff]
        %v1539 = vld [vmem:[%s1536 + $0x10] sm:$0xff]
        %v1540 = vld [vmem:[%s1536 + $0x18] sm:$0xff]
        %v1542 = vsel %vm515, %v1534, 0
        %v1545 = vsel %vm515, %v1535, 0
        %1547 = vmatprep.subr.mxu0 0.0
        %1548 = vmatpush1.msra.mxu0 %v1537
        %1549 = vmatprep.subr.mxu0 0.0
        %1550 = vmatpush1.msra.mxu0 %v1538
        %1551 = vmatprep.subr.mxu0 0.0
        %1552 = vmatpush1.msra.mxu0 %v1539
        %1553 = vmatprep.subr.mxu0 0.0
        %1554 = vmatpush1.msra.mxu0 %v1540
        %1555 = vmatprep.subr.mxu0 0.0
        %1556 = vmatpush1.msra.mxu0 0.0
        %1557 = vmatprep.subr.mxu0 0.0
        %1558 = vmatpush1.msra.mxu0 0.0
        %1559 = vmatprep.subr.mxu0 0.0
        %1560 = vmatpush1.msra.mxu0 0.0
        %1561 = vmatprep.subr.mxu0 0.0
        %1562 = vmatpush1.msra.mxu0 0.0
        %1563 = vmatprep.subr.mxu0 0.0
        %1564 = vmatpush1.msra.mxu0 0.0
        %1565 = vmatprep.subr.mxu0 0.0
        %1566 = vmatpush1.msra.mxu0 0.0
        %1567 = vmatprep.subr.mxu0 0.0
        %1568 = vmatpush1.msra.mxu0 0.0
        %1569 = vmatprep.subr.mxu0 0.0
        %1570 = vmatpush1.msra.mxu0 0.0
        %1571 = vmatprep.subr.mxu0 0.0
        %1572 = vmatpush1.msra.mxu0 0.0
        %1573 = vmatprep.subr.mxu0 0.0
        %1574 = vmatpush1.msra.mxu0 0.0
        %1575 = vmatprep.subr.mxu0 0.0
        %1576 = vmatpush1.msra.mxu0 0.0
        %1577 = vmatprep.subr.mxu0 0.0
        %1578 = vmatpush1.msra.mxu0 0.0
        %1579 = vmatprep.subr.mxu0 0.0
        %1580 = vmatpush1.msra.mxu0 0.0
        %1581 = vmatprep.subr.mxu0 0.0
        %1582 = vmatpush1.msra.mxu0 0.0
        %1583 = vmatprep.subr.mxu0 0.0
        %1584 = vmatpush1.msra.mxu0 0.0
        %1585 = vmatprep.subr.mxu0 0.0
        %1586 = vmatpush1.msra.mxu0 0.0
        %1587 = vmatprep.subr.mxu0 0.0
        %1588 = vmatpush1.msra.mxu0 0.0
        %1589 = vmatprep.subr.mxu0 0.0
        %1590 = vmatpush1.msra.mxu0 0.0
        %1591 = vmatprep.subr.mxu0 0.0
        %1592 = vmatpush1.msra.mxu0 0.0
        %1593 = vmatprep.subr.mxu0 0.0
        %1594 = vmatpush1.msra.mxu0 0.0
        %1595 = vmatprep.subr.mxu0 0.0
        %1596 = vmatpush1.msra.mxu0 0.0
        %1597 = vmatprep.subr.mxu0 0.0
        %1598 = vmatpush1.msra.mxu0 0.0
        %1599 = vmatprep.subr.mxu0 0.0
        %1600 = vmatpush1.msra.mxu0 0.0
        %1601 = vmatprep.subr.mxu0 0.0
        %1602 = vmatpush1.msra.mxu0 0.0
        %1603 = vmatprep.subr.mxu0 0.0
        %1604 = vmatpush1.msra.mxu0 0.0
        %1605 = vmatprep.subr.mxu0 0.0
        %1606 = vmatpush1.msra.mxu0 0.0
        %1607 = vmatprep.subr.mxu0 0.0
        %1608 = vmatpush1.msra.mxu0 0.0
        %1609 = vmatprep.subr.mxu0 0.0
        %1610 = vmatpush1.msra.mxu0 0.0
        %1611 = vmatprep.mubr.f32.mxu0 0.0
        %1612 = vmatmul.mubr.f32.gmra.mrb[0].mxu0 %v1542
        %v1613 = vpop.f32.mrb[0].mxu0
        %v1614 = vadd.f32 0.0, %v1613
        %v1615 = vpop.f32.mrb[0].mxu0
        %1616 = vmatprep.mubr.f32.mxu0 0.0
        %1617 = vmatmul.mubr.f32.gmra.mrb[0].mxu0 %v1545
        %v1618 = vpop.f32.mrb[0].mxu0
        %v1619 = vadd.f32 0.0, %v1618
        %v1620 = vpop.f32.mrb[0].mxu0
        %1621 = vdwg.mxu0
        %v1622 = vadd.f32 %v1532, %v1614
        %v1623 = vadd.f32 %v1533, %v1619
        %v1624 = vld [vmem:[#allocation3 + $0xa] sm:$0xff]
        %v1625 = vld [vmem:[#allocation3 + $0x12] sm:$0xff]
        %s1626 = scalar_lea.vmem [#allocation7], 160
        %v1627 = vld [vmem:[%s1626] sm:$0xff]
        %v1628 = vld [vmem:[%s1626 + $0x8] sm:$0xff]
        %v1629 = vld [vmem:[%s1626 + $0x10] sm:$0xff]
        %v1630 = vld [vmem:[%s1626 + $0x18] sm:$0xff]
        %v1632 = vsel %vm515, %v1624, 0
        %v1635 = vsel %vm515, %v1625, 0
        %1637 = vmatprep.subr.mxu0 0.0
        %1638 = vmatpush1.msra.mxu0 %v1627
        %1639 = vmatprep.subr.mxu0 0.0
        %1640 = vmatpush1.msra.mxu0 %v1628
        %1641 = vmatprep.subr.mxu0 0.0
        %1642 = vmatpush1.msra.mxu0 %v1629
        %1643 = vmatprep.subr.mxu0 0.0
        %1644 = vmatpush1.msra.mxu0 %v1630
        %1645 = vmatprep.subr.mxu0 0.0
        %1646 = vmatpush1.msra.mxu0 0.0
        %1647 = vmatprep.subr.mxu0 0.0
        %1648 = vmatpush1.msra.mxu0 0.0
        %1649 = vmatprep.subr.mxu0 0.0
        %1650 = vmatpush1.msra.mxu0 0.0
        %1651 = vmatprep.subr.mxu0 0.0
        %1652 = vmatpush1.msra.mxu0 0.0
        %1653 = vmatprep.subr.mxu0 0.0
        %1654 = vmatpush1.msra.mxu0 0.0
        %1655 = vmatprep.subr.mxu0 0.0
        %1656 = vmatpush1.msra.mxu0 0.0
        %1657 = vmatprep.subr.mxu0 0.0
        %1658 = vmatpush1.msra.mxu0 0.0
        %1659 = vmatprep.subr.mxu0 0.0
        %1660 = vmatpush1.msra.mxu0 0.0
        %1661 = vmatprep.subr.mxu0 0.0
        %1662 = vmatpush1.msra.mxu0 0.0
        %1663 = vmatprep.subr.mxu0 0.0
        %1664 = vmatpush1.msra.mxu0 0.0
        %1665 = vmatprep.subr.mxu0 0.0
        %1666 = vmatpush1.msra.mxu0 0.0
        %1667 = vmatprep.subr.mxu0 0.0
        %1668 = vmatpush1.msra.mxu0 0.0
        %1669 = vmatprep.subr.mxu0 0.0
        %1670 = vmatpush1.msra.mxu0 0.0
        %1671 = vmatprep.subr.mxu0 0.0
        %1672 = vmatpush1.msra.mxu0 0.0
        %1673 = vmatprep.subr.mxu0 0.0
        %1674 = vmatpush1.msra.mxu0 0.0
        %1675 = vmatprep.subr.mxu0 0.0
        %1676 = vmatpush1.msra.mxu0 0.0
        %1677 = vmatprep.subr.mxu0 0.0
        %1678 = vmatpush1.msra.mxu0 0.0
        %1679 = vmatprep.subr.mxu0 0.0
        %1680 = vmatpush1.msra.mxu0 0.0
        %1681 = vmatprep.subr.mxu0 0.0
        %1682 = vmatpush1.msra.mxu0 0.0
        %1683 = vmatprep.subr.mxu0 0.0
        %1684 = vmatpush1.msra.mxu0 0.0
        %1685 = vmatprep.subr.mxu0 0.0
        %1686 = vmatpush1.msra.mxu0 0.0
        %1687 = vmatprep.subr.mxu0 0.0
        %1688 = vmatpush1.msra.mxu0 0.0
        %1689 = vmatprep.subr.mxu0 0.0
        %1690 = vmatpush1.msra.mxu0 0.0
        %1691 = vmatprep.subr.mxu0 0.0
        %1692 = vmatpush1.msra.mxu0 0.0
        %1693 = vmatprep.subr.mxu0 0.0
        %1694 = vmatpush1.msra.mxu0 0.0
        %1695 = vmatprep.subr.mxu0 0.0
        %1696 = vmatpush1.msra.mxu0 0.0
        %1697 = vmatprep.subr.mxu0 0.0
        %1698 = vmatpush1.msra.mxu0 0.0
        %1699 = vmatprep.subr.mxu0 0.0
        %1700 = vmatpush1.msra.mxu0 0.0
        %1701 = vmatprep.mubr.f32.mxu0 0.0
        %1702 = vmatmul.mubr.f32.gmra.mrb[0].mxu0 %v1632
        %v1703 = vpop.f32.mrb[0].mxu0
        %v1704 = vadd.f32 0.0, %v1703
        %v1705 = vpop.f32.mrb[0].mxu0
        %1706 = vmatprep.mubr.f32.mxu0 0.0
        %1707 = vmatmul.mubr.f32.gmra.mrb[0].mxu0 %v1635
        %v1708 = vpop.f32.mrb[0].mxu0
        %v1709 = vadd.f32 0.0, %v1708
        %v1710 = vpop.f32.mrb[0].mxu0
        %1711 = vdwg.mxu0
        %v1712 = vadd.f32 %v1622, %v1704
        %v1713 = vadd.f32 %v1623, %v1709
        %v1714 = vld [vmem:[#allocation3 + $0xb] sm:$0xff]
        %v1715 = vld [vmem:[#allocation3 + $0x13] sm:$0xff]
        %s1716 = scalar_lea.vmem [#allocation7], 192
        %v1717 = vld [vmem:[%s1716] sm:$0xff]
        %v1718 = vld [vmem:[%s1716 + $0x8] sm:$0xff]
        %v1719 = vld [vmem:[%s1716 + $0x10] sm:$0xff]
        %v1720 = vld [vmem:[%s1716 + $0x18] sm:$0xff]
        %v1722 = vsel %vm515, %v1714, 0
        %v1725 = vsel %vm515, %v1715, 0
        %1727 = vmatprep.subr.mxu0 0.0
        %1728 = vmatpush1.msra.mxu0 %v1717
        %1729 = vmatprep.subr.mxu0 0.0
        %1730 = vmatpush1.msra.mxu0 %v1718
        %1731 = vmatprep.subr.mxu0 0.0
        %1732 = vmatpush1.msra.mxu0 %v1719
        %1733 = vmatprep.subr.mxu0 0.0
        %1734 = vmatpush1.msra.mxu0 %v1720
        %1735 = vmatprep.subr.mxu0 0.0
        %1736 = vmatpush1.msra.mxu0 0.0
        %1737 = vmatprep.subr.mxu0 0.0
        %1738 = vmatpush1.msra.mxu0 0.0
        %1739 = vmatprep.subr.mxu0 0.0
        %1740 = vmatpush1.msra.mxu0 0.0
        %1741 = vmatprep.subr.mxu0 0.0
        %1742 = vmatpush1.msra.mxu0 0.0
        %1743 = vmatprep.subr.mxu0 0.0
        %1744 = vmatpush1.msra.mxu0 0.0
        %1745 = vmatprep.subr.mxu0 0.0
        %1746 = vmatpush1.msra.mxu0 0.0
        %1747 = vmatprep.subr.mxu0 0.0
        %1748 = vmatpush1.msra.mxu0 0.0
        %1749 = vmatprep.subr.mxu0 0.0
        %1750 = vmatpush1.msra.mxu0 0.0
        %1751 = vmatprep.subr.mxu0 0.0
        %1752 = vmatpush1.msra.mxu0 0.0
        %1753 = vmatprep.subr.mxu0 0.0
        %1754 = vmatpush1.msra.mxu0 0.0
        %1755 = vmatprep.subr.mxu0 0.0
        %1756 = vmatpush1.msra.mxu0 0.0
        %1757 = vmatprep.subr.mxu0 0.0
        %1758 = vmatpush1.msra.mxu0 0.0
        %1759 = vmatprep.subr.mxu0 0.0
        %1760 = vmatpush1.msra.mxu0 0.0
        %1761 = vmatprep.subr.mxu0 0.0
        %1762 = vmatpush1.msra.mxu0 0.0
        %1763 = vmatprep.subr.mxu0 0.0
        %1764 = vmatpush1.msra.mxu0 0.0
        %1765 = vmatprep.subr.mxu0 0.0
        %1766 = vmatpush1.msra.mxu0 0.0
        %1767 = vmatprep.subr.mxu0 0.0
        %1768 = vmatpush1.msra.mxu0 0.0
        %1769 = vmatprep.subr.mxu0 0.0
        %1770 = vmatpush1.msra.mxu0 0.0
        %1771 = vmatprep.subr.mxu0 0.0
        %1772 = vmatpush1.msra.mxu0 0.0
        %1773 = vmatprep.subr.mxu0 0.0
        %1774 = vmatpush1.msra.mxu0 0.0
        %1775 = vmatprep.subr.mxu0 0.0
        %1776 = vmatpush1.msra.mxu0 0.0
        %1777 = vmatprep.subr.mxu0 0.0
        %1778 = vmatpush1.msra.mxu0 0.0
        %1779 = vmatprep.subr.mxu0 0.0
        %1780 = vmatpush1.msra.mxu0 0.0
        %1781 = vmatprep.subr.mxu0 0.0
        %1782 = vmatpush1.msra.mxu0 0.0
        %1783 = vmatprep.subr.mxu0 0.0
        %1784 = vmatpush1.msra.mxu0 0.0
        %1785 = vmatprep.subr.mxu0 0.0
        %1786 = vmatpush1.msra.mxu0 0.0
        %1787 = vmatprep.subr.mxu0 0.0
        %1788 = vmatpush1.msra.mxu0 0.0
        %1789 = vmatprep.subr.mxu0 0.0
        %1790 = vmatpush1.msra.mxu0 0.0
        %1791 = vmatprep.mubr.f32.mxu0 0.0
        %1792 = vmatmul.mubr.f32.gmra.mrb[0].mxu0 %v1722
        %v1793 = vpop.f32.mrb[0].mxu0
        %v1794 = vadd.f32 0.0, %v1793
        %v1795 = vpop.f32.mrb[0].mxu0
        %1796 = vmatprep.mubr.f32.mxu0 0.0
        %1797 = vmatmul.mubr.f32.gmra.mrb[0].mxu0 %v1725
        %v1798 = vpop.f32.mrb[0].mxu0
        %v1799 = vadd.f32 0.0, %v1798
        %v1800 = vpop.f32.mrb[0].mxu0
        %1801 = vdwg.mxu0
        %v1802 = vadd.f32 %v1712, %v1794
        %v1803 = vadd.f32 %v1713, %v1799
        %v1804 = vld [vmem:[%s5] sm:$0x1]
        %v1806 = vlaneseq
        %v1807 = vshrl.u32 %v1806, 7
        %v1808 = vsub.s32 0, %v1807
        %v1809 = vrot.slane %v1804, %v1808
        %v1811 = vmul.f32 %v1802, %v1809
        %v1812 = vmul.f32 %v1803, %v1809
        %v1813 = vld [vmem:[%s6] sm:$0x1]
        %v1815 = vlaneseq
        %v1816 = vshrl.u32 %v1815, 7
        %v1817 = vsub.s32 0, %v1816
        %v1818 = vrot.slane %v1813, %v1817
        %v1820 = vadd.f32 %v1811, %v1818
        %v1821 = vadd.f32 %v1812, %v1818
        %vm1822 = vcmp.gt.f32.partialorder %v1820, 0.0
        %vm1823 = vcmp.gt.f32.partialorder %v1821, 0.0
        %v1824 = vmul.f32 %v1820, 0.2
        %v1825 = vmul.f32 %v1821, 0.2
        %v1826 = vsel %vm1822, %v1820, %v1824
        %v1827 = vsel %vm1823, %v1821, %v1825
        %1828 = vst.msk [vmem:[#allocation2 + $0x8] sm:$0xff] %vm515, %v1826
        %1829 = vst.msk [vmem:[#allocation2 + $0x10] sm:$0xff] %vm515, %v1827
        %v1830 = vld [vmem:[#allocation2 + $0x5] sm:$0xff]
        %v1831 = vld [vmem:[#allocation2 + $0xd] sm:$0xff]
        %v1832 = vld [vmem:[%s7] sm:$0xff]
        %v1833 = vld [vmem:[%s7 + $0x8] sm:$0xff]
        %v1834 = vld [vmem:[%s7 + $0x10] sm:$0xff]
        %v1835 = vld [vmem:[%s7 + $0x18] sm:$0xff]
        %v1836 = vld [vmem:[#allocation2 + $0x6] sm:$0xff]
        %v1837 = vld [vmem:[#allocation2 + $0xe] sm:$0xff]
        %s1838 = scalar_lea.vmem %s7, 32
        %v1839 = vld [vmem:[%s1838] sm:$0xff]
        %v1840 = vld [vmem:[%s1838 + $0x8] sm:$0xff]
        %v1841 = vld [vmem:[%s1838 + $0x10] sm:$0xff]
        %v1842 = vld [vmem:[%s1838 + $0x18] sm:$0xff]
        %v1844 = vsel %vm515, %v1836, 0
        %v1847 = vsel %vm515, %v1837, 0
        %1849 = vmatprep.subr.mxu0 0.0
        %1850 = vmatpush1.msra.mxu0 %v1839
        %1851 = vmatprep.subr.mxu0 0.0
        %1852 = vmatpush1.msra.mxu0 %v1840
        %1853 = vmatprep.subr.mxu0 0.0
        %1854 = vmatpush1.msra.mxu0 %v1841
        %1855 = vmatprep.subr.mxu0 0.0
        %1856 = vmatpush1.msra.mxu0 %v1842
        %1857 = vmatprep.subr.mxu0 0.0
        %1858 = vmatpush1.msra.mxu0 0.0
        %1859 = vmatprep.subr.mxu0 0.0
        %1860 = vmatpush1.msra.mxu0 0.0
        %1861 = vmatprep.subr.mxu0 0.0
        %1862 = vmatpush1.msra.mxu0 0.0
        %1863 = vmatprep.subr.mxu0 0.0
        %1864 = vmatpush1.msra.mxu0 0.0
        %1865 = vmatprep.subr.mxu0 0.0
        %1866 = vmatpush1.msra.mxu0 0.0
        %1867 = vmatprep.subr.mxu0 0.0
        %1868 = vmatpush1.msra.mxu0 0.0
        %1869 = vmatprep.subr.mxu0 0.0
        %1870 = vmatpush1.msra.mxu0 0.0
        %1871 = vmatprep.subr.mxu0 0.0
        %1872 = vmatpush1.msra.mxu0 0.0
        %1873 = vmatprep.subr.mxu0 0.0
        %1874 = vmatpush1.msra.mxu0 0.0
        %1875 = vmatprep.subr.mxu0 0.0
        %1876 = vmatpush1.msra.mxu0 0.0
        %1877 = vmatprep.subr.mxu0 0.0
        %1878 = vmatpush1.msra.mxu0 0.0
        %1879 = vmatprep.subr.mxu0 0.0
        %1880 = vmatpush1.msra.mxu0 0.0
        %1881 = vmatprep.subr.mxu0 0.0
        %1882 = vmatpush1.msra.mxu0 0.0
        %1883 = vmatprep.subr.mxu0 0.0
        %1884 = vmatpush1.msra.mxu0 0.0
        %1885 = vmatprep.subr.mxu0 0.0
        %1886 = vmatpush1.msra.mxu0 0.0
        %1887 = vmatprep.subr.mxu0 0.0
        %1888 = vmatpush1.msra.mxu0 0.0
        %1889 = vmatprep.subr.mxu0 0.0
        %1890 = vmatpush1.msra.mxu0 0.0
        %1891 = vmatprep.subr.mxu0 0.0
        %1892 = vmatpush1.msra.mxu0 0.0
        %1893 = vmatprep.subr.mxu0 0.0
        %1894 = vmatpush1.msra.mxu0 0.0
        %1895 = vmatprep.subr.mxu0 0.0
        %1896 = vmatpush1.msra.mxu0 0.0
        %1897 = vmatprep.subr.mxu0 0.0
        %1898 = vmatpush1.msra.mxu0 0.0
        %1899 = vmatprep.subr.mxu0 0.0
        %1900 = vmatpush1.msra.mxu0 0.0
        %1901 = vmatprep.subr.mxu0 0.0
        %1902 = vmatpush1.msra.mxu0 0.0
        %1903 = vmatprep.subr.mxu0 0.0
        %1904 = vmatpush1.msra.mxu0 0.0
        %1905 = vmatprep.subr.mxu0 0.0
        %1906 = vmatpush1.msra.mxu0 0.0
        %1907 = vmatprep.subr.mxu0 0.0
        %1908 = vmatpush1.msra.mxu0 0.0
        %1909 = vmatprep.subr.mxu0 0.0
        %1910 = vmatpush1.msra.mxu0 0.0
        %1911 = vmatprep.subr.mxu0 0.0
        %1912 = vmatpush1.msra.mxu0 0.0
        %1913 = vmatprep.mubr.f32.mxu0 0.0
        %1914 = vmatmul.mubr.f32.gmra.mrb[0].mxu0 %v1844
        %v1915 = vpop.f32.mrb[0].mxu0
        %v1916 = vadd.f32 0.0, %v1915
        %v1917 = vpop.f32.mrb[0].mxu0
        %1918 = vmatprep.mubr.f32.mxu0 0.0
        %1919 = vmatmul.mubr.f32.gmra.mrb[0].mxu0 %v1847
        %v1920 = vpop.f32.mrb[0].mxu0
        %v1921 = vadd.f32 0.0, %v1920
        %v1922 = vpop.f32.mrb[0].mxu0
        %1923 = vdwg.mxu0
        %v1925 = vsel %vm515, %v1830, 0
        %v1928 = vsel %vm515, %v1831, 0
        %1930 = vmatprep.subr.mxu0 0.0
        %1931 = vmatpush1.msra.mxu0 %v1832
        %1932 = vmatprep.subr.mxu0 0.0
        %1933 = vmatpush1.msra.mxu0 %v1833
        %1934 = vmatprep.subr.mxu0 0.0
        %1935 = vmatpush1.msra.mxu0 %v1834
        %1936 = vmatprep.subr.mxu0 0.0
        %1937 = vmatpush1.msra.mxu0 %v1835
        %1938 = vmatprep.subr.mxu0 0.0
        %1939 = vmatpush1.msra.mxu0 0.0
        %1940 = vmatprep.subr.mxu0 0.0
        %1941 = vmatpush1.msra.mxu0 0.0
        %1942 = vmatprep.subr.mxu0 0.0
        %1943 = vmatpush1.msra.mxu0 0.0
        %1944 = vmatprep.subr.mxu0 0.0
        %1945 = vmatpush1.msra.mxu0 0.0
        %1946 = vmatprep.subr.mxu0 0.0
        %1947 = vmatpush1.msra.mxu0 0.0
        %1948 = vmatprep.subr.mxu0 0.0
        %1949 = vmatpush1.msra.mxu0 0.0
        %1950 = vmatprep.subr.mxu0 0.0
        %1951 = vmatpush1.msra.mxu0 0.0
        %1952 = vmatprep.subr.mxu0 0.0
        %1953 = vmatpush1.msra.mxu0 0.0
        %1954 = vmatprep.subr.mxu0 0.0
        %1955 = vmatpush1.msra.mxu0 0.0
        %1956 = vmatprep.subr.mxu0 0.0
        %1957 = vmatpush1.msra.mxu0 0.0
        %1958 = vmatprep.subr.mxu0 0.0
        %1959 = vmatpush1.msra.mxu0 0.0
        %1960 = vmatprep.subr.mxu0 0.0
        %1961 = vmatpush1.msra.mxu0 0.0
        %1962 = vmatprep.subr.mxu0 0.0
        %1963 = vmatpush1.msra.mxu0 0.0
        %1964 = vmatprep.subr.mxu0 0.0
        %1965 = vmatpush1.msra.mxu0 0.0
        %1966 = vmatprep.subr.mxu0 0.0
        %1967 = vmatpush1.msra.mxu0 0.0
        %1968 = vmatprep.subr.mxu0 0.0
        %1969 = vmatpush1.msra.mxu0 0.0
        %1970 = vmatprep.subr.mxu0 0.0
        %1971 = vmatpush1.msra.mxu0 0.0
        %1972 = vmatprep.subr.mxu0 0.0
        %1973 = vmatpush1.msra.mxu0 0.0
        %1974 = vmatprep.subr.mxu0 0.0
        %1975 = vmatpush1.msra.mxu0 0.0
        %1976 = vmatprep.subr.mxu0 0.0
        %1977 = vmatpush1.msra.mxu0 0.0
        %1978 = vmatprep.subr.mxu0 0.0
        %1979 = vmatpush1.msra.mxu0 0.0
        %1980 = vmatprep.subr.mxu0 0.0
        %1981 = vmatpush1.msra.mxu0 0.0
        %1982 = vmatprep.subr.mxu0 0.0
        %1983 = vmatpush1.msra.mxu0 0.0
        %1984 = vmatprep.subr.mxu0 0.0
        %1985 = vmatpush1.msra.mxu0 0.0
        %1986 = vmatprep.subr.mxu0 0.0
        %1987 = vmatpush1.msra.mxu0 0.0
        %1988 = vmatprep.subr.mxu0 0.0
        %1989 = vmatpush1.msra.mxu0 0.0
        %1990 = vmatprep.subr.mxu0 0.0
        %1991 = vmatpush1.msra.mxu0 0.0
        %1992 = vmatprep.subr.mxu0 0.0
        %1993 = vmatpush1.msra.mxu0 0.0
        %1994 = vmatprep.mubr.f32.mxu0 0.0
        %1995 = vmatmul.mubr.f32.gmra.mrb[0].mxu0 %v1925
        %v1996 = vpop.f32.mrb[0].mxu0
        %v1997 = vadd.f32 %v1916, %v1996
        %v1998 = vpop.f32.mrb[0].mxu0
        %1999 = vmatprep.mubr.f32.mxu0 0.0
        %2000 = vmatmul.mubr.f32.gmra.mrb[0].mxu0 %v1928
        %v2001 = vpop.f32.mrb[0].mxu0
        %v2002 = vadd.f32 %v1921, %v2001
        %v2003 = vpop.f32.mrb[0].mxu0
        %2004 = vdwg.mxu0
        %v2005 = vld [vmem:[#allocation2 + $0x7] sm:$0xff]
        %v2006 = vld [vmem:[#allocation2 + $0xf] sm:$0xff]
        %s2007 = scalar_lea.vmem %s7, 64
        %v2008 = vld [vmem:[%s2007] sm:$0xff]
        %v2009 = vld [vmem:[%s2007 + $0x8] sm:$0xff]
        %v2010 = vld [vmem:[%s2007 + $0x10] sm:$0xff]
        %v2011 = vld [vmem:[%s2007 + $0x18] sm:$0xff]
        %v2013 = vsel %vm515, %v2005, 0
        %v2016 = vsel %vm515, %v2006, 0
        %2018 = vmatprep.subr.mxu0 0.0
        %2019 = vmatpush1.msra.mxu0 %v2008
        %2020 = vmatprep.subr.mxu0 0.0
        %2021 = vmatpush1.msra.mxu0 %v2009
        %2022 = vmatprep.subr.mxu0 0.0
        %2023 = vmatpush1.msra.mxu0 %v2010
        %2024 = vmatprep.subr.mxu0 0.0
        %2025 = vmatpush1.msra.mxu0 %v2011
        %2026 = vmatprep.subr.mxu0 0.0
        %2027 = vmatpush1.msra.mxu0 0.0
        %2028 = vmatprep.subr.mxu0 0.0
        %2029 = vmatpush1.msra.mxu0 0.0
        %2030 = vmatprep.subr.mxu0 0.0
        %2031 = vmatpush1.msra.mxu0 0.0
        %2032 = vmatprep.subr.mxu0 0.0
        %2033 = vmatpush1.msra.mxu0 0.0
        %2034 = vmatprep.subr.mxu0 0.0
        %2035 = vmatpush1.msra.mxu0 0.0
        %2036 = vmatprep.subr.mxu0 0.0
        %2037 = vmatpush1.msra.mxu0 0.0
        %2038 = vmatprep.subr.mxu0 0.0
        %2039 = vmatpush1.msra.mxu0 0.0
        %2040 = vmatprep.subr.mxu0 0.0
        %2041 = vmatpush1.msra.mxu0 0.0
        %2042 = vmatprep.subr.mxu0 0.0
        %2043 = vmatpush1.msra.mxu0 0.0
        %2044 = vmatprep.subr.mxu0 0.0
        %2045 = vmatpush1.msra.mxu0 0.0
        %2046 = vmatprep.subr.mxu0 0.0
        %2047 = vmatpush1.msra.mxu0 0.0
        %2048 = vmatprep.subr.mxu0 0.0
        %2049 = vmatpush1.msra.mxu0 0.0
        %2050 = vmatprep.subr.mxu0 0.0
        %2051 = vmatpush1.msra.mxu0 0.0
        %2052 = vmatprep.subr.mxu0 0.0
        %2053 = vmatpush1.msra.mxu0 0.0
        %2054 = vmatprep.subr.mxu0 0.0
        %2055 = vmatpush1.msra.mxu0 0.0
        %2056 = vmatprep.subr.mxu0 0.0
        %2057 = vmatpush1.msra.mxu0 0.0
        %2058 = vmatprep.subr.mxu0 0.0
        %2059 = vmatpush1.msra.mxu0 0.0
        %2060 = vmatprep.subr.mxu0 0.0
        %2061 = vmatpush1.msra.mxu0 0.0
        %2062 = vmatprep.subr.mxu0 0.0
        %2063 = vmatpush1.msra.mxu0 0.0
        %2064 = vmatprep.subr.mxu0 0.0
        %2065 = vmatpush1.msra.mxu0 0.0
        %2066 = vmatprep.subr.mxu0 0.0
        %2067 = vmatpush1.msra.mxu0 0.0
        %2068 = vmatprep.subr.mxu0 0.0
        %2069 = vmatpush1.msra.mxu0 0.0
        %2070 = vmatprep.subr.mxu0 0.0
        %2071 = vmatpush1.msra.mxu0 0.0
        %2072 = vmatprep.subr.mxu0 0.0
        %2073 = vmatpush1.msra.mxu0 0.0
        %2074 = vmatprep.subr.mxu0 0.0
        %2075 = vmatpush1.msra.mxu0 0.0
        %2076 = vmatprep.subr.mxu0 0.0
        %2077 = vmatpush1.msra.mxu0 0.0
        %2078 = vmatprep.subr.mxu0 0.0
        %2079 = vmatpush1.msra.mxu0 0.0
        %2080 = vmatprep.subr.mxu0 0.0
        %2081 = vmatpush1.msra.mxu0 0.0
        %2082 = vmatprep.mubr.f32.mxu0 0.0
        %2083 = vmatmul.mubr.f32.gmra.mrb[0].mxu0 %v2013
        %v2084 = vpop.f32.mrb[0].mxu0
        %v2085 = vadd.f32 0.0, %v2084
        %v2086 = vpop.f32.mrb[0].mxu0
        %2087 = vmatprep.mubr.f32.mxu0 0.0
        %2088 = vmatmul.mubr.f32.gmra.mrb[0].mxu0 %v2016
        %v2089 = vpop.f32.mrb[0].mxu0
        %v2090 = vadd.f32 0.0, %v2089
        %v2091 = vpop.f32.mrb[0].mxu0
        %2092 = vdwg.mxu0
        %v2093 = vadd.f32 %v1997, %v2085
        %v2094 = vadd.f32 %v2002, %v2090
        %v2095 = vld [vmem:[#allocation2 + $0x8] sm:$0xff]
        %v2096 = vld [vmem:[#allocation2 + $0x10] sm:$0xff]
        %s2097 = scalar_lea.vmem %s7, 96
        %v2098 = vld [vmem:[%s2097] sm:$0xff]
        %v2099 = vld [vmem:[%s2097 + $0x8] sm:$0xff]
        %v2100 = vld [vmem:[%s2097 + $0x10] sm:$0xff]
        %v2101 = vld [vmem:[%s2097 + $0x18] sm:$0xff]
        %v2103 = vsel %vm515, %v2095, 0
        %v2106 = vsel %vm515, %v2096, 0
        %2108 = vmatprep.subr.mxu0 0.0
        %2109 = vmatpush1.msra.mxu0 %v2098
        %2110 = vmatprep.subr.mxu0 0.0
        %2111 = vmatpush1.msra.mxu0 %v2099
        %2112 = vmatprep.subr.mxu0 0.0
        %2113 = vmatpush1.msra.mxu0 %v2100
        %2114 = vmatprep.subr.mxu0 0.0
        %2115 = vmatpush1.msra.mxu0 %v2101
        %2116 = vmatprep.subr.mxu0 0.0
        %2117 = vmatpush1.msra.mxu0 0.0
        %2118 = vmatprep.subr.mxu0 0.0
        %2119 = vmatpush1.msra.mxu0 0.0
        %2120 = vmatprep.subr.mxu0 0.0
        %2121 = vmatpush1.msra.mxu0 0.0
        %2122 = vmatprep.subr.mxu0 0.0
        %2123 = vmatpush1.msra.mxu0 0.0
        %2124 = vmatprep.subr.mxu0 0.0
        %2125 = vmatpush1.msra.mxu0 0.0
        %2126 = vmatprep.subr.mxu0 0.0
        %2127 = vmatpush1.msra.mxu0 0.0
        %2128 = vmatprep.subr.mxu0 0.0
        %2129 = vmatpush1.msra.mxu0 0.0
        %2130 = vmatprep.subr.mxu0 0.0
        %2131 = vmatpush1.msra.mxu0 0.0
        %2132 = vmatprep.subr.mxu0 0.0
        %2133 = vmatpush1.msra.mxu0 0.0
        %2134 = vmatprep.subr.mxu0 0.0
        %2135 = vmatpush1.msra.mxu0 0.0
        %2136 = vmatprep.subr.mxu0 0.0
        %2137 = vmatpush1.msra.mxu0 0.0
        %2138 = vmatprep.subr.mxu0 0.0
        %2139 = vmatpush1.msra.mxu0 0.0
        %2140 = vmatprep.subr.mxu0 0.0
        %2141 = vmatpush1.msra.mxu0 0.0
        %2142 = vmatprep.subr.mxu0 0.0
        %2143 = vmatpush1.msra.mxu0 0.0
        %2144 = vmatprep.subr.mxu0 0.0
        %2145 = vmatpush1.msra.mxu0 0.0
        %2146 = vmatprep.subr.mxu0 0.0
        %2147 = vmatpush1.msra.mxu0 0.0
        %2148 = vmatprep.subr.mxu0 0.0
        %2149 = vmatpush1.msra.mxu0 0.0
        %2150 = vmatprep.subr.mxu0 0.0
        %2151 = vmatpush1.msra.mxu0 0.0
        %2152 = vmatprep.subr.mxu0 0.0
        %2153 = vmatpush1.msra.mxu0 0.0
        %2154 = vmatprep.subr.mxu0 0.0
        %2155 = vmatpush1.msra.mxu0 0.0
        %2156 = vmatprep.subr.mxu0 0.0
        %2157 = vmatpush1.msra.mxu0 0.0
        %2158 = vmatprep.subr.mxu0 0.0
        %2159 = vmatpush1.msra.mxu0 0.0
        %2160 = vmatprep.subr.mxu0 0.0
        %2161 = vmatpush1.msra.mxu0 0.0
        %2162 = vmatprep.subr.mxu0 0.0
        %2163 = vmatpush1.msra.mxu0 0.0
        %2164 = vmatprep.subr.mxu0 0.0
        %2165 = vmatpush1.msra.mxu0 0.0
        %2166 = vmatprep.subr.mxu0 0.0
        %2167 = vmatpush1.msra.mxu0 0.0
        %2168 = vmatprep.subr.mxu0 0.0
        %2169 = vmatpush1.msra.mxu0 0.0
        %2170 = vmatprep.subr.mxu0 0.0
        %2171 = vmatpush1.msra.mxu0 0.0
        %2172 = vmatprep.mubr.f32.mxu0 0.0
        %2173 = vmatmul.mubr.f32.gmra.mrb[0].mxu0 %v2103
        %v2174 = vpop.f32.mrb[0].mxu0
        %v2175 = vadd.f32 0.0, %v2174
        %v2176 = vpop.f32.mrb[0].mxu0
        %2177 = vmatprep.mubr.f32.mxu0 0.0
        %2178 = vmatmul.mubr.f32.gmra.mrb[0].mxu0 %v2106
        %v2179 = vpop.f32.mrb[0].mxu0
        %v2180 = vadd.f32 0.0, %v2179
        %v2181 = vpop.f32.mrb[0].mxu0
        %2182 = vdwg.mxu0
        %v2183 = vadd.f32 %v2093, %v2175
        %v2184 = vadd.f32 %v2094, %v2180
        %v2185 = vld [vmem:[#allocation2 + $0x9] sm:$0xff]
        %v2186 = vld [vmem:[#allocation2 + $0x11] sm:$0xff]
        %s2187 = scalar_lea.vmem %s7, 128
        %v2188 = vld [vmem:[%s2187] sm:$0xff]
        %v2189 = vld [vmem:[%s2187 + $0x8] sm:$0xff]
        %v2190 = vld [vmem:[%s2187 + $0x10] sm:$0xff]
        %v2191 = vld [vmem:[%s2187 + $0x18] sm:$0xff]
        %v2193 = vsel %vm515, %v2185, 0
        %v2196 = vsel %vm515, %v2186, 0
        %2198 = vmatprep.subr.mxu0 0.0
        %2199 = vmatpush1.msra.mxu0 %v2188
        %2200 = vmatprep.subr.mxu0 0.0
        %2201 = vmatpush1.msra.mxu0 %v2189
        %2202 = vmatprep.subr.mxu0 0.0
        %2203 = vmatpush1.msra.mxu0 %v2190
        %2204 = vmatprep.subr.mxu0 0.0
        %2205 = vmatpush1.msra.mxu0 %v2191
        %2206 = vmatprep.subr.mxu0 0.0
        %2207 = vmatpush1.msra.mxu0 0.0
        %2208 = vmatprep.subr.mxu0 0.0
        %2209 = vmatpush1.msra.mxu0 0.0
        %2210 = vmatprep.subr.mxu0 0.0
        %2211 = vmatpush1.msra.mxu0 0.0
        %2212 = vmatprep.subr.mxu0 0.0
        %2213 = vmatpush1.msra.mxu0 0.0
        %2214 = vmatprep.subr.mxu0 0.0
        %2215 = vmatpush1.msra.mxu0 0.0
        %2216 = vmatprep.subr.mxu0 0.0
        %2217 = vmatpush1.msra.mxu0 0.0
        %2218 = vmatprep.subr.mxu0 0.0
        %2219 = vmatpush1.msra.mxu0 0.0
        %2220 = vmatprep.subr.mxu0 0.0
        %2221 = vmatpush1.msra.mxu0 0.0
        %2222 = vmatprep.subr.mxu0 0.0
        %2223 = vmatpush1.msra.mxu0 0.0
        %2224 = vmatprep.subr.mxu0 0.0
        %2225 = vmatpush1.msra.mxu0 0.0
        %2226 = vmatprep.subr.mxu0 0.0
        %2227 = vmatpush1.msra.mxu0 0.0
        %2228 = vmatprep.subr.mxu0 0.0
        %2229 = vmatpush1.msra.mxu0 0.0
        %2230 = vmatprep.subr.mxu0 0.0
        %2231 = vmatpush1.msra.mxu0 0.0
        %2232 = vmatprep.subr.mxu0 0.0
        %2233 = vmatpush1.msra.mxu0 0.0
        %2234 = vmatprep.subr.mxu0 0.0
        %2235 = vmatpush1.msra.mxu0 0.0
        %2236 = vmatprep.subr.mxu0 0.0
        %2237 = vmatpush1.msra.mxu0 0.0
        %2238 = vmatprep.subr.mxu0 0.0
        %2239 = vmatpush1.msra.mxu0 0.0
        %2240 = vmatprep.subr.mxu0 0.0
        %2241 = vmatpush1.msra.mxu0 0.0
        %2242 = vmatprep.subr.mxu0 0.0
        %2243 = vmatpush1.msra.mxu0 0.0
        %2244 = vmatprep.subr.mxu0 0.0
        %2245 = vmatpush1.msra.mxu0 0.0
        %2246 = vmatprep.subr.mxu0 0.0
        %2247 = vmatpush1.msra.mxu0 0.0
        %2248 = vmatprep.subr.mxu0 0.0
        %2249 = vmatpush1.msra.mxu0 0.0
        %2250 = vmatprep.subr.mxu0 0.0
        %2251 = vmatpush1.msra.mxu0 0.0
        %2252 = vmatprep.subr.mxu0 0.0
        %2253 = vmatpush1.msra.mxu0 0.0
        %2254 = vmatprep.subr.mxu0 0.0
        %2255 = vmatpush1.msra.mxu0 0.0
        %2256 = vmatprep.subr.mxu0 0.0
        %2257 = vmatpush1.msra.mxu0 0.0
        %2258 = vmatprep.subr.mxu0 0.0
        %2259 = vmatpush1.msra.mxu0 0.0
        %2260 = vmatprep.subr.mxu0 0.0
        %2261 = vmatpush1.msra.mxu0 0.0
        %2262 = vmatprep.mubr.f32.mxu0 0.0
        %2263 = vmatmul.mubr.f32.gmra.mrb[0].mxu0 %v2193
        %v2264 = vpop.f32.mrb[0].mxu0
        %v2265 = vadd.f32 0.0, %v2264
        %v2266 = vpop.f32.mrb[0].mxu0
        %2267 = vmatprep.mubr.f32.mxu0 0.0
        %2268 = vmatmul.mubr.f32.gmra.mrb[0].mxu0 %v2196
        %v2269 = vpop.f32.mrb[0].mxu0
        %v2270 = vadd.f32 0.0, %v2269
        %v2271 = vpop.f32.mrb[0].mxu0
        %2272 = vdwg.mxu0
        %v2273 = vadd.f32 %v2183, %v2265
        %v2274 = vadd.f32 %v2184, %v2270
        %v2275 = vld [vmem:[#allocation2 + $0xa] sm:$0xff]
        %v2276 = vld [vmem:[#allocation2 + $0x12] sm:$0xff]
        %s2277 = scalar_lea.vmem %s7, 160
        %v2278 = vld [vmem:[%s2277] sm:$0xff]
        %v2279 = vld [vmem:[%s2277 + $0x8] sm:$0xff]
        %v2280 = vld [vmem:[%s2277 + $0x10] sm:$0xff]
        %v2281 = vld [vmem:[%s2277 + $0x18] sm:$0xff]
        %v2283 = vsel %vm515, %v2275, 0
        %v2286 = vsel %vm515, %v2276, 0
        %2288 = vmatprep.subr.mxu0 0.0
        %2289 = vmatpush1.msra.mxu0 %v2278
        %2290 = vmatprep.subr.mxu0 0.0
        %2291 = vmatpush1.msra.mxu0 %v2279
        %2292 = vmatprep.subr.mxu0 0.0
        %2293 = vmatpush1.msra.mxu0 %v2280
        %2294 = vmatprep.subr.mxu0 0.0
        %2295 = vmatpush1.msra.mxu0 %v2281
        %2296 = vmatprep.subr.mxu0 0.0
        %2297 = vmatpush1.msra.mxu0 0.0
        %2298 = vmatprep.subr.mxu0 0.0
        %2299 = vmatpush1.msra.mxu0 0.0
        %2300 = vmatprep.subr.mxu0 0.0
        %2301 = vmatpush1.msra.mxu0 0.0
        %2302 = vmatprep.subr.mxu0 0.0
        %2303 = vmatpush1.msra.mxu0 0.0
        %2304 = vmatprep.subr.mxu0 0.0
        %2305 = vmatpush1.msra.mxu0 0.0
        %2306 = vmatprep.subr.mxu0 0.0
        %2307 = vmatpush1.msra.mxu0 0.0
        %2308 = vmatprep.subr.mxu0 0.0
        %2309 = vmatpush1.msra.mxu0 0.0
        %2310 = vmatprep.subr.mxu0 0.0
        %2311 = vmatpush1.msra.mxu0 0.0
        %2312 = vmatprep.subr.mxu0 0.0
        %2313 = vmatpush1.msra.mxu0 0.0
        %2314 = vmatprep.subr.mxu0 0.0
        %2315 = vmatpush1.msra.mxu0 0.0
        %2316 = vmatprep.subr.mxu0 0.0
        %2317 = vmatpush1.msra.mxu0 0.0
        %2318 = vmatprep.subr.mxu0 0.0
        %2319 = vmatpush1.msra.mxu0 0.0
        %2320 = vmatprep.subr.mxu0 0.0
        %2321 = vmatpush1.msra.mxu0 0.0
        %2322 = vmatprep.subr.mxu0 0.0
        %2323 = vmatpush1.msra.mxu0 0.0
        %2324 = vmatprep.subr.mxu0 0.0
        %2325 = vmatpush1.msra.mxu0 0.0
        %2326 = vmatprep.subr.mxu0 0.0
        %2327 = vmatpush1.msra.mxu0 0.0
        %2328 = vmatprep.subr.mxu0 0.0
        %2329 = vmatpush1.msra.mxu0 0.0
        %2330 = vmatprep.subr.mxu0 0.0
        %2331 = vmatpush1.msra.mxu0 0.0
        %2332 = vmatprep.subr.mxu0 0.0
        %2333 = vmatpush1.msra.mxu0 0.0
        %2334 = vmatprep.subr.mxu0 0.0
        %2335 = vmatpush1.msra.mxu0 0.0
        %2336 = vmatprep.subr.mxu0 0.0
        %2337 = vmatpush1.msra.mxu0 0.0
        %2338 = vmatprep.subr.mxu0 0.0
        %2339 = vmatpush1.msra.mxu0 0.0
        %2340 = vmatprep.subr.mxu0 0.0
        %2341 = vmatpush1.msra.mxu0 0.0
        %2342 = vmatprep.subr.mxu0 0.0
        %2343 = vmatpush1.msra.mxu0 0.0
        %2344 = vmatprep.subr.mxu0 0.0
        %2345 = vmatpush1.msra.mxu0 0.0
        %2346 = vmatprep.subr.mxu0 0.0
        %2347 = vmatpush1.msra.mxu0 0.0
        %2348 = vmatprep.subr.mxu0 0.0
        %2349 = vmatpush1.msra.mxu0 0.0
        %2350 = vmatprep.subr.mxu0 0.0
        %2351 = vmatpush1.msra.mxu0 0.0
        %2352 = vmatprep.mubr.f32.mxu0 0.0
        %2353 = vmatmul.mubr.f32.gmra.mrb[0].mxu0 %v2283
        %v2354 = vpop.f32.mrb[0].mxu0
        %v2355 = vadd.f32 0.0, %v2354
        %v2356 = vpop.f32.mrb[0].mxu0
        %2357 = vmatprep.mubr.f32.mxu0 0.0
        %2358 = vmatmul.mubr.f32.gmra.mrb[0].mxu0 %v2286
        %v2359 = vpop.f32.mrb[0].mxu0
        %v2360 = vadd.f32 0.0, %v2359
        %v2361 = vpop.f32.mrb[0].mxu0
        %2362 = vdwg.mxu0
        %v2363 = vadd.f32 %v2273, %v2355
        %v2364 = vadd.f32 %v2274, %v2360
        %v2365 = vld [vmem:[#allocation2 + $0xb] sm:$0xff]
        %v2366 = vld [vmem:[#allocation2 + $0x13] sm:$0xff]
        %s2367 = scalar_lea.vmem %s7, 192
        %v2368 = vld [vmem:[%s2367] sm:$0xff]
        %v2369 = vld [vmem:[%s2367 + $0x8] sm:$0xff]
        %v2370 = vld [vmem:[%s2367 + $0x10] sm:$0xff]
        %v2371 = vld [vmem:[%s2367 + $0x18] sm:$0xff]
        %v2373 = vsel %vm515, %v2365, 0
        %v2376 = vsel %vm515, %v2366, 0
        %2378 = vmatprep.subr.mxu0 0.0
        %2379 = vmatpush1.msra.mxu0 %v2368
        %2380 = vmatprep.subr.mxu0 0.0
        %2381 = vmatpush1.msra.mxu0 %v2369
        %2382 = vmatprep.subr.mxu0 0.0
        %2383 = vmatpush1.msra.mxu0 %v2370
        %2384 = vmatprep.subr.mxu0 0.0
        %2385 = vmatpush1.msra.mxu0 %v2371
        %2386 = vmatprep.subr.mxu0 0.0
        %2387 = vmatpush1.msra.mxu0 0.0
        %2388 = vmatprep.subr.mxu0 0.0
        %2389 = vmatpush1.msra.mxu0 0.0
        %2390 = vmatprep.subr.mxu0 0.0
        %2391 = vmatpush1.msra.mxu0 0.0
        %2392 = vmatprep.subr.mxu0 0.0
        %2393 = vmatpush1.msra.mxu0 0.0
        %2394 = vmatprep.subr.mxu0 0.0
        %2395 = vmatpush1.msra.mxu0 0.0
        %2396 = vmatprep.subr.mxu0 0.0
        %2397 = vmatpush1.msra.mxu0 0.0
        %2398 = vmatprep.subr.mxu0 0.0
        %2399 = vmatpush1.msra.mxu0 0.0
        %2400 = vmatprep.subr.mxu0 0.0
        %2401 = vmatpush1.msra.mxu0 0.0
        %2402 = vmatprep.subr.mxu0 0.0
        %2403 = vmatpush1.msra.mxu0 0.0
        %2404 = vmatprep.subr.mxu0 0.0
        %2405 = vmatpush1.msra.mxu0 0.0
        %2406 = vmatprep.subr.mxu0 0.0
        %2407 = vmatpush1.msra.mxu0 0.0
        %2408 = vmatprep.subr.mxu0 0.0
        %2409 = vmatpush1.msra.mxu0 0.0
        %2410 = vmatprep.subr.mxu0 0.0
        %2411 = vmatpush1.msra.mxu0 0.0
        %2412 = vmatprep.subr.mxu0 0.0
        %2413 = vmatpush1.msra.mxu0 0.0
        %2414 = vmatprep.subr.mxu0 0.0
        %2415 = vmatpush1.msra.mxu0 0.0
        %2416 = vmatprep.subr.mxu0 0.0
        %2417 = vmatpush1.msra.mxu0 0.0
        %2418 = vmatprep.subr.mxu0 0.0
        %2419 = vmatpush1.msra.mxu0 0.0
        %2420 = vmatprep.subr.mxu0 0.0
        %2421 = vmatpush1.msra.mxu0 0.0
        %2422 = vmatprep.subr.mxu0 0.0
        %2423 = vmatpush1.msra.mxu0 0.0
        %2424 = vmatprep.subr.mxu0 0.0
        %2425 = vmatpush1.msra.mxu0 0.0
        %2426 = vmatprep.subr.mxu0 0.0
        %2427 = vmatpush1.msra.mxu0 0.0
        %2428 = vmatprep.subr.mxu0 0.0
        %2429 = vmatpush1.msra.mxu0 0.0
        %2430 = vmatprep.subr.mxu0 0.0
        %2431 = vmatpush1.msra.mxu0 0.0
        %2432 = vmatprep.subr.mxu0 0.0
        %2433 = vmatpush1.msra.mxu0 0.0
        %2434 = vmatprep.subr.mxu0 0.0
        %2435 = vmatpush1.msra.mxu0 0.0
        %2436 = vmatprep.subr.mxu0 0.0
        %2437 = vmatpush1.msra.mxu0 0.0
        %2438 = vmatprep.subr.mxu0 0.0
        %2439 = vmatpush1.msra.mxu0 0.0
        %2440 = vmatprep.subr.mxu0 0.0
        %2441 = vmatpush1.msra.mxu0 0.0
        %2442 = vmatprep.mubr.f32.mxu0 0.0
        %2443 = vmatmul.mubr.f32.gmra.mrb[0].mxu0 %v2373
        %v2444 = vpop.f32.mrb[0].mxu0
        %v2445 = vadd.f32 0.0, %v2444
        %v2446 = vpop.f32.mrb[0].mxu0
        %2447 = vmatprep.mubr.f32.mxu0 0.0
        %2448 = vmatmul.mubr.f32.gmra.mrb[0].mxu0 %v2376
        %v2449 = vpop.f32.mrb[0].mxu0
        %v2450 = vadd.f32 0.0, %v2449
        %v2451 = vpop.f32.mrb[0].mxu0
        %2452 = vdwg.mxu0
        %v2453 = vadd.f32 %v2363, %v2445
        %v2454 = vadd.f32 %v2364, %v2450
        %v2455 = vld [vmem:[%s8] sm:$0x1]
        %v2457 = vlaneseq
        %v2458 = vshrl.u32 %v2457, 7
        %v2459 = vsub.s32 0, %v2458
        %v2460 = vrot.slane %v2455, %v2459
        %v2462 = vmul.f32 %v2453, %v2460
        %v2463 = vmul.f32 %v2454, %v2460
        %v2464 = vld [vmem:[%s9] sm:$0x1]
        %v2466 = vlaneseq
        %v2467 = vshrl.u32 %v2466, 7
        %v2468 = vsub.s32 0, %v2467
        %v2469 = vrot.slane %v2464, %v2468
        %v2471 = vadd.f32 %v2462, %v2469
        %v2472 = vadd.f32 %v2463, %v2469
        %vm2473 = vcmp.gt.f32.partialorder %v2471, 0.0
        %vm2474 = vcmp.gt.f32.partialorder %v2472, 0.0
        %v2475 = vmul.f32 %v2471, 0.2
        %v2476 = vmul.f32 %v2472, 0.2
        %v2477 = vsel %vm2473, %v2471, %v2475
        %v2478 = vsel %vm2474, %v2472, %v2476
        %vm2479 = vcmask 130048
        %2480 = vst.msk [vmem:[#allocation3 + $0x8] sm:$0xff] %vm2479, %v2477
        %2481 = vst.msk [vmem:[#allocation3 + $0x10] sm:$0xff] %vm2479, %v2478
        %v2482 = vld [vmem:[#allocation3 + $0x5] sm:$0xff]
        %v2483 = vld [vmem:[#allocation3 + $0xd] sm:$0xff]
        %v2484 = vld [vmem:[%s10] sm:$0xff]
        %v2485 = vld [vmem:[%s10 + $0x8] sm:$0xff]
        %v2486 = vld [vmem:[#allocation3 + $0x6] sm:$0xff]
        %v2487 = vld [vmem:[#allocation3 + $0xe] sm:$0xff]
        %s2488 = scalar_lea.vmem %s10, 16
        %v2489 = vld [vmem:[%s2488] sm:$0xff]
        %v2490 = vld [vmem:[%s2488 + $0x8] sm:$0xff]
        %v2492 = vsel %vm2479, %v2486, 0
        %v2495 = vsel %vm2479, %v2487, 0
        %2497 = vmatprep.subr.mxu0 0.0
        %2498 = vmatpush1.msra.mxu0 %v2489
        %2499 = vmatprep.subr.mxu0 0.0
        %2500 = vmatpush1.msra.mxu0 %v2490
        %2501 = vmatprep.subr.mxu0 0.0
        %2502 = vmatpush1.msra.mxu0 0.0
        %2503 = vmatprep.subr.mxu0 0.0
        %2504 = vmatpush1.msra.mxu0 0.0
        %2505 = vmatprep.subr.mxu0 0.0
        %2506 = vmatpush1.msra.mxu0 0.0
        %2507 = vmatprep.subr.mxu0 0.0
        %2508 = vmatpush1.msra.mxu0 0.0
        %2509 = vmatprep.subr.mxu0 0.0
        %2510 = vmatpush1.msra.mxu0 0.0
        %2511 = vmatprep.subr.mxu0 0.0
        %2512 = vmatpush1.msra.mxu0 0.0
        %2513 = vmatprep.subr.mxu0 0.0
        %2514 = vmatpush1.msra.mxu0 0.0
        %2515 = vmatprep.subr.mxu0 0.0
        %2516 = vmatpush1.msra.mxu0 0.0
        %2517 = vmatprep.subr.mxu0 0.0
        %2518 = vmatpush1.msra.mxu0 0.0
        %2519 = vmatprep.subr.mxu0 0.0
        %2520 = vmatpush1.msra.mxu0 0.0
        %2521 = vmatprep.subr.mxu0 0.0
        %2522 = vmatpush1.msra.mxu0 0.0
        %2523 = vmatprep.subr.mxu0 0.0
        %2524 = vmatpush1.msra.mxu0 0.0
        %2525 = vmatprep.subr.mxu0 0.0
        %2526 = vmatpush1.msra.mxu0 0.0
        %2527 = vmatprep.subr.mxu0 0.0
        %2528 = vmatpush1.msra.mxu0 0.0
        %2529 = vmatprep.subr.mxu0 0.0
        %2530 = vmatpush1.msra.mxu0 0.0
        %2531 = vmatprep.subr.mxu0 0.0
        %2532 = vmatpush1.msra.mxu0 0.0
        %2533 = vmatprep.subr.mxu0 0.0
        %2534 = vmatpush1.msra.mxu0 0.0
        %2535 = vmatprep.subr.mxu0 0.0
        %2536 = vmatpush1.msra.mxu0 0.0
        %2537 = vmatprep.subr.mxu0 0.0
        %2538 = vmatpush1.msra.mxu0 0.0
        %2539 = vmatprep.subr.mxu0 0.0
        %2540 = vmatpush1.msra.mxu0 0.0
        %2541 = vmatprep.subr.mxu0 0.0
        %2542 = vmatpush1.msra.mxu0 0.0
        %2543 = vmatprep.subr.mxu0 0.0
        %2544 = vmatpush1.msra.mxu0 0.0
        %2545 = vmatprep.subr.mxu0 0.0
        %2546 = vmatpush1.msra.mxu0 0.0
        %2547 = vmatprep.subr.mxu0 0.0
        %2548 = vmatpush1.msra.mxu0 0.0
        %2549 = vmatprep.subr.mxu0 0.0
        %2550 = vmatpush1.msra.mxu0 0.0
        %2551 = vmatprep.subr.mxu0 0.0
        %2552 = vmatpush1.msra.mxu0 0.0
        %2553 = vmatprep.subr.mxu0 0.0
        %2554 = vmatpush1.msra.mxu0 0.0
        %2555 = vmatprep.subr.mxu0 0.0
        %2556 = vmatpush1.msra.mxu0 0.0
        %2557 = vmatprep.subr.mxu0 0.0
        %2558 = vmatpush1.msra.mxu0 0.0
        %2559 = vmatprep.subr.mxu0 0.0
        %2560 = vmatpush1.msra.mxu0 0.0
        %2561 = vmatprep.mubr.f32.mxu0 0.0
        %2562 = vmatmul.mubr.f32.gmra.mrb[0].mxu0 %v2492
        %v2563 = vpop.f32.mrb[0].mxu0
        %v2564 = vadd.f32 0.0, %v2563
        %v2565 = vpop.f32.mrb[0].mxu0
        %2566 = vmatprep.mubr.f32.mxu0 0.0
        %2567 = vmatmul.mubr.f32.gmra.mrb[0].mxu0 %v2495
        %v2568 = vpop.f32.mrb[0].mxu0
        %v2569 = vadd.f32 0.0, %v2568
        %v2570 = vpop.f32.mrb[0].mxu0
        %2571 = vdwg.mxu0
        %v2573 = vsel %vm2479, %v2482, 0
        %v2576 = vsel %vm2479, %v2483, 0
        %2578 = vmatprep.subr.mxu0 0.0
        %2579 = vmatpush1.msra.mxu0 %v2484
        %2580 = vmatprep.subr.mxu0 0.0
        %2581 = vmatpush1.msra.mxu0 %v2485
        %2582 = vmatprep.subr.mxu0 0.0
        %2583 = vmatpush1.msra.mxu0 0.0
        %2584 = vmatprep.subr.mxu0 0.0
        %2585 = vmatpush1.msra.mxu0 0.0
        %2586 = vmatprep.subr.mxu0 0.0
        %2587 = vmatpush1.msra.mxu0 0.0
        %2588 = vmatprep.subr.mxu0 0.0
        %2589 = vmatpush1.msra.mxu0 0.0
        %2590 = vmatprep.subr.mxu0 0.0
        %2591 = vmatpush1.msra.mxu0 0.0
        %2592 = vmatprep.subr.mxu0 0.0
        %2593 = vmatpush1.msra.mxu0 0.0
        %2594 = vmatprep.subr.mxu0 0.0
        %2595 = vmatpush1.msra.mxu0 0.0
        %2596 = vmatprep.subr.mxu0 0.0
        %2597 = vmatpush1.msra.mxu0 0.0
        %2598 = vmatprep.subr.mxu0 0.0
        %2599 = vmatpush1.msra.mxu0 0.0
        %2600 = vmatprep.subr.mxu0 0.0
        %2601 = vmatpush1.msra.mxu0 0.0
        %2602 = vmatprep.subr.mxu0 0.0
        %2603 = vmatpush1.msra.mxu0 0.0
        %2604 = vmatprep.subr.mxu0 0.0
        %2605 = vmatpush1.msra.mxu0 0.0
        %2606 = vmatprep.subr.mxu0 0.0
        %2607 = vmatpush1.msra.mxu0 0.0
        %2608 = vmatprep.subr.mxu0 0.0
        %2609 = vmatpush1.msra.mxu0 0.0
        %2610 = vmatprep.subr.mxu0 0.0
        %2611 = vmatpush1.msra.mxu0 0.0
        %2612 = vmatprep.subr.mxu0 0.0
        %2613 = vmatpush1.msra.mxu0 0.0
        %2614 = vmatprep.subr.mxu0 0.0
        %2615 = vmatpush1.msra.mxu0 0.0
        %2616 = vmatprep.subr.mxu0 0.0
        %2617 = vmatpush1.msra.mxu0 0.0
        %2618 = vmatprep.subr.mxu0 0.0
        %2619 = vmatpush1.msra.mxu0 0.0
        %2620 = vmatprep.subr.mxu0 0.0
        %2621 = vmatpush1.msra.mxu0 0.0
        %2622 = vmatprep.subr.mxu0 0.0
        %2623 = vmatpush1.msra.mxu0 0.0
        %2624 = vmatprep.subr.mxu0 0.0
        %2625 = vmatpush1.msra.mxu0 0.0
        %2626 = vmatprep.subr.mxu0 0.0
        %2627 = vmatpush1.msra.mxu0 0.0
        %2628 = vmatprep.subr.mxu0 0.0
        %2629 = vmatpush1.msra.mxu0 0.0
        %2630 = vmatprep.subr.mxu0 0.0
        %2631 = vmatpush1.msra.mxu0 0.0
        %2632 = vmatprep.subr.mxu0 0.0
        %2633 = vmatpush1.msra.mxu0 0.0
        %2634 = vmatprep.subr.mxu0 0.0
        %2635 = vmatpush1.msra.mxu0 0.0
        %2636 = vmatprep.subr.mxu0 0.0
        %2637 = vmatpush1.msra.mxu0 0.0
        %2638 = vmatprep.subr.mxu0 0.0
        %2639 = vmatpush1.msra.mxu0 0.0
        %2640 = vmatprep.subr.mxu0 0.0
        %2641 = vmatpush1.msra.mxu0 0.0
        %2642 = vmatprep.mubr.f32.mxu0 0.0
        %2643 = vmatmul.mubr.f32.gmra.mrb[0].mxu0 %v2573
        %v2644 = vpop.f32.mrb[0].mxu0
        %v2645 = vadd.f32 %v2564, %v2644
        %v2646 = vpop.f32.mrb[0].mxu0
        %2647 = vmatprep.mubr.f32.mxu0 0.0
        %2648 = vmatmul.mubr.f32.gmra.mrb[0].mxu0 %v2576
        %v2649 = vpop.f32.mrb[0].mxu0
        %v2650 = vadd.f32 %v2569, %v2649
        %v2651 = vpop.f32.mrb[0].mxu0
        %2652 = vdwg.mxu0
        %v2653 = vld [vmem:[#allocation3 + $0x7] sm:$0xff]
        %v2654 = vld [vmem:[#allocation3 + $0xf] sm:$0xff]
        %s2655 = scalar_lea.vmem %s10, 32
        %v2656 = vld [vmem:[%s2655] sm:$0xff]
        %v2657 = vld [vmem:[%s2655 + $0x8] sm:$0xff]
        %v2659 = vsel %vm2479, %v2653, 0
        %v2662 = vsel %vm2479, %v2654, 0
        %2664 = vmatprep.subr.mxu0 0.0
        %2665 = vmatpush1.msra.mxu0 %v2656
        %2666 = vmatprep.subr.mxu0 0.0
        %2667 = vmatpush1.msra.mxu0 %v2657
        %2668 = vmatprep.subr.mxu0 0.0
        %2669 = vmatpush1.msra.mxu0 0.0
        %2670 = vmatprep.subr.mxu0 0.0
        %2671 = vmatpush1.msra.mxu0 0.0
        %2672 = vmatprep.subr.mxu0 0.0
        %2673 = vmatpush1.msra.mxu0 0.0
        %2674 = vmatprep.subr.mxu0 0.0
        %2675 = vmatpush1.msra.mxu0 0.0
        %2676 = vmatprep.subr.mxu0 0.0
        %2677 = vmatpush1.msra.mxu0 0.0
        %2678 = vmatprep.subr.mxu0 0.0
        %2679 = vmatpush1.msra.mxu0 0.0
        %2680 = vmatprep.subr.mxu0 0.0
        %2681 = vmatpush1.msra.mxu0 0.0
        %2682 = vmatprep.subr.mxu0 0.0
        %2683 = vmatpush1.msra.mxu0 0.0
        %2684 = vmatprep.subr.mxu0 0.0
        %2685 = vmatpush1.msra.mxu0 0.0
        %2686 = vmatprep.subr.mxu0 0.0
        %2687 = vmatpush1.msra.mxu0 0.0
        %2688 = vmatprep.subr.mxu0 0.0
        %2689 = vmatpush1.msra.mxu0 0.0
        %2690 = vmatprep.subr.mxu0 0.0
        %2691 = vmatpush1.msra.mxu0 0.0
        %2692 = vmatprep.subr.mxu0 0.0
        %2693 = vmatpush1.msra.mxu0 0.0
        %2694 = vmatprep.subr.mxu0 0.0
        %2695 = vmatpush1.msra.mxu0 0.0
        %2696 = vmatprep.subr.mxu0 0.0
        %2697 = vmatpush1.msra.mxu0 0.0
        %2698 = vmatprep.subr.mxu0 0.0
        %2699 = vmatpush1.msra.mxu0 0.0
        %2700 = vmatprep.subr.mxu0 0.0
        %2701 = vmatpush1.msra.mxu0 0.0
        %2702 = vmatprep.subr.mxu0 0.0
        %2703 = vmatpush1.msra.mxu0 0.0
        %2704 = vmatprep.subr.mxu0 0.0
        %2705 = vmatpush1.msra.mxu0 0.0
        %2706 = vmatprep.subr.mxu0 0.0
        %2707 = vmatpush1.msra.mxu0 0.0
        %2708 = vmatprep.subr.mxu0 0.0
        %2709 = vmatpush1.msra.mxu0 0.0
        %2710 = vmatprep.subr.mxu0 0.0
        %2711 = vmatpush1.msra.mxu0 0.0
        %2712 = vmatprep.subr.mxu0 0.0
        %2713 = vmatpush1.msra.mxu0 0.0
        %2714 = vmatprep.subr.mxu0 0.0
        %2715 = vmatpush1.msra.mxu0 0.0
        %2716 = vmatprep.subr.mxu0 0.0
        %2717 = vmatpush1.msra.mxu0 0.0
        %2718 = vmatprep.subr.mxu0 0.0
        %2719 = vmatpush1.msra.mxu0 0.0
        %2720 = vmatprep.subr.mxu0 0.0
        %2721 = vmatpush1.msra.mxu0 0.0
        %2722 = vmatprep.subr.mxu0 0.0
        %2723 = vmatpush1.msra.mxu0 0.0
        %2724 = vmatprep.subr.mxu0 0.0
        %2725 = vmatpush1.msra.mxu0 0.0
        %2726 = vmatprep.subr.mxu0 0.0
        %2727 = vmatpush1.msra.mxu0 0.0
        %2728 = vmatprep.mubr.f32.mxu0 0.0
        %2729 = vmatmul.mubr.f32.gmra.mrb[0].mxu0 %v2659
        %v2730 = vpop.f32.mrb[0].mxu0
        %v2731 = vadd.f32 0.0, %v2730
        %v2732 = vpop.f32.mrb[0].mxu0
        %2733 = vmatprep.mubr.f32.mxu0 0.0
        %2734 = vmatmul.mubr.f32.gmra.mrb[0].mxu0 %v2662
        %v2735 = vpop.f32.mrb[0].mxu0
        %v2736 = vadd.f32 0.0, %v2735
        %v2737 = vpop.f32.mrb[0].mxu0
        %2738 = vdwg.mxu0
        %v2739 = vadd.f32 %v2645, %v2731
        %v2740 = vadd.f32 %v2650, %v2736
        %v2741 = vld [vmem:[#allocation3 + $0x8] sm:$0xff]
        %v2742 = vld [vmem:[#allocation3 + $0x10] sm:$0xff]
        %s2743 = scalar_lea.vmem %s10, 48
        %v2744 = vld [vmem:[%s2743] sm:$0xff]
        %v2745 = vld [vmem:[%s2743 + $0x8] sm:$0xff]
        %v2747 = vsel %vm2479, %v2741, 0
        %v2750 = vsel %vm2479, %v2742, 0
        %2752 = vmatprep.subr.mxu0 0.0
        %2753 = vmatpush1.msra.mxu0 %v2744
        %2754 = vmatprep.subr.mxu0 0.0
        %2755 = vmatpush1.msra.mxu0 %v2745
        %2756 = vmatprep.subr.mxu0 0.0
        %2757 = vmatpush1.msra.mxu0 0.0
        %2758 = vmatprep.subr.mxu0 0.0
        %2759 = vmatpush1.msra.mxu0 0.0
        %2760 = vmatprep.subr.mxu0 0.0
        %2761 = vmatpush1.msra.mxu0 0.0
        %2762 = vmatprep.subr.mxu0 0.0
        %2763 = vmatpush1.msra.mxu0 0.0
        %2764 = vmatprep.subr.mxu0 0.0
        %2765 = vmatpush1.msra.mxu0 0.0
        %2766 = vmatprep.subr.mxu0 0.0
        %2767 = vmatpush1.msra.mxu0 0.0
        %2768 = vmatprep.subr.mxu0 0.0
        %2769 = vmatpush1.msra.mxu0 0.0
        %2770 = vmatprep.subr.mxu0 0.0
        %2771 = vmatpush1.msra.mxu0 0.0
        %2772 = vmatprep.subr.mxu0 0.0
        %2773 = vmatpush1.msra.mxu0 0.0
        %2774 = vmatprep.subr.mxu0 0.0
        %2775 = vmatpush1.msra.mxu0 0.0
        %2776 = vmatprep.subr.mxu0 0.0
        %2777 = vmatpush1.msra.mxu0 0.0
        %2778 = vmatprep.subr.mxu0 0.0
        %2779 = vmatpush1.msra.mxu0 0.0
        %2780 = vmatprep.subr.mxu0 0.0
        %2781 = vmatpush1.msra.mxu0 0.0
        %2782 = vmatprep.subr.mxu0 0.0
        %2783 = vmatpush1.msra.mxu0 0.0
        %2784 = vmatprep.subr.mxu0 0.0
        %2785 = vmatpush1.msra.mxu0 0.0
        %2786 = vmatprep.subr.mxu0 0.0
        %2787 = vmatpush1.msra.mxu0 0.0
        %2788 = vmatprep.subr.mxu0 0.0
        %2789 = vmatpush1.msra.mxu0 0.0
        %2790 = vmatprep.subr.mxu0 0.0
        %2791 = vmatpush1.msra.mxu0 0.0
        %2792 = vmatprep.subr.mxu0 0.0
        %2793 = vmatpush1.msra.mxu0 0.0
        %2794 = vmatprep.subr.mxu0 0.0
        %2795 = vmatpush1.msra.mxu0 0.0
        %2796 = vmatprep.subr.mxu0 0.0
        %2797 = vmatpush1.msra.mxu0 0.0
        %2798 = vmatprep.subr.mxu0 0.0
        %2799 = vmatpush1.msra.mxu0 0.0
        %2800 = vmatprep.subr.mxu0 0.0
        %2801 = vmatpush1.msra.mxu0 0.0
        %2802 = vmatprep.subr.mxu0 0.0
        %2803 = vmatpush1.msra.mxu0 0.0
        %2804 = vmatprep.subr.mxu0 0.0
        %2805 = vmatpush1.msra.mxu0 0.0
        %2806 = vmatprep.subr.mxu0 0.0
        %2807 = vmatpush1.msra.mxu0 0.0
        %2808 = vmatprep.subr.mxu0 0.0
        %2809 = vmatpush1.msra.mxu0 0.0
        %2810 = vmatprep.subr.mxu0 0.0
        %2811 = vmatpush1.msra.mxu0 0.0
        %2812 = vmatprep.subr.mxu0 0.0
        %2813 = vmatpush1.msra.mxu0 0.0
        %2814 = vmatprep.subr.mxu0 0.0
        %2815 = vmatpush1.msra.mxu0 0.0
        %2816 = vmatprep.mubr.f32.mxu0 0.0
        %2817 = vmatmul.mubr.f32.gmra.mrb[0].mxu0 %v2747
        %v2818 = vpop.f32.mrb[0].mxu0
        %v2819 = vadd.f32 0.0, %v2818
        %v2820 = vpop.f32.mrb[0].mxu0
        %2821 = vmatprep.mubr.f32.mxu0 0.0
        %2822 = vmatmul.mubr.f32.gmra.mrb[0].mxu0 %v2750
        %v2823 = vpop.f32.mrb[0].mxu0
        %v2824 = vadd.f32 0.0, %v2823
        %v2825 = vpop.f32.mrb[0].mxu0
        %2826 = vdwg.mxu0
        %v2827 = vadd.f32 %v2739, %v2819
        %v2828 = vadd.f32 %v2740, %v2824
        %v2829 = vld [vmem:[#allocation3 + $0x9] sm:$0xff]
        %v2830 = vld [vmem:[#allocation3 + $0x11] sm:$0xff]
        %s2831 = scalar_lea.vmem %s10, 64
        %v2832 = vld [vmem:[%s2831] sm:$0xff]
        %v2833 = vld [vmem:[%s2831 + $0x8] sm:$0xff]
        %v2835 = vsel %vm2479, %v2829, 0
        %v2838 = vsel %vm2479, %v2830, 0
        %2840 = vmatprep.subr.mxu0 0.0
        %2841 = vmatpush1.msra.mxu0 %v2832
        %2842 = vmatprep.subr.mxu0 0.0
        %2843 = vmatpush1.msra.mxu0 %v2833
        %2844 = vmatprep.subr.mxu0 0.0
        %2845 = vmatpush1.msra.mxu0 0.0
        %2846 = vmatprep.subr.mxu0 0.0
        %2847 = vmatpush1.msra.mxu0 0.0
        %2848 = vmatprep.subr.mxu0 0.0
        %2849 = vmatpush1.msra.mxu0 0.0
        %2850 = vmatprep.subr.mxu0 0.0
        %2851 = vmatpush1.msra.mxu0 0.0
        %2852 = vmatprep.subr.mxu0 0.0
        %2853 = vmatpush1.msra.mxu0 0.0
        %2854 = vmatprep.subr.mxu0 0.0
        %2855 = vmatpush1.msra.mxu0 0.0
        %2856 = vmatprep.subr.mxu0 0.0
        %2857 = vmatpush1.msra.mxu0 0.0
        %2858 = vmatprep.subr.mxu0 0.0
        %2859 = vmatpush1.msra.mxu0 0.0
        %2860 = vmatprep.subr.mxu0 0.0
        %2861 = vmatpush1.msra.mxu0 0.0
        %2862 = vmatprep.subr.mxu0 0.0
        %2863 = vmatpush1.msra.mxu0 0.0
        %2864 = vmatprep.subr.mxu0 0.0
        %2865 = vmatpush1.msra.mxu0 0.0
        %2866 = vmatprep.subr.mxu0 0.0
        %2867 = vmatpush1.msra.mxu0 0.0
        %2868 = vmatprep.subr.mxu0 0.0
        %2869 = vmatpush1.msra.mxu0 0.0
        %2870 = vmatprep.subr.mxu0 0.0
        %2871 = vmatpush1.msra.mxu0 0.0
        %2872 = vmatprep.subr.mxu0 0.0
        %2873 = vmatpush1.msra.mxu0 0.0
        %2874 = vmatprep.subr.mxu0 0.0
        %2875 = vmatpush1.msra.mxu0 0.0
        %2876 = vmatprep.subr.mxu0 0.0
        %2877 = vmatpush1.msra.mxu0 0.0
        %2878 = vmatprep.subr.mxu0 0.0
        %2879 = vmatpush1.msra.mxu0 0.0
        %2880 = vmatprep.subr.mxu0 0.0
        %2881 = vmatpush1.msra.mxu0 0.0
        %2882 = vmatprep.subr.mxu0 0.0
        %2883 = vmatpush1.msra.mxu0 0.0
        %2884 = vmatprep.subr.mxu0 0.0
        %2885 = vmatpush1.msra.mxu0 0.0
        %2886 = vmatprep.subr.mxu0 0.0
        %2887 = vmatpush1.msra.mxu0 0.0
        %2888 = vmatprep.subr.mxu0 0.0
        %2889 = vmatpush1.msra.mxu0 0.0
        %2890 = vmatprep.subr.mxu0 0.0
        %2891 = vmatpush1.msra.mxu0 0.0
        %2892 = vmatprep.subr.mxu0 0.0
        %2893 = vmatpush1.msra.mxu0 0.0
        %2894 = vmatprep.subr.mxu0 0.0
        %2895 = vmatpush1.msra.mxu0 0.0
        %2896 = vmatprep.subr.mxu0 0.0
        %2897 = vmatpush1.msra.mxu0 0.0
        %2898 = vmatprep.subr.mxu0 0.0
        %2899 = vmatpush1.msra.mxu0 0.0
        %2900 = vmatprep.subr.mxu0 0.0
        %2901 = vmatpush1.msra.mxu0 0.0
        %2902 = vmatprep.subr.mxu0 0.0
        %2903 = vmatpush1.msra.mxu0 0.0
        %2904 = vmatprep.mubr.f32.mxu0 0.0
        %2905 = vmatmul.mubr.f32.gmra.mrb[0].mxu0 %v2835
        %v2906 = vpop.f32.mrb[0].mxu0
        %v2907 = vadd.f32 0.0, %v2906
        %v2908 = vpop.f32.mrb[0].mxu0
        %2909 = vmatprep.mubr.f32.mxu0 0.0
        %2910 = vmatmul.mubr.f32.gmra.mrb[0].mxu0 %v2838
        %v2911 = vpop.f32.mrb[0].mxu0
        %v2912 = vadd.f32 0.0, %v2911
        %v2913 = vpop.f32.mrb[0].mxu0
        %2914 = vdwg.mxu0
        %v2915 = vadd.f32 %v2827, %v2907
        %v2916 = vadd.f32 %v2828, %v2912
        %v2917 = vld [vmem:[#allocation3 + $0xa] sm:$0xff]
        %v2918 = vld [vmem:[#allocation3 + $0x12] sm:$0xff]
        %s2919 = scalar_lea.vmem %s10, 80
        %v2920 = vld [vmem:[%s2919] sm:$0xff]
        %v2921 = vld [vmem:[%s2919 + $0x8] sm:$0xff]
        %v2923 = vsel %vm2479, %v2917, 0
        %v2926 = vsel %vm2479, %v2918, 0
        %2928 = vmatprep.subr.mxu0 0.0
        %2929 = vmatpush1.msra.mxu0 %v2920
        %2930 = vmatprep.subr.mxu0 0.0
        %2931 = vmatpush1.msra.mxu0 %v2921
        %2932 = vmatprep.subr.mxu0 0.0
        %2933 = vmatpush1.msra.mxu0 0.0
        %2934 = vmatprep.subr.mxu0 0.0
        %2935 = vmatpush1.msra.mxu0 0.0
        %2936 = vmatprep.subr.mxu0 0.0
        %2937 = vmatpush1.msra.mxu0 0.0
        %2938 = vmatprep.subr.mxu0 0.0
        %2939 = vmatpush1.msra.mxu0 0.0
        %2940 = vmatprep.subr.mxu0 0.0
        %2941 = vmatpush1.msra.mxu0 0.0
        %2942 = vmatprep.subr.mxu0 0.0
        %2943 = vmatpush1.msra.mxu0 0.0
        %2944 = vmatprep.subr.mxu0 0.0
        %2945 = vmatpush1.msra.mxu0 0.0
        %2946 = vmatprep.subr.mxu0 0.0
        %2947 = vmatpush1.msra.mxu0 0.0
        %2948 = vmatprep.subr.mxu0 0.0
        %2949 = vmatpush1.msra.mxu0 0.0
        %2950 = vmatprep.subr.mxu0 0.0
        %2951 = vmatpush1.msra.mxu0 0.0
        %2952 = vmatprep.subr.mxu0 0.0
        %2953 = vmatpush1.msra.mxu0 0.0
        %2954 = vmatprep.subr.mxu0 0.0
        %2955 = vmatpush1.msra.mxu0 0.0
        %2956 = vmatprep.subr.mxu0 0.0
        %2957 = vmatpush1.msra.mxu0 0.0
        %2958 = vmatprep.subr.mxu0 0.0
        %2959 = vmatpush1.msra.mxu0 0.0
        %2960 = vmatprep.subr.mxu0 0.0
        %2961 = vmatpush1.msra.mxu0 0.0
        %2962 = vmatprep.subr.mxu0 0.0
        %2963 = vmatpush1.msra.mxu0 0.0
        %2964 = vmatprep.subr.mxu0 0.0
        %2965 = vmatpush1.msra.mxu0 0.0
        %2966 = vmatprep.subr.mxu0 0.0
        %2967 = vmatpush1.msra.mxu0 0.0
        %2968 = vmatprep.subr.mxu0 0.0
        %2969 = vmatpush1.msra.mxu0 0.0
        %2970 = vmatprep.subr.mxu0 0.0
        %2971 = vmatpush1.msra.mxu0 0.0
        %2972 = vmatprep.subr.mxu0 0.0
        %2973 = vmatpush1.msra.mxu0 0.0
        %2974 = vmatprep.subr.mxu0 0.0
        %2975 = vmatpush1.msra.mxu0 0.0
        %2976 = vmatprep.subr.mxu0 0.0
        %2977 = vmatpush1.msra.mxu0 0.0
        %2978 = vmatprep.subr.mxu0 0.0
        %2979 = vmatpush1.msra.mxu0 0.0
        %2980 = vmatprep.subr.mxu0 0.0
        %2981 = vmatpush1.msra.mxu0 0.0
        %2982 = vmatprep.subr.mxu0 0.0
        %2983 = vmatpush1.msra.mxu0 0.0
        %2984 = vmatprep.subr.mxu0 0.0
        %2985 = vmatpush1.msra.mxu0 0.0
        %2986 = vmatprep.subr.mxu0 0.0
        %2987 = vmatpush1.msra.mxu0 0.0
        %2988 = vmatprep.subr.mxu0 0.0
        %2989 = vmatpush1.msra.mxu0 0.0
        %2990 = vmatprep.subr.mxu0 0.0
        %2991 = vmatpush1.msra.mxu0 0.0
        %2992 = vmatprep.mubr.f32.mxu0 0.0
        %2993 = vmatmul.mubr.f32.gmra.mrb[0].mxu0 %v2923
        %v2994 = vpop.f32.mrb[0].mxu0
        %v2995 = vadd.f32 0.0, %v2994
        %v2996 = vpop.f32.mrb[0].mxu0
        %2997 = vmatprep.mubr.f32.mxu0 0.0
        %2998 = vmatmul.mubr.f32.gmra.mrb[0].mxu0 %v2926
        %v2999 = vpop.f32.mrb[0].mxu0
        %v3000 = vadd.f32 0.0, %v2999
        %v3001 = vpop.f32.mrb[0].mxu0
        %3002 = vdwg.mxu0
        %v3003 = vadd.f32 %v2915, %v2995
        %v3004 = vadd.f32 %v2916, %v3000
        %v3005 = vld [vmem:[#allocation3 + $0xb] sm:$0xff]
        %v3006 = vld [vmem:[#allocation3 + $0x13] sm:$0xff]
        %s3007 = scalar_lea.vmem %s10, 96
        %v3008 = vld [vmem:[%s3007] sm:$0xff]
        %v3009 = vld [vmem:[%s3007 + $0x8] sm:$0xff]
        %v3011 = vsel %vm2479, %v3005, 0
        %v3014 = vsel %vm2479, %v3006, 0
        %3016 = vmatprep.subr.mxu0 0.0
        %3017 = vmatpush1.msra.mxu0 %v3008
        %3018 = vmatprep.subr.mxu0 0.0
        %3019 = vmatpush1.msra.mxu0 %v3009
        %3020 = vmatprep.subr.mxu0 0.0
        %3021 = vmatpush1.msra.mxu0 0.0
        %3022 = vmatprep.subr.mxu0 0.0
        %3023 = vmatpush1.msra.mxu0 0.0
        %3024 = vmatprep.subr.mxu0 0.0
        %3025 = vmatpush1.msra.mxu0 0.0
        %3026 = vmatprep.subr.mxu0 0.0
        %3027 = vmatpush1.msra.mxu0 0.0
        %3028 = vmatprep.subr.mxu0 0.0
        %3029 = vmatpush1.msra.mxu0 0.0
        %3030 = vmatprep.subr.mxu0 0.0
        %3031 = vmatpush1.msra.mxu0 0.0
        %3032 = vmatprep.subr.mxu0 0.0
        %3033 = vmatpush1.msra.mxu0 0.0
        %3034 = vmatprep.subr.mxu0 0.0
        %3035 = vmatpush1.msra.mxu0 0.0
        %3036 = vmatprep.subr.mxu0 0.0
        %3037 = vmatpush1.msra.mxu0 0.0
        %3038 = vmatprep.subr.mxu0 0.0
        %3039 = vmatpush1.msra.mxu0 0.0
        %3040 = vmatprep.subr.mxu0 0.0
        %3041 = vmatpush1.msra.mxu0 0.0
        %3042 = vmatprep.subr.mxu0 0.0
        %3043 = vmatpush1.msra.mxu0 0.0
        %3044 = vmatprep.subr.mxu0 0.0
        %3045 = vmatpush1.msra.mxu0 0.0
        %3046 = vmatprep.subr.mxu0 0.0
        %3047 = vmatpush1.msra.mxu0 0.0
        %3048 = vmatprep.subr.mxu0 0.0
        %3049 = vmatpush1.msra.mxu0 0.0
        %3050 = vmatprep.subr.mxu0 0.0
        %3051 = vmatpush1.msra.mxu0 0.0
        %3052 = vmatprep.subr.mxu0 0.0
        %3053 = vmatpush1.msra.mxu0 0.0
        %3054 = vmatprep.subr.mxu0 0.0
        %3055 = vmatpush1.msra.mxu0 0.0
        %3056 = vmatprep.subr.mxu0 0.0
        %3057 = vmatpush1.msra.mxu0 0.0
        %3058 = vmatprep.subr.mxu0 0.0
        %3059 = vmatpush1.msra.mxu0 0.0
        %3060 = vmatprep.subr.mxu0 0.0
        %3061 = vmatpush1.msra.mxu0 0.0
        %3062 = vmatprep.subr.mxu0 0.0
        %3063 = vmatpush1.msra.mxu0 0.0
        %3064 = vmatprep.subr.mxu0 0.0
        %3065 = vmatpush1.msra.mxu0 0.0
        %3066 = vmatprep.subr.mxu0 0.0
        %3067 = vmatpush1.msra.mxu0 0.0
        %3068 = vmatprep.subr.mxu0 0.0
        %3069 = vmatpush1.msra.mxu0 0.0
        %3070 = vmatprep.subr.mxu0 0.0
        %3071 = vmatpush1.msra.mxu0 0.0
        %3072 = vmatprep.subr.mxu0 0.0
        %3073 = vmatpush1.msra.mxu0 0.0
        %3074 = vmatprep.subr.mxu0 0.0
        %3075 = vmatpush1.msra.mxu0 0.0
        %3076 = vmatprep.subr.mxu0 0.0
        %3077 = vmatpush1.msra.mxu0 0.0
        %3078 = vmatprep.subr.mxu0 0.0
        %3079 = vmatpush1.msra.mxu0 0.0
        %3080 = vmatprep.mubr.f32.mxu0 0.0
        %3081 = vmatmul.mubr.f32.gmra.mrb[0].mxu0 %v3011
        %v3082 = vpop.f32.mrb[0].mxu0
        %v3083 = vadd.f32 0.0, %v3082
        %v3084 = vpop.f32.mrb[0].mxu0
        %3085 = vmatprep.mubr.f32.mxu0 0.0
        %3086 = vmatmul.mubr.f32.gmra.mrb[0].mxu0 %v3014
        %v3087 = vpop.f32.mrb[0].mxu0
        %v3088 = vadd.f32 0.0, %v3087
        %v3089 = vpop.f32.mrb[0].mxu0
        %3090 = vdwg.mxu0
        %v3091 = vadd.f32 %v3003, %v3083
        %v3092 = vadd.f32 %v3004, %v3088
        %v3093 = vld [vmem:[%s11] sm:$0x1]
        %v3095 = vlaneseq
        %v3096 = vshrl.u32 %v3095, 7
        %v3097 = vsub.s32 0, %v3096
        %v3098 = vrot.slane %v3093, %v3097
        %v3100 = vmul.f32 %v3091, %v3098
        %v3101 = vmul.f32 %v3092, %v3098
        %v3102 = vld [vmem:[%s12] sm:$0x1]
        %v3104 = vlaneseq
        %v3105 = vshrl.u32 %v3104, 7
        %v3106 = vsub.s32 0, %v3105
        %v3107 = vrot.slane %v3102, %v3106
        %v3109 = vadd.f32 %v3100, %v3107
        %v3110 = vadd.f32 %v3101, %v3107
        %vm3111 = vcmp.gt.f32.partialorder %v3109, 0.0
        %vm3112 = vcmp.gt.f32.partialorder %v3110, 0.0
        %v3113 = vmul.f32 %v3109, 0.2
        %v3114 = vmul.f32 %v3110, 0.2
        %v3115 = vsel %vm3111, %v3109, %v3113
        %v3116 = vsel %vm3112, %v3110, %v3114
        %3117 = vst.msk [vmem:[#allocation2 + $0x8] sm:$0xff] %vm2479, %v3115
        %3118 = vst.msk [vmem:[#allocation2 + $0x10] sm:$0xff] %vm2479, %v3116
        %v3119 = vld [vmem:[#allocation2 + $0x5] sm:$0xff]
        %v3120 = vld [vmem:[#allocation2 + $0xd] sm:$0xff]
        %v3121 = vld [vmem:[#allocation9] sm:$0xff]
        %v3122 = vld [vmem:[#allocation9 + $0x8] sm:$0xff]
        %v3123 = vld [vmem:[#allocation2 + $0x6] sm:$0xff]
        %v3124 = vld [vmem:[#allocation2 + $0xe] sm:$0xff]
        %s3125 = scalar_lea.vmem [#allocation9], 16
        %v3126 = vld [vmem:[%s3125] sm:$0xff]
        %v3127 = vld [vmem:[%s3125 + $0x8] sm:$0xff]
        %v3129 = vsel %vm2479, %v3123, 0
        %v3132 = vsel %vm2479, %v3124, 0
        %3134 = vmatprep.subr.mxu0 0.0
        %3135 = vmatpush1.msra.mxu0 %v3126
        %3136 = vmatprep.subr.mxu0 0.0
        %3137 = vmatpush1.msra.mxu0 %v3127
        %3138 = vmatprep.subr.mxu0 0.0
        %3139 = vmatpush1.msra.mxu0 0.0
        %3140 = vmatprep.subr.mxu0 0.0
        %3141 = vmatpush1.msra.mxu0 0.0
        %3142 = vmatprep.subr.mxu0 0.0
        %3143 = vmatpush1.msra.mxu0 0.0
        %3144 = vmatprep.subr.mxu0 0.0
        %3145 = vmatpush1.msra.mxu0 0.0
        %3146 = vmatprep.subr.mxu0 0.0
        %3147 = vmatpush1.msra.mxu0 0.0
        %3148 = vmatprep.subr.mxu0 0.0
        %3149 = vmatpush1.msra.mxu0 0.0
        %3150 = vmatprep.subr.mxu0 0.0
        %3151 = vmatpush1.msra.mxu0 0.0
        %3152 = vmatprep.subr.mxu0 0.0
        %3153 = vmatpush1.msra.mxu0 0.0
        %3154 = vmatprep.subr.mxu0 0.0
        %3155 = vmatpush1.msra.mxu0 0.0
        %3156 = vmatprep.subr.mxu0 0.0
        %3157 = vmatpush1.msra.mxu0 0.0
        %3158 = vmatprep.subr.mxu0 0.0
        %3159 = vmatpush1.msra.mxu0 0.0
        %3160 = vmatprep.subr.mxu0 0.0
        %3161 = vmatpush1.msra.mxu0 0.0
        %3162 = vmatprep.subr.mxu0 0.0
        %3163 = vmatpush1.msra.mxu0 0.0
        %3164 = vmatprep.subr.mxu0 0.0
        %3165 = vmatpush1.msra.mxu0 0.0
        %3166 = vmatprep.subr.mxu0 0.0
        %3167 = vmatpush1.msra.mxu0 0.0
        %3168 = vmatprep.subr.mxu0 0.0
        %3169 = vmatpush1.msra.mxu0 0.0
        %3170 = vmatprep.subr.mxu0 0.0
        %3171 = vmatpush1.msra.mxu0 0.0
        %3172 = vmatprep.subr.mxu0 0.0
        %3173 = vmatpush1.msra.mxu0 0.0
        %3174 = vmatprep.subr.mxu0 0.0
        %3175 = vmatpush1.msra.mxu0 0.0
        %3176 = vmatprep.subr.mxu0 0.0
        %3177 = vmatpush1.msra.mxu0 0.0
        %3178 = vmatprep.subr.mxu0 0.0
        %3179 = vmatpush1.msra.mxu0 0.0
        %3180 = vmatprep.subr.mxu0 0.0
        %3181 = vmatpush1.msra.mxu0 0.0
        %3182 = vmatprep.subr.mxu0 0.0
        %3183 = vmatpush1.msra.mxu0 0.0
        %3184 = vmatprep.subr.mxu0 0.0
        %3185 = vmatpush1.msra.mxu0 0.0
        %3186 = vmatprep.subr.mxu0 0.0
        %3187 = vmatpush1.msra.mxu0 0.0
        %3188 = vmatprep.subr.mxu0 0.0
        %3189 = vmatpush1.msra.mxu0 0.0
        %3190 = vmatprep.subr.mxu0 0.0
        %3191 = vmatpush1.msra.mxu0 0.0
        %3192 = vmatprep.subr.mxu0 0.0
        %3193 = vmatpush1.msra.mxu0 0.0
        %3194 = vmatprep.subr.mxu0 0.0
        %3195 = vmatpush1.msra.mxu0 0.0
        %3196 = vmatprep.subr.mxu0 0.0
        %3197 = vmatpush1.msra.mxu0 0.0
        %3198 = vmatprep.mubr.f32.mxu0 0.0
        %3199 = vmatmul.mubr.f32.gmra.mrb[0].mxu0 %v3129
        %v3200 = vpop.f32.mrb[0].mxu0
        %v3201 = vadd.f32 0.0, %v3200
        %v3202 = vpop.f32.mrb[0].mxu0
        %3203 = vmatprep.mubr.f32.mxu0 0.0
        %3204 = vmatmul.mubr.f32.gmra.mrb[0].mxu0 %v3132
        %v3205 = vpop.f32.mrb[0].mxu0
        %v3206 = vadd.f32 0.0, %v3205
        %v3207 = vpop.f32.mrb[0].mxu0
        %3208 = vdwg.mxu0
        %v3210 = vsel %vm2479, %v3119, 0
        %v3213 = vsel %vm2479, %v3120, 0
        %3215 = vmatprep.subr.mxu0 0.0
        %3216 = vmatpush1.msra.mxu0 %v3121
        %3217 = vmatprep.subr.mxu0 0.0
        %3218 = vmatpush1.msra.mxu0 %v3122
        %3219 = vmatprep.subr.mxu0 0.0
        %3220 = vmatpush1.msra.mxu0 0.0
        %3221 = vmatprep.subr.mxu0 0.0
        %3222 = vmatpush1.msra.mxu0 0.0
        %3223 = vmatprep.subr.mxu0 0.0
        %3224 = vmatpush1.msra.mxu0 0.0
        %3225 = vmatprep.subr.mxu0 0.0
        %3226 = vmatpush1.msra.mxu0 0.0
        %3227 = vmatprep.subr.mxu0 0.0
        %3228 = vmatpush1.msra.mxu0 0.0
        %3229 = vmatprep.subr.mxu0 0.0
        %3230 = vmatpush1.msra.mxu0 0.0
        %3231 = vmatprep.subr.mxu0 0.0
        %3232 = vmatpush1.msra.mxu0 0.0
        %3233 = vmatprep.subr.mxu0 0.0
        %3234 = vmatpush1.msra.mxu0 0.0
        %3235 = vmatprep.subr.mxu0 0.0
        %3236 = vmatpush1.msra.mxu0 0.0
        %3237 = vmatprep.subr.mxu0 0.0
        %3238 = vmatpush1.msra.mxu0 0.0
        %3239 = vmatprep.subr.mxu0 0.0
        %3240 = vmatpush1.msra.mxu0 0.0
        %3241 = vmatprep.subr.mxu0 0.0
        %3242 = vmatpush1.msra.mxu0 0.0
        %3243 = vmatprep.subr.mxu0 0.0
        %3244 = vmatpush1.msra.mxu0 0.0
        %3245 = vmatprep.subr.mxu0 0.0
        %3246 = vmatpush1.msra.mxu0 0.0
        %3247 = vmatprep.subr.mxu0 0.0
        %3248 = vmatpush1.msra.mxu0 0.0
        %3249 = vmatprep.subr.mxu0 0.0
        %3250 = vmatpush1.msra.mxu0 0.0
        %3251 = vmatprep.subr.mxu0 0.0
        %3252 = vmatpush1.msra.mxu0 0.0
        %3253 = vmatprep.subr.mxu0 0.0
        %3254 = vmatpush1.msra.mxu0 0.0
        %3255 = vmatprep.subr.mxu0 0.0
        %3256 = vmatpush1.msra.mxu0 0.0
        %3257 = vmatprep.subr.mxu0 0.0
        %3258 = vmatpush1.msra.mxu0 0.0
        %3259 = vmatprep.subr.mxu0 0.0
        %3260 = vmatpush1.msra.mxu0 0.0
        %3261 = vmatprep.subr.mxu0 0.0
        %3262 = vmatpush1.msra.mxu0 0.0
        %3263 = vmatprep.subr.mxu0 0.0
        %3264 = vmatpush1.msra.mxu0 0.0
        %3265 = vmatprep.subr.mxu0 0.0
        %3266 = vmatpush1.msra.mxu0 0.0
        %3267 = vmatprep.subr.mxu0 0.0
        %3268 = vmatpush1.msra.mxu0 0.0
        %3269 = vmatprep.subr.mxu0 0.0
        %3270 = vmatpush1.msra.mxu0 0.0
        %3271 = vmatprep.subr.mxu0 0.0
        %3272 = vmatpush1.msra.mxu0 0.0
        %3273 = vmatprep.subr.mxu0 0.0
        %3274 = vmatpush1.msra.mxu0 0.0
        %3275 = vmatprep.subr.mxu0 0.0
        %3276 = vmatpush1.msra.mxu0 0.0
        %3277 = vmatprep.subr.mxu0 0.0
        %3278 = vmatpush1.msra.mxu0 0.0
        %3279 = vmatprep.mubr.f32.mxu0 0.0
        %3280 = vmatmul.mubr.f32.gmra.mrb[0].mxu0 %v3210
        %v3281 = vpop.f32.mrb[0].mxu0
        %v3282 = vadd.f32 %v3201, %v3281
        %v3283 = vpop.f32.mrb[0].mxu0
        %3284 = vmatprep.mubr.f32.mxu0 0.0
        %3285 = vmatmul.mubr.f32.gmra.mrb[0].mxu0 %v3213
        %v3286 = vpop.f32.mrb[0].mxu0
        %v3287 = vadd.f32 %v3206, %v3286
        %v3288 = vpop.f32.mrb[0].mxu0
        %3289 = vdwg.mxu0
        %v3290 = vld [vmem:[#allocation2 + $0x7] sm:$0xff]
        %v3291 = vld [vmem:[#allocation2 + $0xf] sm:$0xff]
        %s3292 = scalar_lea.vmem [#allocation9], 32
        %v3293 = vld [vmem:[%s3292] sm:$0xff]
        %v3294 = vld [vmem:[%s3292 + $0x8] sm:$0xff]
        %v3296 = vsel %vm2479, %v3290, 0
        %v3299 = vsel %vm2479, %v3291, 0
        %3301 = vmatprep.subr.mxu0 0.0
        %3302 = vmatpush1.msra.mxu0 %v3293
        %3303 = vmatprep.subr.mxu0 0.0
        %3304 = vmatpush1.msra.mxu0 %v3294
        %3305 = vmatprep.subr.mxu0 0.0
        %3306 = vmatpush1.msra.mxu0 0.0
        %3307 = vmatprep.subr.mxu0 0.0
        %3308 = vmatpush1.msra.mxu0 0.0
        %3309 = vmatprep.subr.mxu0 0.0
        %3310 = vmatpush1.msra.mxu0 0.0
        %3311 = vmatprep.subr.mxu0 0.0
        %3312 = vmatpush1.msra.mxu0 0.0
        %3313 = vmatprep.subr.mxu0 0.0
        %3314 = vmatpush1.msra.mxu0 0.0
        %3315 = vmatprep.subr.mxu0 0.0
        %3316 = vmatpush1.msra.mxu0 0.0
        %3317 = vmatprep.subr.mxu0 0.0
        %3318 = vmatpush1.msra.mxu0 0.0
        %3319 = vmatprep.subr.mxu0 0.0
        %3320 = vmatpush1.msra.mxu0 0.0
        %3321 = vmatprep.subr.mxu0 0.0
        %3322 = vmatpush1.msra.mxu0 0.0
        %3323 = vmatprep.subr.mxu0 0.0
        %3324 = vmatpush1.msra.mxu0 0.0
        %3325 = vmatprep.subr.mxu0 0.0
        %3326 = vmatpush1.msra.mxu0 0.0
        %3327 = vmatprep.subr.mxu0 0.0
        %3328 = vmatpush1.msra.mxu0 0.0
        %3329 = vmatprep.subr.mxu0 0.0
        %3330 = vmatpush1.msra.mxu0 0.0
        %3331 = vmatprep.subr.mxu0 0.0
        %3332 = vmatpush1.msra.mxu0 0.0
        %3333 = vmatprep.subr.mxu0 0.0
        %3334 = vmatpush1.msra.mxu0 0.0
        %3335 = vmatprep.subr.mxu0 0.0
        %3336 = vmatpush1.msra.mxu0 0.0
        %3337 = vmatprep.subr.mxu0 0.0
        %3338 = vmatpush1.msra.mxu0 0.0
        %3339 = vmatprep.subr.mxu0 0.0
        %3340 = vmatpush1.msra.mxu0 0.0
        %3341 = vmatprep.subr.mxu0 0.0
        %3342 = vmatpush1.msra.mxu0 0.0
        %3343 = vmatprep.subr.mxu0 0.0
        %3344 = vmatpush1.msra.mxu0 0.0
        %3345 = vmatprep.subr.mxu0 0.0
        %3346 = vmatpush1.msra.mxu0 0.0
        %3347 = vmatprep.subr.mxu0 0.0
        %3348 = vmatpush1.msra.mxu0 0.0
        %3349 = vmatprep.subr.mxu0 0.0
        %3350 = vmatpush1.msra.mxu0 0.0
        %3351 = vmatprep.subr.mxu0 0.0
        %3352 = vmatpush1.msra.mxu0 0.0
        %3353 = vmatprep.subr.mxu0 0.0
        %3354 = vmatpush1.msra.mxu0 0.0
        %3355 = vmatprep.subr.mxu0 0.0
        %3356 = vmatpush1.msra.mxu0 0.0
        %3357 = vmatprep.subr.mxu0 0.0
        %3358 = vmatpush1.msra.mxu0 0.0
        %3359 = vmatprep.subr.mxu0 0.0
        %3360 = vmatpush1.msra.mxu0 0.0
        %3361 = vmatprep.subr.mxu0 0.0
        %3362 = vmatpush1.msra.mxu0 0.0
        %3363 = vmatprep.subr.mxu0 0.0
        %3364 = vmatpush1.msra.mxu0 0.0
        %3365 = vmatprep.mubr.f32.mxu0 0.0
        %3366 = vmatmul.mubr.f32.gmra.mrb[0].mxu0 %v3296
        %v3367 = vpop.f32.mrb[0].mxu0
        %v3368 = vadd.f32 0.0, %v3367
        %v3369 = vpop.f32.mrb[0].mxu0
        %3370 = vmatprep.mubr.f32.mxu0 0.0
        %3371 = vmatmul.mubr.f32.gmra.mrb[0].mxu0 %v3299
        %v3372 = vpop.f32.mrb[0].mxu0
        %v3373 = vadd.f32 0.0, %v3372
        %v3374 = vpop.f32.mrb[0].mxu0
        %3375 = vdwg.mxu0
        %v3376 = vadd.f32 %v3282, %v3368
        %v3377 = vadd.f32 %v3287, %v3373
        %v3378 = vld [vmem:[#allocation2 + $0x8] sm:$0xff]
        %v3379 = vld [vmem:[#allocation2 + $0x10] sm:$0xff]
        %s3380 = scalar_lea.vmem [#allocation9], 48
        %v3381 = vld [vmem:[%s3380] sm:$0xff]
        %v3382 = vld [vmem:[%s3380 + $0x8] sm:$0xff]
        %v3384 = vsel %vm2479, %v3378, 0
        %v3387 = vsel %vm2479, %v3379, 0
        %3389 = vmatprep.subr.mxu0 0.0
        %3390 = vmatpush1.msra.mxu0 %v3381
        %3391 = vmatprep.subr.mxu0 0.0
        %3392 = vmatpush1.msra.mxu0 %v3382
        %3393 = vmatprep.subr.mxu0 0.0
        %3394 = vmatpush1.msra.mxu0 0.0
        %3395 = vmatprep.subr.mxu0 0.0
        %3396 = vmatpush1.msra.mxu0 0.0
        %3397 = vmatprep.subr.mxu0 0.0
        %3398 = vmatpush1.msra.mxu0 0.0
        %3399 = vmatprep.subr.mxu0 0.0
        %3400 = vmatpush1.msra.mxu0 0.0
        %3401 = vmatprep.subr.mxu0 0.0
        %3402 = vmatpush1.msra.mxu0 0.0
        %3403 = vmatprep.subr.mxu0 0.0
        %3404 = vmatpush1.msra.mxu0 0.0
        %3405 = vmatprep.subr.mxu0 0.0
        %3406 = vmatpush1.msra.mxu0 0.0
        %3407 = vmatprep.subr.mxu0 0.0
        %3408 = vmatpush1.msra.mxu0 0.0
        %3409 = vmatprep.subr.mxu0 0.0
        %3410 = vmatpush1.msra.mxu0 0.0
        %3411 = vmatprep.subr.mxu0 0.0
        %3412 = vmatpush1.msra.mxu0 0.0
        %3413 = vmatprep.subr.mxu0 0.0
        %3414 = vmatpush1.msra.mxu0 0.0
        %3415 = vmatprep.subr.mxu0 0.0
        %3416 = vmatpush1.msra.mxu0 0.0
        %3417 = vmatprep.subr.mxu0 0.0
        %3418 = vmatpush1.msra.mxu0 0.0
        %3419 = vmatprep.subr.mxu0 0.0
        %3420 = vmatpush1.msra.mxu0 0.0
        %3421 = vmatprep.subr.mxu0 0.0
        %3422 = vmatpush1.msra.mxu0 0.0
        %3423 = vmatprep.subr.mxu0 0.0
        %3424 = vmatpush1.msra.mxu0 0.0
        %3425 = vmatprep.subr.mxu0 0.0
        %3426 = vmatpush1.msra.mxu0 0.0
        %3427 = vmatprep.subr.mxu0 0.0
        %3428 = vmatpush1.msra.mxu0 0.0
        %3429 = vmatprep.subr.mxu0 0.0
        %3430 = vmatpush1.msra.mxu0 0.0
        %3431 = vmatprep.subr.mxu0 0.0
        %3432 = vmatpush1.msra.mxu0 0.0
        %3433 = vmatprep.subr.mxu0 0.0
        %3434 = vmatpush1.msra.mxu0 0.0
        %3435 = vmatprep.subr.mxu0 0.0
        %3436 = vmatpush1.msra.mxu0 0.0
        %3437 = vmatprep.subr.mxu0 0.0
        %3438 = vmatpush1.msra.mxu0 0.0
        %3439 = vmatprep.subr.mxu0 0.0
        %3440 = vmatpush1.msra.mxu0 0.0
        %3441 = vmatprep.subr.mxu0 0.0
        %3442 = vmatpush1.msra.mxu0 0.0
        %3443 = vmatprep.subr.mxu0 0.0
        %3444 = vmatpush1.msra.mxu0 0.0
        %3445 = vmatprep.subr.mxu0 0.0
        %3446 = vmatpush1.msra.mxu0 0.0
        %3447 = vmatprep.subr.mxu0 0.0
        %3448 = vmatpush1.msra.mxu0 0.0
        %3449 = vmatprep.subr.mxu0 0.0
        %3450 = vmatpush1.msra.mxu0 0.0
        %3451 = vmatprep.subr.mxu0 0.0
        %3452 = vmatpush1.msra.mxu0 0.0
        %3453 = vmatprep.mubr.f32.mxu0 0.0
        %3454 = vmatmul.mubr.f32.gmra.mrb[0].mxu0 %v3384
        %v3455 = vpop.f32.mrb[0].mxu0
        %v3456 = vadd.f32 0.0, %v3455
        %v3457 = vpop.f32.mrb[0].mxu0
        %3458 = vmatprep.mubr.f32.mxu0 0.0
        %3459 = vmatmul.mubr.f32.gmra.mrb[0].mxu0 %v3387
        %v3460 = vpop.f32.mrb[0].mxu0
        %v3461 = vadd.f32 0.0, %v3460
        %v3462 = vpop.f32.mrb[0].mxu0
        %3463 = vdwg.mxu0
        %v3464 = vadd.f32 %v3376, %v3456
        %v3465 = vadd.f32 %v3377, %v3461
        %v3466 = vld [vmem:[#allocation2 + $0x9] sm:$0xff]
        %v3467 = vld [vmem:[#allocation2 + $0x11] sm:$0xff]
        %s3468 = scalar_lea.vmem [#allocation9], 64
        %v3469 = vld [vmem:[%s3468] sm:$0xff]
        %v3470 = vld [vmem:[%s3468 + $0x8] sm:$0xff]
        %v3472 = vsel %vm2479, %v3466, 0
        %v3475 = vsel %vm2479, %v3467, 0
        %3477 = vmatprep.subr.mxu0 0.0
        %3478 = vmatpush1.msra.mxu0 %v3469
        %3479 = vmatprep.subr.mxu0 0.0
        %3480 = vmatpush1.msra.mxu0 %v3470
        %3481 = vmatprep.subr.mxu0 0.0
        %3482 = vmatpush1.msra.mxu0 0.0
        %3483 = vmatprep.subr.mxu0 0.0
        %3484 = vmatpush1.msra.mxu0 0.0
        %3485 = vmatprep.subr.mxu0 0.0
        %3486 = vmatpush1.msra.mxu0 0.0
        %3487 = vmatprep.subr.mxu0 0.0
        %3488 = vmatpush1.msra.mxu0 0.0
        %3489 = vmatprep.subr.mxu0 0.0
        %3490 = vmatpush1.msra.mxu0 0.0
        %3491 = vmatprep.subr.mxu0 0.0
        %3492 = vmatpush1.msra.mxu0 0.0
        %3493 = vmatprep.subr.mxu0 0.0
        %3494 = vmatpush1.msra.mxu0 0.0
        %3495 = vmatprep.subr.mxu0 0.0
        %3496 = vmatpush1.msra.mxu0 0.0
        %3497 = vmatprep.subr.mxu0 0.0
        %3498 = vmatpush1.msra.mxu0 0.0
        %3499 = vmatprep.subr.mxu0 0.0
        %3500 = vmatpush1.msra.mxu0 0.0
        %3501 = vmatprep.subr.mxu0 0.0
        %3502 = vmatpush1.msra.mxu0 0.0
        %3503 = vmatprep.subr.mxu0 0.0
        %3504 = vmatpush1.msra.mxu0 0.0
        %3505 = vmatprep.subr.mxu0 0.0
        %3506 = vmatpush1.msra.mxu0 0.0
        %3507 = vmatprep.subr.mxu0 0.0
        %3508 = vmatpush1.msra.mxu0 0.0
        %3509 = vmatprep.subr.mxu0 0.0
        %3510 = vmatpush1.msra.mxu0 0.0
        %3511 = vmatprep.subr.mxu0 0.0
        %3512 = vmatpush1.msra.mxu0 0.0
        %3513 = vmatprep.subr.mxu0 0.0
        %3514 = vmatpush1.msra.mxu0 0.0
        %3515 = vmatprep.subr.mxu0 0.0
        %3516 = vmatpush1.msra.mxu0 0.0
        %3517 = vmatprep.subr.mxu0 0.0
        %3518 = vmatpush1.msra.mxu0 0.0
        %3519 = vmatprep.subr.mxu0 0.0
        %3520 = vmatpush1.msra.mxu0 0.0
        %3521 = vmatprep.subr.mxu0 0.0
        %3522 = vmatpush1.msra.mxu0 0.0
        %3523 = vmatprep.subr.mxu0 0.0
        %3524 = vmatpush1.msra.mxu0 0.0
        %3525 = vmatprep.subr.mxu0 0.0
        %3526 = vmatpush1.msra.mxu0 0.0
        %3527 = vmatprep.subr.mxu0 0.0
        %3528 = vmatpush1.msra.mxu0 0.0
        %3529 = vmatprep.subr.mxu0 0.0
        %3530 = vmatpush1.msra.mxu0 0.0
        %3531 = vmatprep.subr.mxu0 0.0
        %3532 = vmatpush1.msra.mxu0 0.0
        %3533 = vmatprep.subr.mxu0 0.0
        %3534 = vmatpush1.msra.mxu0 0.0
        %3535 = vmatprep.subr.mxu0 0.0
        %3536 = vmatpush1.msra.mxu0 0.0
        %3537 = vmatprep.subr.mxu0 0.0
        %3538 = vmatpush1.msra.mxu0 0.0
        %3539 = vmatprep.subr.mxu0 0.0
        %3540 = vmatpush1.msra.mxu0 0.0
        %3541 = vmatprep.mubr.f32.mxu0 0.0
        %3542 = vmatmul.mubr.f32.gmra.mrb[0].mxu0 %v3472
        %v3543 = vpop.f32.mrb[0].mxu0
        %v3544 = vadd.f32 0.0, %v3543
        %v3545 = vpop.f32.mrb[0].mxu0
        %3546 = vmatprep.mubr.f32.mxu0 0.0
        %3547 = vmatmul.mubr.f32.gmra.mrb[0].mxu0 %v3475
        %v3548 = vpop.f32.mrb[0].mxu0
        %v3549 = vadd.f32 0.0, %v3548
        %v3550 = vpop.f32.mrb[0].mxu0
        %3551 = vdwg.mxu0
        %v3552 = vadd.f32 %v3464, %v3544
        %v3553 = vadd.f32 %v3465, %v3549
        %v3554 = vld [vmem:[#allocation2 + $0xa] sm:$0xff]
        %v3555 = vld [vmem:[#allocation2 + $0x12] sm:$0xff]
        %s3556 = scalar_lea.vmem [#allocation9], 80
        %v3557 = vld [vmem:[%s3556] sm:$0xff]
        %v3558 = vld [vmem:[%s3556 + $0x8] sm:$0xff]
        %v3560 = vsel %vm2479, %v3554, 0
        %v3563 = vsel %vm2479, %v3555, 0
        %3565 = vmatprep.subr.mxu0 0.0
        %3566 = vmatpush1.msra.mxu0 %v3557
        %3567 = vmatprep.subr.mxu0 0.0
        %3568 = vmatpush1.msra.mxu0 %v3558
        %3569 = vmatprep.subr.mxu0 0.0
        %3570 = vmatpush1.msra.mxu0 0.0
        %3571 = vmatprep.subr.mxu0 0.0
        %3572 = vmatpush1.msra.mxu0 0.0
        %3573 = vmatprep.subr.mxu0 0.0
        %3574 = vmatpush1.msra.mxu0 0.0
        %3575 = vmatprep.subr.mxu0 0.0
        %3576 = vmatpush1.msra.mxu0 0.0
        %3577 = vmatprep.subr.mxu0 0.0
        %3578 = vmatpush1.msra.mxu0 0.0
        %3579 = vmatprep.subr.mxu0 0.0
        %3580 = vmatpush1.msra.mxu0 0.0
        %3581 = vmatprep.subr.mxu0 0.0
        %3582 = vmatpush1.msra.mxu0 0.0
        %3583 = vmatprep.subr.mxu0 0.0
        %3584 = vmatpush1.msra.mxu0 0.0
        %3585 = vmatprep.subr.mxu0 0.0
        %3586 = vmatpush1.msra.mxu0 0.0
        %3587 = vmatprep.subr.mxu0 0.0
        %3588 = vmatpush1.msra.mxu0 0.0
        %3589 = vmatprep.subr.mxu0 0.0
        %3590 = vmatpush1.msra.mxu0 0.0
        %3591 = vmatprep.subr.mxu0 0.0
        %3592 = vmatpush1.msra.mxu0 0.0
        %3593 = vmatprep.subr.mxu0 0.0
        %3594 = vmatpush1.msra.mxu0 0.0
        %3595 = vmatprep.subr.mxu0 0.0
        %3596 = vmatpush1.msra.mxu0 0.0
        %3597 = vmatprep.subr.mxu0 0.0
        %3598 = vmatpush1.msra.mxu0 0.0
        %3599 = vmatprep.subr.mxu0 0.0
        %3600 = vmatpush1.msra.mxu0 0.0
        %3601 = vmatprep.subr.mxu0 0.0
        %3602 = vmatpush1.msra.mxu0 0.0
        %3603 = vmatprep.subr.mxu0 0.0
        %3604 = vmatpush1.msra.mxu0 0.0
        %3605 = vmatprep.subr.mxu0 0.0
        %3606 = vmatpush1.msra.mxu0 0.0
        %3607 = vmatprep.subr.mxu0 0.0
        %3608 = vmatpush1.msra.mxu0 0.0
        %3609 = vmatprep.subr.mxu0 0.0
        %3610 = vmatpush1.msra.mxu0 0.0
        %3611 = vmatprep.subr.mxu0 0.0
        %3612 = vmatpush1.msra.mxu0 0.0
        %3613 = vmatprep.subr.mxu0 0.0
        %3614 = vmatpush1.msra.mxu0 0.0
        %3615 = vmatprep.subr.mxu0 0.0
        %3616 = vmatpush1.msra.mxu0 0.0
        %3617 = vmatprep.subr.mxu0 0.0
        %3618 = vmatpush1.msra.mxu0 0.0
        %3619 = vmatprep.subr.mxu0 0.0
        %3620 = vmatpush1.msra.mxu0 0.0
        %3621 = vmatprep.subr.mxu0 0.0
        %3622 = vmatpush1.msra.mxu0 0.0
        %3623 = vmatprep.subr.mxu0 0.0
        %3624 = vmatpush1.msra.mxu0 0.0
        %3625 = vmatprep.subr.mxu0 0.0
        %3626 = vmatpush1.msra.mxu0 0.0
        %3627 = vmatprep.subr.mxu0 0.0
        %3628 = vmatpush1.msra.mxu0 0.0
        %3629 = vmatprep.mubr.f32.mxu0 0.0
        %3630 = vmatmul.mubr.f32.gmra.mrb[0].mxu0 %v3560
        %v3631 = vpop.f32.mrb[0].mxu0
        %v3632 = vadd.f32 0.0, %v3631
        %v3633 = vpop.f32.mrb[0].mxu0
        %3634 = vmatprep.mubr.f32.mxu0 0.0
        %3635 = vmatmul.mubr.f32.gmra.mrb[0].mxu0 %v3563
        %v3636 = vpop.f32.mrb[0].mxu0
        %v3637 = vadd.f32 0.0, %v3636
        %v3638 = vpop.f32.mrb[0].mxu0
        %3639 = vdwg.mxu0
        %v3640 = vadd.f32 %v3552, %v3632
        %v3641 = vadd.f32 %v3553, %v3637
        %v3642 = vld [vmem:[#allocation2 + $0xb] sm:$0xff]
        %v3643 = vld [vmem:[#allocation2 + $0x13] sm:$0xff]
        %s3644 = scalar_lea.vmem [#allocation9], 96
        %v3645 = vld [vmem:[%s3644] sm:$0xff]
        %v3646 = vld [vmem:[%s3644 + $0x8] sm:$0xff]
        %v3648 = vsel %vm2479, %v3642, 0
        %v3651 = vsel %vm2479, %v3643, 0
        %3653 = vmatprep.subr.mxu0 0.0
        %3654 = vmatpush1.msra.mxu0 %v3645
        %3655 = vmatprep.subr.mxu0 0.0
        %3656 = vmatpush1.msra.mxu0 %v3646
        %3657 = vmatprep.subr.mxu0 0.0
        %3658 = vmatpush1.msra.mxu0 0.0
        %3659 = vmatprep.subr.mxu0 0.0
        %3660 = vmatpush1.msra.mxu0 0.0
        %3661 = vmatprep.subr.mxu0 0.0
        %3662 = vmatpush1.msra.mxu0 0.0
        %3663 = vmatprep.subr.mxu0 0.0
        %3664 = vmatpush1.msra.mxu0 0.0
        %3665 = vmatprep.subr.mxu0 0.0
        %3666 = vmatpush1.msra.mxu0 0.0
        %3667 = vmatprep.subr.mxu0 0.0
        %3668 = vmatpush1.msra.mxu0 0.0
        %3669 = vmatprep.subr.mxu0 0.0
        %3670 = vmatpush1.msra.mxu0 0.0
        %3671 = vmatprep.subr.mxu0 0.0
        %3672 = vmatpush1.msra.mxu0 0.0
        %3673 = vmatprep.subr.mxu0 0.0
        %3674 = vmatpush1.msra.mxu0 0.0
        %3675 = vmatprep.subr.mxu0 0.0
        %3676 = vmatpush1.msra.mxu0 0.0
        %3677 = vmatprep.subr.mxu0 0.0
        %3678 = vmatpush1.msra.mxu0 0.0
        %3679 = vmatprep.subr.mxu0 0.0
        %3680 = vmatpush1.msra.mxu0 0.0
        %3681 = vmatprep.subr.mxu0 0.0
        %3682 = vmatpush1.msra.mxu0 0.0
        %3683 = vmatprep.subr.mxu0 0.0
        %3684 = vmatpush1.msra.mxu0 0.0
        %3685 = vmatprep.subr.mxu0 0.0
        %3686 = vmatpush1.msra.mxu0 0.0
        %3687 = vmatprep.subr.mxu0 0.0
        %3688 = vmatpush1.msra.mxu0 0.0
        %3689 = vmatprep.subr.mxu0 0.0
        %3690 = vmatpush1.msra.mxu0 0.0
        %3691 = vmatprep.subr.mxu0 0.0
        %3692 = vmatpush1.msra.mxu0 0.0
        %3693 = vmatprep.subr.mxu0 0.0
        %3694 = vmatpush1.msra.mxu0 0.0
        %3695 = vmatprep.subr.mxu0 0.0
        %3696 = vmatpush1.msra.mxu0 0.0
        %3697 = vmatprep.subr.mxu0 0.0
        %3698 = vmatpush1.msra.mxu0 0.0
        %3699 = vmatprep.subr.mxu0 0.0
        %3700 = vmatpush1.msra.mxu0 0.0
        %3701 = vmatprep.subr.mxu0 0.0
        %3702 = vmatpush1.msra.mxu0 0.0
        %3703 = vmatprep.subr.mxu0 0.0
        %3704 = vmatpush1.msra.mxu0 0.0
        %3705 = vmatprep.subr.mxu0 0.0
        %3706 = vmatpush1.msra.mxu0 0.0
        %3707 = vmatprep.subr.mxu0 0.0
        %3708 = vmatpush1.msra.mxu0 0.0
        %3709 = vmatprep.subr.mxu0 0.0
        %3710 = vmatpush1.msra.mxu0 0.0
        %3711 = vmatprep.subr.mxu0 0.0
        %3712 = vmatpush1.msra.mxu0 0.0
        %3713 = vmatprep.subr.mxu0 0.0
        %3714 = vmatpush1.msra.mxu0 0.0
        %3715 = vmatprep.subr.mxu0 0.0
        %3716 = vmatpush1.msra.mxu0 0.0
        %3717 = vmatprep.mubr.f32.mxu0 0.0
        %3718 = vmatmul.mubr.f32.gmra.mrb[0].mxu0 %v3648
        %v3719 = vpop.f32.mrb[0].mxu0
        %v3720 = vadd.f32 0.0, %v3719
        %v3721 = vpop.f32.mrb[0].mxu0
        %3722 = vmatprep.mubr.f32.mxu0 0.0
        %3723 = vmatmul.mubr.f32.gmra.mrb[0].mxu0 %v3651
        %v3724 = vpop.f32.mrb[0].mxu0
        %v3725 = vadd.f32 0.0, %v3724
        %v3726 = vpop.f32.mrb[0].mxu0
        %3727 = vdwg.mxu0
        %v3728 = vadd.f32 %v3640, %v3720
        %v3729 = vadd.f32 %v3641, %v3725
        %3730 = vst.msk [vmem:[%s514] sm:$0xff] %vm515, %v3728
        %3731 = vst.msk [vmem:[%s514 + $0x8] sm:$0xff] %vm515, %v3729
        %s3732 = sand.u32 %s339, 1
        %s3733 = scalar_lea.sflag [#allocation6], %s3732
        %s3734 = sand.u32 %s339, 1
        %s3735 = smul.addr %s3734, 16
        %s3736 = scalar_lea.vmem [#allocation10], %s3735
        // Predicated region
        $region89: #{tpu_custom_call.1} parent=75 // pred_check
          %p3737 = pneg %p349
        $region90: #{tpu_custom_call.1} parent=75 // pred_check_branch
          %3739 = sbr.rel (%p3737) target = $region92
        $region91: #{tpu_custom_call.1} parent=75 // pred_region
          %s3741 = ssub.s32 256, 256
          %3742 = vsyncadd %s3733, %s3741
          %s3743 = smul.addr %s32, 2
          %s3744 = smul.addr %s3743, 128
          %s3745 = scalar_lea.hbm %s14, %s3744
          %s3746 = sshll.u32 %s3736, 4
          %s3747 = int_to_ptr.vmem [resolvable:$true] %s3746
          %3752 = dma.vmem_to_hbm [thread:$0]  %s3747, 256, %s3745, %s3733, 128, 128, 8
        $region92: #{tpu_custom_call.1} parent=75 // pred_fallthru
          _
      $region76: #{tpu_custom_call.1} parent=5 // pred_fallthru
        _
      %p3753 = scmp.le.s32.totalorder 2, %s27
      // Predicated region
      $region93: #{tpu_custom_call.1} parent=5 // pred_check
        %p3754 = pneg %p3753
      $region94: #{tpu_custom_call.1} parent=5 // pred_check_branch
        %3756 = sbr.rel (%p3754) target = $region96
      $region95: #{tpu_custom_call.1} parent=5 // pred_region
        %s3757 = ssub.s32 %s27, 2
        // Predicated region
        $region97: #{tpu_custom_call.1} parent=95 // pred_check
          %p3758 = pneg %p355
        $region98: #{tpu_custom_call.1} parent=95 // pred_check_branch
          %3760 = sbr.rel (%p3758) target = $region100
        $region99: #{tpu_custom_call.1} parent=95 // pred_region
          %s3761 = sand.u32 %s340, 1
          %s3762 = scalar_lea.sflag [#allocation6], %s3761
          %s3763 = sand.u32 %s340, 1
          %s3764 = smul.addr %s3763, 16
          %s3765 = scalar_lea.vmem [#allocation10], %s3764
          %3766 = dma.done %s3762, 256
        $region100: #{tpu_custom_call.1} parent=95 // pred_fallthru
          _
      $region96: #{tpu_custom_call.1} parent=5 // pred_fallthru
        _
    $region6: #{tpu_custom_call.1} parent=1 // loop_footer
      %s31 = sadd.s32 1, %s27
    $region7: #{tpu_custom_call.1} parent=1 // loop_footer_branch
      %26 = sbr.rel target = $region3
    $region8: #{tpu_custom_call.1} parent=1 // loop_exit
      _
    %3767 = vsyncpa [#allocation5], 1
    %s3768 = scalar_lea.sflag [#allocation5], 1
    %3769 = vsyncpa %s3768, 1
    %3770 = vsyncpa [#allocation8], 1
    %3771 = vsyncpa [#allocation6], 1
    %s3772 = scalar_lea.sflag [#allocation6], 1
    %3773 = vsyncpa %s3772, 1

</llo_original>
